<compile_context>
chip_gen: v5e
topology: v5e:2x2
jax: 0.10.0
libtpu: 0.0.40
codegen_flags: <defaults>
</compile_context>

<pallas_src>
import functools

import jax
import jax.numpy as jnp
import numpy as np
from jax.experimental import pallas as pl
from jax.experimental.pallas import tpu as pltpu

# ----------------------------- model dims ---------------------------------
P_FEATURES = 25 + 1      # embedding vocab
EMBED_DIM = 256
HIDDEN = 256
P_FILTER1 = 3
P_FILTER2 = 9
DILATION = 2
COMPOUND_DIM = 1024
FILM_DIM = 256
FILM_OUT = 512
BN_EPS = 1e-5
OUT_PAD = 128            # lane-dense output width (real output is column 0)


def _softplus(x):
    # matches torch.nn.functional.softplus(beta=1); numerically stable
    return jnp.logaddexp(x, 0.0)


# ----------------------------- fused kernel --------------------------------
def filmcpi_kernel(compound_ref, pidx_ref, emb_ref, ce_w_ref, w1_ref, w2_ref,
                   film_fc_w_ref, film_out_w_ref, d1_w_ref, d2_w_ref,
                   slab256_ref, slab512_ref, slab128_ref, d3_b_ref,
                   out_ref, *, seq_len, k1, k2, dil):
    L = seq_len
    TB = compound_ref.shape[0]           # batch rows in this grid step
    TBL = pidx_ref.shape[0]              # TB * L flat token rows
    V, _ = emb_ref.shape
    H = w1_ref.shape[1]

    # packed per-channel vectors
    slab = slab256_ref[...]                      # (8, 256)
    c1_b, bn1_s, bn1_t = slab[0:1], slab[1:2], slab[2:3]
    c2_b, bn2_s, bn2_t = slab[3:4], slab[4:5], slab[5:6]
    ce_b, d1_b = slab[6:7], slab[7:8]
    slab512 = slab512_ref[...]                   # (2, 512)
    film_fc_b, film_out_b = slab512[0:1], slab512[1:2]
    slab128 = slab128_ref[...]                   # (2, 128)
    d2_b, d3_w = slab128[0:1], slab128[1:2]

    # ---- embedding gather: one-hot @ table on the MXU (exact) ----
    idx = pidx_ref[...]                                           # (TBL, 1) int32
    vocab = jax.lax.broadcasted_iota(jnp.int32, (TBL, V), 1)
    onehot = (idx == vocab).astype(jnp.float32)                   # (TBL, V)
    x = jnp.dot(onehot, emb_ref[...],
                preferred_element_type=jnp.float32)               # (TBL, E)

    # ---- conv1 (valid, k1) as im2col matmul over the flattened B*L axis ----
    L1 = L - (k1 - 1)
    N1 = TBL - (k1 - 1)
    cols1 = jnp.concatenate([x[k:k + N1, :] for k in range(k1)], axis=-1)
    h1 = jnp.dot(cols1, w1_ref[...], preferred_element_type=jnp.float32)
    h1 = _softplus(h1 + c1_b) * bn1_s + bn1_t                     # (N1, H)

    # ---- dilated conv2 (valid, k2, dilation=dil), same flattened trick ----
    L2 = L1 - dil * (k2 - 1)
    N2 = N1 - dil * (k2 - 1)
    cols2 = jnp.concatenate([h1[k * dil:k * dil + N2, :] for k in range(k2)],
                            axis=-1)
    h2 = jnp.dot(cols2, w2_ref[...], preferred_element_type=jnp.float32)
    h2 = _softplus(h2 + c2_b) * bn2_s + bn2_t                     # (N2, H)

    # ---- AdaptiveMaxPool1d(1): per-sequence max over the valid rows only ----
    # valid rows for sequence b are exactly h2[b*L : b*L + L2]
    pp = jnp.concatenate(
        [jnp.max(h2[b * L:b * L + L2, :], axis=0, keepdims=True)
         for b in range(TB)], axis=0)                             # (TB, H)

    # ---- compound encoder (Dropout == identity at inference) ----
    cc = jnp.dot(compound_ref[...], ce_w_ref[...],
                 preferred_element_type=jnp.float32) + ce_b       # (TB, 256)

    # ---- FiLM ----
    t = jnp.dot(cc, film_fc_w_ref[...],
                preferred_element_type=jnp.float32) + film_fc_b   # (TB, 512)
    gamma, beta = t[:, :H], t[:, H:]
    mod = gamma * pp + beta
    y = _softplus(jnp.dot(mod, film_out_w_ref[...],
                          preferred_element_type=jnp.float32) + film_out_b)

    # ---- decoder ----
    h = _softplus(jnp.dot(y, d1_w_ref[...],
                          preferred_element_type=jnp.float32) + d1_b)
    h = _softplus(jnp.dot(h, d2_w_ref[...],
                          preferred_element_type=jnp.float32) + d2_b)
    # final Linear(128, 1): VPU elementwise mul + lane reduction (no N=1 MXU)
    val = jnp.sum(h * d3_w, axis=-1, keepdims=True) + d3_b_ref[...]   # (TB, 1)
    out_ref[...] = jnp.broadcast_to(val, out_ref.shape)           # lane-dense


# ----------------------------- wrapper --------------------------------------
def filmcpi_forward(params, compound, protein, *, batch_tile=None):
    B, L = protein.shape
    min_len = 1 + (P_FILTER1 - 1) + DILATION * (P_FILTER2 - 1)
    assert L >= min_len, f"protein length must be >= {min_len}"

    # batch tiling (grid) -- degenerate single step at small B; parallel axis
    # lets v7x use both TensorCores once B grows.
    if batch_tile is None:
        tb = B
    else:
        tb = min(batch_tile, B)
        if B % tb != 0 or (tb != B and (tb * L) % 8 != 0):
            tb = B

    # pack parameters for the kernel (cheap, outside the Pallas path)
    pidx = protein.reshape(B * L, 1).astype(jnp.int32)
    w1 = params["c1_w"].reshape(P_FILTER1 * EMBED_DIM, HIDDEN)    # im2col layout
    w2 = params["c2_w"].reshape(P_FILTER2 * HIDDEN, HIDDEN)
    slab256 = jnp.stack([params["c1_b"], params["bn1_scale"], params["bn1_shift"],
                         params["c2_b"], params["bn2_scale"], params["bn2_shift"],
                         params["ce_b"], params["d1_b"]], axis=0)            # (8,256)
    slab512 = jnp.stack([params["film_fc_b"], params["film_out_b"]], axis=0)  # (2,512)
    slab128 = jnp.stack([params["d2_b"], params["d3_w"].reshape(-1)], axis=0) # (2,128)
    d3_b = params["d3_b"].reshape(1, 1)

    def _rep(arr):          # whole-array block, grid-invariant
        nd = arr.ndim
        return pl.BlockSpec(arr.shape, lambda b, _n=nd: (0,) * _n)

    in_specs = [
        pl.BlockSpec((tb, COMPOUND_DIM), lambda b: (b, 0)),   # compound
        pl.BlockSpec((tb * L, 1), lambda b: (b, 0)),          # protein indices
        _rep(params["emb"]),
        _rep(params["ce_w"]), _rep(w1), _rep(w2),
        _rep(params["film_fc_w"]), _rep(params["film_out_w"]),
        _rep(params["d1_w"]), _rep(params["d2_w"]),
        _rep(slab256), _rep(slab512), _rep(slab128), _rep(d3_b),
    ]
    out_spec = pl.BlockSpec((tb, OUT_PAD), lambda b: (b, 0))

    out_padded = pl.pallas_call(
        functools.partial(filmcpi_kernel, seq_len=L,
                          k1=P_FILTER1, k2=P_FILTER2, dil=DILATION),
        out_shape=jax.ShapeDtypeStruct((B, OUT_PAD), jnp.float32),
        grid=(B // tb,),
        in_specs=in_specs,
        out_specs=out_spec,
        compiler_params=pltpu.CompilerParams(
            dimension_semantics=("parallel",),
            vmem_limit_bytes=32 * 1024 * 1024),
    )(compound, pidx, params["emb"], params["ce_w"], w1, w2,
      params["film_fc_w"], params["film_out_w"],
      params["d1_w"], params["d2_w"],
      slab256, slab512, slab128, d3_b)

    return out_padded[:, :1]


# ----------------------------- reference ------------------------------------
def reference_forward(params, compound, protein):
    cc = compound @ params["ce_w"] + params["ce_b"]
    p_emb = params["emb"][protein]                         # (B, L, E)
    x = jnp.transpose(p_emb, (0, 2, 1))                    # NCL

    w1_oik = jnp.transpose(params["c1_w"], (2, 1, 0))      # (O, I, K)
    h = jax.lax.conv_general_dilated(x, w1_oik, (1,), "VALID",
                                     dimension_numbers=("NCH", "OIH", "NCH"))
    h = jax.nn.softplus(h + params["c1_b"][None, :, None])
    h = h * params["bn1_scale"][None, :, None] + params["bn1_shift"][None, :, None]

    w2_oik = jnp.transpose(params["c2_w"], (2, 1, 0))
    h = jax.lax.conv_general_dilated(h, w2_oik, (1,), "VALID",
                                     rhs_dilation=(DILATION,),
                                     dimension_numbers=("NCH", "OIH", "NCH"))
    h = jax.nn.softplus(h + params["c2_b"][None, :, None])
    h = h * params["bn2_scale"][None, :, None] + params["bn2_shift"][None, :, None]
    pp = jnp.max(h, axis=2)

    t = cc @ params["film_fc_w"] + params["film_fc_b"]
    gamma, beta = t[:, :FILM_DIM], t[:, FILM_DIM:]
    y = jax.nn.softplus((gamma * pp + beta) @ params["film_out_w"]
                        + params["film_out_b"])

    h = jax.nn.softplus(y @ params["d1_w"] + params["d1_b"])
    h = jax.nn.softplus(h @ params["d2_w"] + params["d2_b"])
    return h @ params["d3_w"] + params["d3_b"]


# ----------------------------- params ---------------------------------------
def init_params(key):
    ks = jax.random.split(key, 20)
    n = lambda k, shape, s=0.05: (jax.random.normal(k, shape, jnp.float32) * s)

    # BatchNorm (eval): fold running stats + affine into scale/shift
    def bn(kw, kb, km, kv):
        gamma = 1.0 + n(kw, (HIDDEN,), 0.1)
        beta = n(kb, (HIDDEN,), 0.1)
        mean = n(km, (HIDDEN,), 0.1)
        var = 1.0 + jnp.abs(n(kv, (HIDDEN,), 0.1))
        scale = gamma / jnp.sqrt(var + BN_EPS)
        shift = beta - mean * scale
        return scale, shift

    bn1_scale, bn1_shift = bn(ks[10], ks[11], ks[12], ks[13])
    bn2_scale, bn2_shift = bn(ks[14], ks[15], ks[16], ks[17])

    return dict(
        emb=n(ks[0], (P_FEATURES, EMBED_DIM), 0.5),
        # conv weights stored as (K, C_in, C_out)
        c1_w=n(ks[1], (P_FILTER1, EMBED_DIM, HIDDEN)),
        c1_b=n(ks[2], (HIDDEN,)),
        c2_w=n(ks[3], (P_FILTER2, HIDDEN, HIDDEN)),
        c2_b=n(ks[4], (HIDDEN,)),
        bn1_scale=bn1_scale, bn1_shift=bn1_shift,
        bn2_scale=bn2_scale, bn2_shift=bn2_shift,
        # linear weights stored as (in, out)
        ce_w=n(ks[5], (COMPOUND_DIM, 256)),
        ce_b=n(ks[6], (256,)),
        film_fc_w=n(ks[7], (256, 2 * FILM_DIM)),
        film_fc_b=n(ks[8], (2 * FILM_DIM,)),
        film_out_w=n(ks[9], (FILM_DIM, FILM_OUT)),
        film_out_b=n(ks[18], (FILM_OUT,)),
        d1_w=n(jax.random.fold_in(key, 101), (512, 256)),
        d1_b=n(jax.random.fold_in(key, 102), (256,)),
        d2_w=n(jax.random.fold_in(key, 103), (256, 128)),
        d2_b=n(jax.random.fold_in(key, 104), (128,)),
        d3_w=n(jax.random.fold_in(key, 105), (128, 1)),
        d3_b=n(jax.random.fold_in(key, 106), (1,)),
    )


# ----------------------------- main ------------------------------------------
if __name__ == "__main__":
    key = jax.random.PRNGKey(0)
    kp, kc, kpr = jax.random.split(key, 3)
    params = init_params(kp)

    B, L = 2, 32
    compound = jax.random.normal(kc, (B, COMPOUND_DIM), jnp.float32)
    protein = jax.random.randint(kpr, (B, L), 0, P_FEATURES, jnp.int32)

    out = jax.jit(filmcpi_forward)(params, compound, protein)
    out = jax.block_until_ready(out)

    ref = reference_forward(params, compound, protein)
    np.testing.assert_allclose(np.asarray(out), np.asarray(ref),
                               rtol=2e-3, atol=2e-3)
    assert out.shape == (B, 1)
    print("KERNEL_OK")
</pallas_src>

<mosaic_0001>
module attributes {stable_mosaic.version = 11 : i64} {
  func.func @filmcpi_kernel(%arg0: i32, %arg1: memref<2x1024xf32, #tpu.memory_space<vmem>>, %arg2: memref<64x1xi32, #tpu.memory_space<vmem>>, %arg3: memref<26x256xf32, #tpu.memory_space<vmem>>, %arg4: memref<1024x256xf32, #tpu.memory_space<vmem>>, %arg5: memref<768x256xf32, #tpu.memory_space<vmem>>, %arg6: memref<2304x256xf32, #tpu.memory_space<vmem>>, %arg7: memref<256x512xf32, #tpu.memory_space<vmem>>, %arg8: memref<256x512xf32, #tpu.memory_space<vmem>>, %arg9: memref<512x256xf32, #tpu.memory_space<vmem>>, %arg10: memref<256x128xf32, #tpu.memory_space<vmem>>, %arg11: memref<8x256xf32, #tpu.memory_space<vmem>>, %arg12: memref<2x512xf32, #tpu.memory_space<vmem>>, %arg13: memref<2x128xf32, #tpu.memory_space<vmem>>, %arg14: memref<1x1xf32, #tpu.memory_space<vmem>>, %arg15: memref<2x128xf32, #tpu.memory_space<vmem>>) attributes {dimension_semantics = [#tpu.dimension_semantics<parallel>], iteration_bounds = array<i64: 1>, scalar_prefetch = 0 : i64, scratch_operands = 0 : i64, tpu.core_type = #tpu.core_type<tc>, window_params = [{transform_indices = @transform_0, window_bounds = array<i64: 2, 1024>}, {transform_indices = @transform_1, window_bounds = array<i64: 64, 1>}, {pipeline_mode = #tpu.pipeline_mode<synchronous>, transform_indices = @transform_2, window_bounds = array<i64: 26, 256>}, {pipeline_mode = #tpu.pipeline_mode<synchronous>, transform_indices = @transform_3, window_bounds = array<i64: 1024, 256>}, {pipeline_mode = #tpu.pipeline_mode<synchronous>, transform_indices = @transform_4, window_bounds = array<i64: 768, 256>}, {pipeline_mode = #tpu.pipeline_mode<synchronous>, transform_indices = @transform_5, window_bounds = array<i64: 2304, 256>}, {pipeline_mode = #tpu.pipeline_mode<synchronous>, transform_indices = @transform_6, window_bounds = array<i64: 256, 512>}, {pipeline_mode = #tpu.pipeline_mode<synchronous>, transform_indices = @transform_7, window_bounds = array<i64: 256, 512>}, {pipeline_mode = #tpu.pipeline_mode<synchronous>, transform_indices = @transform_8, window_bounds = array<i64: 512, 256>}, {pipeline_mode = #tpu.pipeline_mode<synchronous>, transform_indices = @transform_9, window_bounds = array<i64: 256, 128>}, {pipeline_mode = #tpu.pipeline_mode<synchronous>, transform_indices = @transform_10, window_bounds = array<i64: 8, 256>}, {pipeline_mode = #tpu.pipeline_mode<synchronous>, transform_indices = @transform_11, window_bounds = array<i64: 2, 512>}, {pipeline_mode = #tpu.pipeline_mode<synchronous>, transform_indices = @transform_12, window_bounds = array<i64: 2, 128>}, {pipeline_mode = #tpu.pipeline_mode<synchronous>, transform_indices = @transform_13, window_bounds = array<i64: 1, 1>}, {transform_indices = @transform_14, window_bounds = array<i64: 2, 128>}]} {
    %c0 = arith.constant 0 : index
    %c0_0 = arith.constant 0 : index
    %0 = vector.load %arg11[%c0, %c0_0] : memref<8x256xf32, #tpu.memory_space<vmem>>, vector<8x256xf32>
    %1 = vector.extract_strided_slice %0 {offsets = [0, 0], sizes = [1, 256], strides = [1, 1]} : vector<8x256xf32> to vector<1x256xf32>
    %2 = vector.extract_strided_slice %0 {offsets = [1, 0], sizes = [1, 256], strides = [1, 1]} : vector<8x256xf32> to vector<1x256xf32>
    %3 = vector.extract_strided_slice %0 {offsets = [2, 0], sizes = [1, 256], strides = [1, 1]} : vector<8x256xf32> to vector<1x256xf32>
    %4 = vector.extract_strided_slice %0 {offsets = [3, 0], sizes = [1, 256], strides = [1, 1]} : vector<8x256xf32> to vector<1x256xf32>
    %5 = vector.extract_strided_slice %0 {offsets = [4, 0], sizes = [1, 256], strides = [1, 1]} : vector<8x256xf32> to vector<1x256xf32>
    %6 = vector.extract_strided_slice %0 {offsets = [5, 0], sizes = [1, 256], strides = [1, 1]} : vector<8x256xf32> to vector<1x256xf32>
    %7 = vector.extract_strided_slice %0 {offsets = [6, 0], sizes = [1, 256], strides = [1, 1]} : vector<8x256xf32> to vector<1x256xf32>
    %8 = vector.extract_strided_slice %0 {offsets = [7, 0], sizes = [1, 256], strides = [1, 1]} : vector<8x256xf32> to vector<1x256xf32>
    %c0_1 = arith.constant 0 : index
    %c0_2 = arith.constant 0 : index
    %9 = vector.load %arg12[%c0_1, %c0_2] : memref<2x512xf32, #tpu.memory_space<vmem>>, vector<2x512xf32>
    %10 = vector.extract_strided_slice %9 {offsets = [0, 0], sizes = [1, 512], strides = [1, 1]} : vector<2x512xf32> to vector<1x512xf32>
    %11 = vector.extract_strided_slice %9 {offsets = [1, 0], sizes = [1, 512], strides = [1, 1]} : vector<2x512xf32> to vector<1x512xf32>
    %c0_3 = arith.constant 0 : index
    %c0_4 = arith.constant 0 : index
    %12 = vector.load %arg13[%c0_3, %c0_4] : memref<2x128xf32, #tpu.memory_space<vmem>>, vector<2x128xf32>
    %13 = vector.extract_strided_slice %12 {offsets = [0, 0], sizes = [1, 128], strides = [1, 1]} : vector<2x128xf32> to vector<1x128xf32>
    %14 = vector.extract_strided_slice %12 {offsets = [1, 0], sizes = [1, 128], strides = [1, 1]} : vector<2x128xf32> to vector<1x128xf32>
    %c0_5 = arith.constant 0 : index
    %c0_6 = arith.constant 0 : index
    %15 = vector.load %arg2[%c0_5, %c0_6] : memref<64x1xi32, #tpu.memory_space<vmem>>, vector<64x1xi32>
    %16 = tpu.iota {dimensions = array<i32: 1>} : vector<64x26xi32>
    %17 = vector.broadcast %15 : vector<64x1xi32> to vector<64x26xi32>
    %18 = arith.cmpi eq, %17, %16 : vector<64x26xi32>
    %19 = arith.extui %18 : vector<64x26xi1> to vector<64x26xi32>
    %20 = arith.sitofp %19 : vector<64x26xi32> to vector<64x26xf32>
    %c0_7 = arith.constant 0 : index
    %c0_8 = arith.constant 0 : index
    %21 = vector.load %arg3[%c0_7, %c0_8] : memref<26x256xf32, #tpu.memory_space<vmem>>, vector<26x256xf32>
    %cst = arith.constant dense<0.000000e+00> : vector<64x256xf32>
    %22 = tpu.matmul %20, %21, %cst {dimension_numbers = #tpu.dot_dimension_numbers<[1], [0], [0], [1], [0, 0, 1, 1], [], []>} : vector<64x26xf32>, vector<26x256xf32>, vector<64x256xf32> -> vector<64x256xf32>
    %23 = vector.extract_strided_slice %22 {offsets = [0, 0], sizes = [62, 256], strides = [1, 1]} : vector<64x256xf32> to vector<62x256xf32>
    %24 = vector.extract_strided_slice %22 {offsets = [1, 0], sizes = [62, 256], strides = [1, 1]} : vector<64x256xf32> to vector<62x256xf32>
    %25 = vector.extract_strided_slice %22 {offsets = [2, 0], sizes = [62, 256], strides = [1, 1]} : vector<64x256xf32> to vector<62x256xf32>
    %26 = tpu.concatenate %23, %24, %25 in 1 : vector<62x256xf32>, vector<62x256xf32>, vector<62x256xf32> -> vector<62x768xf32>
    %c0_9 = arith.constant 0 : index
    %c0_10 = arith.constant 0 : index
    %27 = vector.load %arg5[%c0_9, %c0_10] : memref<768x256xf32, #tpu.memory_space<vmem>>, vector<768x256xf32>
    %cst_11 = arith.constant dense<0.000000e+00> : vector<62x256xf32>
    %28 = tpu.matmul %26, %27, %cst_11 {dimension_numbers = #tpu.dot_dimension_numbers<[1], [0], [0], [1], [0, 0, 1, 1], [], []>} : vector<62x768xf32>, vector<768x256xf32>, vector<62x256xf32> -> vector<62x256xf32>
    %29 = vector.broadcast %1 : vector<1x256xf32> to vector<62x256xf32>
    %30 = arith.addf %28, %29 : vector<62x256xf32>
    %cst_12 = arith.constant 0.000000e+00 : f32
    %31 = vector.broadcast %cst_12 : f32 to vector<62x256xf32>
    %32 = arith.maximumf %30, %31 : vector<62x256xf32>
    %33 = vector.broadcast %cst_12 : f32 to vector<62x256xf32>
    %34 = arith.subf %30, %33 : vector<62x256xf32>
    %35 = arith.cmpf one, %34, %34 : vector<62x256xf32>
    %36 = vector.broadcast %cst_12 : f32 to vector<62x256xf32>
    %37 = arith.addf %30, %36 : vector<62x256xf32>
    %38 = math.absf %34 : vector<62x256xf32>
    %cst_13 = arith.constant 0.000000e+00 : f32
    %39 = vector.broadcast %cst_13 : f32 to vector<62x256xf32>
    %40 = arith.subf %39, %38 : vector<62x256xf32>
    %41 = math.exp %40 : vector<62x256xf32>
    %42 = math.log1p %41 : vector<62x256xf32>
    %43 = arith.addf %32, %42 : vector<62x256xf32>
    %44 = arith.select %35, %37, %43 : vector<62x256xi1>, vector<62x256xf32>
    %45 = vector.broadcast %2 : vector<1x256xf32> to vector<62x256xf32>
    %46 = arith.mulf %44, %45 : vector<62x256xf32>
    %47 = vector.broadcast %3 : vector<1x256xf32> to vector<62x256xf32>
    %48 = arith.addf %46, %47 : vector<62x256xf32>
    %49 = vector.extract_strided_slice %48 {offsets = [0, 0], sizes = [46, 256], strides = [1, 1]} : vector<62x256xf32> to vector<46x256xf32>
    %50 = vector.extract_strided_slice %48 {offsets = [2, 0], sizes = [46, 256], strides = [1, 1]} : vector<62x256xf32> to vector<46x256xf32>
    %51 = vector.extract_strided_slice %48 {offsets = [4, 0], sizes = [46, 256], strides = [1, 1]} : vector<62x256xf32> to vector<46x256xf32>
    %52 = vector.extract_strided_slice %48 {offsets = [6, 0], sizes = [46, 256], strides = [1, 1]} : vector<62x256xf32> to vector<46x256xf32>
    %53 = vector.extract_strided_slice %48 {offsets = [8, 0], sizes = [46, 256], strides = [1, 1]} : vector<62x256xf32> to vector<46x256xf32>
    %54 = vector.extract_strided_slice %48 {offsets = [10, 0], sizes = [46, 256], strides = [1, 1]} : vector<62x256xf32> to vector<46x256xf32>
    %55 = vector.extract_strided_slice %48 {offsets = [12, 0], sizes = [46, 256], strides = [1, 1]} : vector<62x256xf32> to vector<46x256xf32>
    %56 = vector.extract_strided_slice %48 {offsets = [14, 0], sizes = [46, 256], strides = [1, 1]} : vector<62x256xf32> to vector<46x256xf32>
    %57 = vector.extract_strided_slice %48 {offsets = [16, 0], sizes = [46, 256], strides = [1, 1]} : vector<62x256xf32> to vector<46x256xf32>
    %58 = tpu.concatenate %49, %50, %51, %52, %53, %54, %55, %56, %57 in 1 : vector<46x256xf32>, vector<46x256xf32>, vector<46x256xf32>, vector<46x256xf32>, vector<46x256xf32>, vector<46x256xf32>, vector<46x256xf32>, vector<46x256xf32>, vector<46x256xf32> -> vector<46x2304xf32>
    %c0_14 = arith.constant 0 : index
    %c0_15 = arith.constant 0 : index
    %59 = vector.load %arg6[%c0_14, %c0_15] : memref<2304x256xf32, #tpu.memory_space<vmem>>, vector<2304x256xf32>
    %cst_16 = arith.constant dense<0.000000e+00> : vector<46x256xf32>
    %60 = tpu.matmul %58, %59, %cst_16 {dimension_numbers = #tpu.dot_dimension_numbers<[1], [0], [0], [1], [0, 0, 1, 1], [], []>} : vector<46x2304xf32>, vector<2304x256xf32>, vector<46x256xf32> -> vector<46x256xf32>
    %61 = vector.broadcast %4 : vector<1x256xf32> to vector<46x256xf32>
    %62 = arith.addf %60, %61 : vector<46x256xf32>
    %cst_17 = arith.constant 0.000000e+00 : f32
    %63 = vector.broadcast %cst_17 : f32 to vector<46x256xf32>
    %64 = arith.maximumf %62, %63 : vector<46x256xf32>
    %65 = vector.broadcast %cst_17 : f32 to vector<46x256xf32>
    %66 = arith.subf %62, %65 : vector<46x256xf32>
    %67 = arith.cmpf one, %66, %66 : vector<46x256xf32>
    %68 = vector.broadcast %cst_17 : f32 to vector<46x256xf32>
    %69 = arith.addf %62, %68 : vector<46x256xf32>
    %70 = math.absf %66 : vector<46x256xf32>
    %cst_18 = arith.constant 0.000000e+00 : f32
    %71 = vector.broadcast %cst_18 : f32 to vector<46x256xf32>
    %72 = arith.subf %71, %70 : vector<46x256xf32>
    %73 = math.exp %72 : vector<46x256xf32>
    %74 = math.log1p %73 : vector<46x256xf32>
    %75 = arith.addf %64, %74 : vector<46x256xf32>
    %76 = arith.select %67, %69, %75 : vector<46x256xi1>, vector<46x256xf32>
    %77 = vector.broadcast %5 : vector<1x256xf32> to vector<46x256xf32>
    %78 = arith.mulf %76, %77 : vector<46x256xf32>
    %79 = vector.broadcast %6 : vector<1x256xf32> to vector<46x256xf32>
    %80 = arith.addf %78, %79 : vector<46x256xf32>
    %81 = vector.extract_strided_slice %80 {offsets = [0, 0], sizes = [14, 256], strides = [1, 1]} : vector<46x256xf32> to vector<14x256xf32>
    %cst_19 = arith.constant dense<0xFF800000> : vector<256xf32>
    %82 = vector.multi_reduction <maximumf>, %81, %cst_19 [0] : vector<14x256xf32> to vector<256xf32>
    %83 = vector.shape_cast %82 : vector<256xf32> to vector<1x256xf32>
    %84 = vector.extract_strided_slice %80 {offsets = [32, 0], sizes = [14, 256], strides = [1, 1]} : vector<46x256xf32> to vector<14x256xf32>
    %cst_20 = arith.constant dense<0xFF800000> : vector<256xf32>
    %85 = vector.multi_reduction <maximumf>, %84, %cst_20 [0] : vector<14x256xf32> to vector<256xf32>
    %86 = vector.shape_cast %85 : vector<256xf32> to vector<1x256xf32>
    %87 = tpu.concatenate %83, %86 in 0 : vector<1x256xf32>, vector<1x256xf32> -> vector<2x256xf32>
    %c0_21 = arith.constant 0 : index
    %c0_22 = arith.constant 0 : index
    %88 = vector.load %arg1[%c0_21, %c0_22] : memref<2x1024xf32, #tpu.memory_space<vmem>>, vector<2x1024xf32>
    %c0_23 = arith.constant 0 : index
    %c0_24 = arith.constant 0 : index
    %89 = vector.load %arg4[%c0_23, %c0_24] : memref<1024x256xf32, #tpu.memory_space<vmem>>, vector<1024x256xf32>
    %cst_25 = arith.constant dense<0.000000e+00> : vector<2x256xf32>
    %90 = tpu.matmul %88, %89, %cst_25 {dimension_numbers = #tpu.dot_dimension_numbers<[1], [0], [0], [1], [0, 0, 1, 1], [], []>} : vector<2x1024xf32>, vector<1024x256xf32>, vector<2x256xf32> -> vector<2x256xf32>
    %91 = vector.broadcast %7 : vector<1x256xf32> to vector<2x256xf32>
    %92 = arith.addf %90, %91 : vector<2x256xf32>
    %c0_26 = arith.constant 0 : index
    %c0_27 = arith.constant 0 : index
    %93 = vector.load %arg7[%c0_26, %c0_27] : memref<256x512xf32, #tpu.memory_space<vmem>>, vector<256x512xf32>
    %cst_28 = arith.constant dense<0.000000e+00> : vector<2x512xf32>
    %94 = tpu.matmul %92, %93, %cst_28 {dimension_numbers = #tpu.dot_dimension_numbers<[1], [0], [0], [1], [0, 0, 1, 1], [], []>} : vector<2x256xf32>, vector<256x512xf32>, vector<2x512xf32> -> vector<2x512xf32>
    %95 = vector.broadcast %10 : vector<1x512xf32> to vector<2x512xf32>
    %96 = arith.addf %94, %95 : vector<2x512xf32>
    %97 = vector.extract_strided_slice %96 {offsets = [0, 0], sizes = [2, 256], strides = [1, 1]} : vector<2x512xf32> to vector<2x256xf32>
    %98 = vector.extract_strided_slice %96 {offsets = [0, 256], sizes = [2, 256], strides = [1, 1]} : vector<2x512xf32> to vector<2x256xf32>
    %99 = arith.mulf %97, %87 : vector<2x256xf32>
    %100 = arith.addf %99, %98 : vector<2x256xf32>
    %c0_29 = arith.constant 0 : index
    %c0_30 = arith.constant 0 : index
    %101 = vector.load %arg8[%c0_29, %c0_30] : memref<256x512xf32, #tpu.memory_space<vmem>>, vector<256x512xf32>
    %cst_31 = arith.constant dense<0.000000e+00> : vector<2x512xf32>
    %102 = tpu.matmul %100, %101, %cst_31 {dimension_numbers = #tpu.dot_dimension_numbers<[1], [0], [0], [1], [0, 0, 1, 1], [], []>} : vector<2x256xf32>, vector<256x512xf32>, vector<2x512xf32> -> vector<2x512xf32>
    %103 = vector.broadcast %11 : vector<1x512xf32> to vector<2x512xf32>
    %104 = arith.addf %102, %103 : vector<2x512xf32>
    %cst_32 = arith.constant 0.000000e+00 : f32
    %105 = vector.broadcast %cst_32 : f32 to vector<2x512xf32>
    %106 = arith.maximumf %104, %105 : vector<2x512xf32>
    %107 = vector.broadcast %cst_32 : f32 to vector<2x512xf32>
    %108 = arith.subf %104, %107 : vector<2x512xf32>
    %109 = arith.cmpf one, %108, %108 : vector<2x512xf32>
    %110 = vector.broadcast %cst_32 : f32 to vector<2x512xf32>
    %111 = arith.addf %104, %110 : vector<2x512xf32>
    %112 = math.absf %108 : vector<2x512xf32>
    %cst_33 = arith.constant 0.000000e+00 : f32
    %113 = vector.broadcast %cst_33 : f32 to vector<2x512xf32>
    %114 = arith.subf %113, %112 : vector<2x512xf32>
    %115 = math.exp %114 : vector<2x512xf32>
    %116 = math.log1p %115 : vector<2x512xf32>
    %117 = arith.addf %106, %116 : vector<2x512xf32>
    %118 = arith.select %109, %111, %117 : vector<2x512xi1>, vector<2x512xf32>
    %c0_34 = arith.constant 0 : index
    %c0_35 = arith.constant 0 : index
    %119 = vector.load %arg9[%c0_34, %c0_35] : memref<512x256xf32, #tpu.memory_space<vmem>>, vector<512x256xf32>
    %cst_36 = arith.constant dense<0.000000e+00> : vector<2x256xf32>
    %120 = tpu.matmul %118, %119, %cst_36 {dimension_numbers = #tpu.dot_dimension_numbers<[1], [0], [0], [1], [0, 0, 1, 1], [], []>} : vector<2x512xf32>, vector<512x256xf32>, vector<2x256xf32> -> vector<2x256xf32>
    %121 = vector.broadcast %8 : vector<1x256xf32> to vector<2x256xf32>
    %122 = arith.addf %120, %121 : vector<2x256xf32>
    %cst_37 = arith.constant 0.000000e+00 : f32
    %123 = vector.broadcast %cst_37 : f32 to vector<2x256xf32>
    %124 = arith.maximumf %122, %123 : vector<2x256xf32>
    %125 = vector.broadcast %cst_37 : f32 to vector<2x256xf32>
    %126 = arith.subf %122, %125 : vector<2x256xf32>
    %127 = arith.cmpf one, %126, %126 : vector<2x256xf32>
    %128 = vector.broadcast %cst_37 : f32 to vector<2x256xf32>
    %129 = arith.addf %122, %128 : vector<2x256xf32>
    %130 = math.absf %126 : vector<2x256xf32>
    %cst_38 = arith.constant 0.000000e+00 : f32
    %131 = vector.broadcast %cst_38 : f32 to vector<2x256xf32>
    %132 = arith.subf %131, %130 : vector<2x256xf32>
    %133 = math.exp %132 : vector<2x256xf32>
    %134 = math.log1p %133 : vector<2x256xf32>
    %135 = arith.addf %124, %134 : vector<2x256xf32>
    %136 = arith.select %127, %129, %135 : vector<2x256xi1>, vector<2x256xf32>
    %c0_39 = arith.constant 0 : index
    %c0_40 = arith.constant 0 : index
    %137 = vector.load %arg10[%c0_39, %c0_40] : memref<256x128xf32, #tpu.memory_space<vmem>>, vector<256x128xf32>
    %cst_41 = arith.constant dense<0.000000e+00> : vector<2x128xf32>
    %138 = tpu.matmul %136, %137, %cst_41 {dimension_numbers = #tpu.dot_dimension_numbers<[1], [0], [0], [1], [0, 0, 1, 1], [], []>} : vector<2x256xf32>, vector<256x128xf32>, vector<2x128xf32> -> vector<2x128xf32>
    %139 = vector.broadcast %13 : vector<1x128xf32> to vector<2x128xf32>
    %140 = arith.addf %138, %139 : vector<2x128xf32>
    %cst_42 = arith.constant 0.000000e+00 : f32
    %141 = vector.broadcast %cst_42 : f32 to vector<2x128xf32>
    %142 = arith.maximumf %140, %141 : vector<2x128xf32>
    %143 = vector.broadcast %cst_42 : f32 to vector<2x128xf32>
    %144 = arith.subf %140, %143 : vector<2x128xf32>
    %145 = arith.cmpf one, %144, %144 : vector<2x128xf32>
    %146 = vector.broadcast %cst_42 : f32 to vector<2x128xf32>
    %147 = arith.addf %140, %146 : vector<2x128xf32>
    %148 = math.absf %144 : vector<2x128xf32>
    %cst_43 = arith.constant 0.000000e+00 : f32
    %149 = vector.broadcast %cst_43 : f32 to vector<2x128xf32>
    %150 = arith.subf %149, %148 : vector<2x128xf32>
    %151 = math.exp %150 : vector<2x128xf32>
    %152 = math.log1p %151 : vector<2x128xf32>
    %153 = arith.addf %142, %152 : vector<2x128xf32>
    %154 = arith.select %145, %147, %153 : vector<2x128xi1>, vector<2x128xf32>
    %155 = vector.broadcast %14 : vector<1x128xf32> to vector<2x128xf32>
    %156 = arith.mulf %154, %155 : vector<2x128xf32>
    %cst_44 = arith.constant dense<0.000000e+00> : vector<2xf32>
    %157 = vector.multi_reduction <add>, %156, %cst_44 [1] : vector<2x128xf32> to vector<2xf32>
    %158 = vector.shape_cast %157 : vector<2xf32> to vector<2x1xf32>
    %c0_45 = arith.constant 0 : index
    %c0_46 = arith.constant 0 : index
    %159 = vector.load %arg14[%c0_45, %c0_46] : memref<1x1xf32, #tpu.memory_space<vmem>>, vector<1x1xf32>
    %160 = vector.broadcast %159 : vector<1x1xf32> to vector<2x1xf32>
    %161 = arith.addf %158, %160 : vector<2x1xf32>
    %162 = vector.shape_cast %161 : vector<2x1xf32> to vector<2x1xf32>
    %163 = vector.broadcast %162 : vector<2x1xf32> to vector<2x128xf32>
    %c0_47 = arith.constant 0 : index
    %c0_48 = arith.constant 0 : index
    %164 = vector.load %arg15[%c0_47, %c0_48] : memref<2x128xf32, #tpu.memory_space<vmem>>, vector<2x128xf32>
    tpu.vector_store %arg15[%c0_47, %c0_48], %163 {strides = array<i32>} : memref<2x128xf32, #tpu.memory_space<vmem>>, vector<2x128xf32>,
    return
  }
  func.func @transform_0(%arg0: i32) -> (i32, i32) {
    %c0_i32 = arith.constant 0 : i32
    %c0_i32_0 = arith.constant 0 : i32
    return %arg0, %c0_i32 : i32, i32
  }
  func.func @transform_1(%arg0: i32) -> (i32, i32) {
    %c0_i32 = arith.constant 0 : i32
    %c0_i32_0 = arith.constant 0 : i32
    return %arg0, %c0_i32 : i32, i32
  }
  func.func @transform_2(%arg0: i32) -> (i32, i32) {
    %c0_i32 = arith.constant 0 : i32
    %c0_i32_0 = arith.constant 0 : i32
    %c0_i32_1 = arith.constant 0 : i32
    return %c0_i32, %c0_i32_0 : i32, i32
  }
  func.func @transform_3(%arg0: i32) -> (i32, i32) {
    %c0_i32 = arith.constant 0 : i32
    %c0_i32_0 = arith.constant 0 : i32
    %c0_i32_1 = arith.constant 0 : i32
    return %c0_i32, %c0_i32_0 : i32, i32
  }
  func.func @transform_4(%arg0: i32) -> (i32, i32) {
    %c0_i32 = arith.constant 0 : i32
    %c0_i32_0 = arith.constant 0 : i32
    %c0_i32_1 = arith.constant 0 : i32
    return %c0_i32, %c0_i32_0 : i32, i32
  }
  func.func @transform_5(%arg0: i32) -> (i32, i32) {
    %c0_i32 = arith.constant 0 : i32
    %c0_i32_0 = arith.constant 0 : i32
    %c0_i32_1 = arith.constant 0 : i32
    return %c0_i32, %c0_i32_0 : i32, i32
  }
  func.func @transform_6(%arg0: i32) -> (i32, i32) {
    %c0_i32 = arith.constant 0 : i32
    %c0_i32_0 = arith.constant 0 : i32
    %c0_i32_1 = arith.constant 0 : i32
    return %c0_i32, %c0_i32_0 : i32, i32
  }
  func.func @transform_7(%arg0: i32) -> (i32, i32) {
    %c0_i32 = arith.constant 0 : i32
    %c0_i32_0 = arith.constant 0 : i32
    %c0_i32_1 = arith.constant 0 : i32
    return %c0_i32, %c0_i32_0 : i32, i32
  }
  func.func @transform_8(%arg0: i32) -> (i32, i32) {
    %c0_i32 = arith.constant 0 : i32
    %c0_i32_0 = arith.constant 0 : i32
    %c0_i32_1 = arith.constant 0 : i32
    return %c0_i32, %c0_i32_0 : i32, i32
  }
  func.func @transform_9(%arg0: i32) -> (i32, i32) {
    %c0_i32 = arith.constant 0 : i32
    %c0_i32_0 = arith.constant 0 : i32
    %c0_i32_1 = arith.constant 0 : i32
    return %c0_i32, %c0_i32_0 : i32, i32
  }
  func.func @transform_10(%arg0: i32) -> (i32, i32) {
    %c0_i32 = arith.constant 0 : i32
    %c0_i32_0 = arith.constant 0 : i32
    %c0_i32_1 = arith.constant 0 : i32
    return %c0_i32, %c0_i32_0 : i32, i32
  }
  func.func @transform_11(%arg0: i32) -> (i32, i32) {
    %c0_i32 = arith.constant 0 : i32
    %c0_i32_0 = arith.constant 0 : i32
    %c0_i32_1 = arith.constant 0 : i32
    return %c0_i32, %c0_i32_0 : i32, i32
  }
  func.func @transform_12(%arg0: i32) -> (i32, i32) {
    %c0_i32 = arith.constant 0 : i32
    %c0_i32_0 = arith.constant 0 : i32
    %c0_i32_1 = arith.constant 0 : i32
    return %c0_i32, %c0_i32_0 : i32, i32
  }
  func.func @transform_13(%arg0: i32) -> (i32, i32) {
    %c0_i32 = arith.constant 0 : i32
    %c0_i32_0 = arith.constant 0 : i32
    %c0_i32_1 = arith.constant 0 : i32
    return %c0_i32, %c0_i32_0 : i32, i32
  }
  func.func @transform_14(%arg0: i32) -> (i32, i32) {
    %c0_i32 = arith.constant 0 : i32
    %c0_i32_0 = arith.constant 0 : i32
    return %arg0, %c0_i32 : i32, i32
  }
}

</mosaic_0001>

<llo_original>
// kernel: filmcpi_forward.1
$region0: #{filmcpi_forward.1}
  #allocation0 [shape = 'u32[]', space=smem, size = 0x4, offset = 0x4, fixed_abs, tag = 'smem constant byte address 0x4 - core index']
  #allocation1 [shape = 'u32[72,128]{1,0:T(1,128)}', space=vmem, size = 0x9000, scoped, tag = 'internal scratch']
  #allocation2 [shape = 'f32[1,1]{1,0:T(1,128)S(1)}', space=vmem, size = 0x200, scoped, tag = 'scoped memory for filmcpi_forward.1']
  %s0 = inlined_call_operand.hbm [shape: f32[2,1024], index: 0, kind: input, shape index: {}]
  %s1 = inlined_call_operand.vmem [shape: s32[64,1], index: 1, kind: input, shape index: {}]
  %s2 = inlined_call_operand.hbm [shape: f32[26,256], index: 2, kind: input, shape index: {}]
  %s3 = inlined_call_operand.hbm [shape: f32[1024,256], index: 3, kind: input, shape index: {}]
  %s4 = inlined_call_operand.hbm [shape: f32[768,256], index: 4, kind: input, shape index: {}]
  %s5 = inlined_call_operand.hbm [shape: f32[2304,256], index: 5, kind: input, shape index: {}]
  %s6 = inlined_call_operand.hbm [shape: f32[256,512], index: 6, kind: input, shape index: {}]
  %s7 = inlined_call_operand.hbm [shape: f32[256,512], index: 7, kind: input, shape index: {}]
  %s8 = inlined_call_operand.hbm [shape: f32[512,256], index: 8, kind: input, shape index: {}]
  %s9 = inlined_call_operand.hbm [shape: f32[256,128], index: 9, kind: input, shape index: {}]
  %s10 = inlined_call_operand.vmem [shape: f32[8,256], index: 10, kind: input, shape index: {}]
  %s11 = inlined_call_operand.vmem [shape: f32[2,512], index: 11, kind: input, shape index: {}]
  %s12 = inlined_call_operand.vmem [shape: f32[2,128], index: 12, kind: input, shape index: {}]
  %s13 = inlined_call_operand.<no memory space> [shape: f32[1,1], index: 13, kind: input, shape index: {}]
  %s14 = inlined_call_operand.vmem [shape: f32[2,128], index: 14, kind: output, shape index: {}]
  %s15 = sld [smem:[#allocation0]]
  $region102: #{filmcpi_forward.1} parent=0
    _
  %s17 = ssub.s32 1, %s15
  %s18 = scalar_select 0, %s17, %s15
  %v19 = vstv %s13
  %20 = vst [vmem:[#allocation2] sm:$0x1] %v19
  $region1: #{filmcpi_forward.1} parent=0
    #allocation3 [shape = 'u8[8192]{0}', space=vmem, size = 0x2000, scoped, tag = 'input window, operand 0, single buffered']
    #allocation4 [shape = 's32[1]{0}', space=sflag, size = 0x4, scoped, tag = 'scoped memory for filmcpi_forward.1']
    #allocation5 [shape = 'u8[32768]{0}', space=vmem, size = 0x8000, scoped, tag = 'input window, operand 2, single buffered']
    #allocation6 [shape = 's32[1]{0}', space=sflag, size = 0x4, scoped, tag = 'scoped memory for filmcpi_forward.1']
    #allocation7 [shape = 'u8[1048576]{0}', space=vmem, size = 0x100000, scoped, tag = 'input window, operand 3, single buffered']
    #allocation8 [shape = 'u8[786432]{0}', space=vmem, size = 0xc0000, scoped, tag = 'input window, operand 4, single buffered']
    #allocation9 [shape = 's32[1]{0}', space=sflag, size = 0x4, scoped, tag = 'scoped memory for filmcpi_forward.1']
    #allocation10 [shape = 'u8[2359296]{0}', space=vmem, size = 0x240000, scoped, tag = 'input window, operand 5, single buffered']
    #allocation11 [shape = 'u8[524288]{0}', space=vmem, size = 0x80000, scoped, tag = 'input window, operand 6, single buffered']
    #allocation12 [shape = 's32[1]{0}', space=sflag, size = 0x4, scoped, tag = 'scoped memory for filmcpi_forward.1']
    #allocation13 [shape = 'u8[524288]{0}', space=vmem, size = 0x80000, scoped, tag = 'input window, operand 7, single buffered']
    #allocation14 [shape = 'u8[524288]{0}', space=vmem, size = 0x80000, scoped, tag = 'input window, operand 8, single buffered']
    #allocation15 [shape = 's32[1]{0}', space=sflag, size = 0x4, scoped, tag = 'scoped memory for filmcpi_forward.1']
    #allocation16 [shape = 'u8[131072]{0}', space=vmem, size = 0x20000, scoped, tag = 'input window, operand 9, single buffered']
    %21 = vsyncpa [#allocation4], 0
    %22 = vsyncpa [#allocation6], 0
    %23 = vsyncpa [#allocation9], 0
    %24 = vsyncpa [#allocation12], 0
    %25 = vsyncpa [#allocation15], 0
    // Predicated region
    $region2: #{filmcpi_forward.1} parent=1 // pred_check
      _
    $region3: #{filmcpi_forward.1} parent=1 // pred_check_branch
      %27 = sbr.rel (0) target = $region5
    $region4: #{filmcpi_forward.1} parent=1 // pred_region
      %29 = vsyncadd [#allocation4], 0
      %s31 = sshll.u32 %s0, 4
      %s32 = int_to_ptr.hbm [resolvable:$true] %s31
      %s33 = sshll.u32 [#allocation3], 4
      %s34 = int_to_ptr.vmem [resolvable:$true] %s33
      %36 = dma.hbm_to_vmem [thread:$0]  %s32, 256, %s34, [#allocation4]
    $region5: #{filmcpi_forward.1} parent=1 // pred_fallthru
      _
    // Predicated region
    $region6: #{filmcpi_forward.1} parent=1 // pred_check
      _
    $region7: #{filmcpi_forward.1} parent=1 // pred_check_branch
      %38 = sbr.rel (0) target = $region9
    $region8: #{filmcpi_forward.1} parent=1 // pred_region
      _
    $region9: #{filmcpi_forward.1} parent=1 // pred_fallthru
      _
    // Predicated region
    $region10: #{filmcpi_forward.1} parent=1 // pred_check
      _
    $region11: #{filmcpi_forward.1} parent=1 // pred_check_branch
      %40 = sbr.rel (0) target = $region13
    $region12: #{filmcpi_forward.1} parent=1 // pred_region
      %42 = vsyncadd [#allocation6], 0
      %s43 = sshll.u32 %s2, 4
      %s44 = int_to_ptr.hbm [resolvable:$true] %s43
      %s45 = sshll.u32 [#allocation5], 4
      %s46 = int_to_ptr.vmem [resolvable:$true] %s45
      %51 = dma.hbm_to_vmem [thread:$0]  %s44, 1024, %s46, [#allocation6], 256, 256, 16
    $region13: #{filmcpi_forward.1} parent=1 // pred_fallthru
      _
    // Predicated region
    $region14: #{filmcpi_forward.1} parent=1 // pred_check
      _
    $region15: #{filmcpi_forward.1} parent=1 // pred_check_branch
      %53 = sbr.rel (0) target = $region17
    $region16: #{filmcpi_forward.1} parent=1 // pred_region
      %55 = vsyncadd [#allocation6], 0
      %s56 = sshll.u32 %s3, 4
      %s57 = int_to_ptr.hbm [resolvable:$true] %s56
      %s58 = sshll.u32 [#allocation7], 4
      %s59 = int_to_ptr.vmem [resolvable:$true] %s58
      %64 = dma.hbm_to_vmem [thread:$0]  %s57, 32768, %s59, [#allocation6], 256, 256, 16
    $region17: #{filmcpi_forward.1} parent=1 // pred_fallthru
      _
    // Predicated region
    $region18: #{filmcpi_forward.1} parent=1 // pred_check
      _
    $region19: #{filmcpi_forward.1} parent=1 // pred_check_branch
      %66 = sbr.rel (0) target = $region21
    $region20: #{filmcpi_forward.1} parent=1 // pred_region
      %68 = vsyncadd [#allocation9], 0
      %s69 = sshll.u32 %s4, 4
      %s70 = int_to_ptr.hbm [resolvable:$true] %s69
      %s71 = sshll.u32 [#allocation8], 4
      %s72 = int_to_ptr.vmem [resolvable:$true] %s71
      %77 = dma.hbm_to_vmem [thread:$0]  %s70, 24576, %s72, [#allocation9], 256, 256, 16
    $region21: #{filmcpi_forward.1} parent=1 // pred_fallthru
      _
    // Predicated region
    $region22: #{filmcpi_forward.1} parent=1 // pred_check
      _
    $region23: #{filmcpi_forward.1} parent=1 // pred_check_branch
      %79 = sbr.rel (0) target = $region25
    $region24: #{filmcpi_forward.1} parent=1 // pred_region
      %81 = vsyncadd [#allocation9], 0
      %s82 = sshll.u32 %s5, 4
      %s83 = int_to_ptr.hbm [resolvable:$true] %s82
      %s84 = sshll.u32 [#allocation10], 4
      %s85 = int_to_ptr.vmem [resolvable:$true] %s84
      %90 = dma.hbm_to_vmem [thread:$0]  %s83, 73728, %s85, [#allocation9], 256, 256, 16
    $region25: #{filmcpi_forward.1} parent=1 // pred_fallthru
      _
    // Predicated region
    $region26: #{filmcpi_forward.1} parent=1 // pred_check
      _
    $region27: #{filmcpi_forward.1} parent=1 // pred_check_branch
      %92 = sbr.rel (0) target = $region29
    $region28: #{filmcpi_forward.1} parent=1 // pred_region
      %94 = vsyncadd [#allocation12], 0
      %s95 = sshll.u32 %s6, 4
      %s96 = int_to_ptr.hbm [resolvable:$true] %s95
      %s97 = sshll.u32 [#allocation11], 4
      %s98 = int_to_ptr.vmem [resolvable:$true] %s97
      %103 = dma.hbm_to_vmem [thread:$0]  %s96, 16384, %s98, [#allocation12], 512, 512, 32
    $region29: #{filmcpi_forward.1} parent=1 // pred_fallthru
      _
    // Predicated region
    $region30: #{filmcpi_forward.1} parent=1 // pred_check
      _
    $region31: #{filmcpi_forward.1} parent=1 // pred_check_branch
      %105 = sbr.rel (0) target = $region33
    $region32: #{filmcpi_forward.1} parent=1 // pred_region
      %107 = vsyncadd [#allocation12], 0
      %s108 = sshll.u32 %s7, 4
      %s109 = int_to_ptr.hbm [resolvable:$true] %s108
      %s110 = sshll.u32 [#allocation13], 4
      %s111 = int_to_ptr.vmem [resolvable:$true] %s110
      %116 = dma.hbm_to_vmem [thread:$0]  %s109, 16384, %s111, [#allocation12], 512, 512, 32
    $region33: #{filmcpi_forward.1} parent=1 // pred_fallthru
      _
    // Predicated region
    $region34: #{filmcpi_forward.1} parent=1 // pred_check
      _
    $region35: #{filmcpi_forward.1} parent=1 // pred_check_branch
      %118 = sbr.rel (0) target = $region37
    $region36: #{filmcpi_forward.1} parent=1 // pred_region
      %120 = vsyncadd [#allocation15], 0
      %s121 = sshll.u32 %s8, 4
      %s122 = int_to_ptr.hbm [resolvable:$true] %s121
      %s123 = sshll.u32 [#allocation14], 4
      %s124 = int_to_ptr.vmem [resolvable:$true] %s123
      %129 = dma.hbm_to_vmem [thread:$0]  %s122, 16384, %s124, [#allocation15], 256, 256, 16
    $region37: #{filmcpi_forward.1} parent=1 // pred_fallthru
      _
    // Predicated region
    $region38: #{filmcpi_forward.1} parent=1 // pred_check
      _
    $region39: #{filmcpi_forward.1} parent=1 // pred_check_branch
      %131 = sbr.rel (0) target = $region41
    $region40: #{filmcpi_forward.1} parent=1 // pred_region
      %133 = vsyncadd [#allocation15], 0
      %s134 = sshll.u32 %s9, 4
      %s135 = int_to_ptr.hbm [resolvable:$true] %s134
      %s136 = sshll.u32 [#allocation16], 4
      %s137 = int_to_ptr.vmem [resolvable:$true] %s136
      %142 = dma.hbm_to_vmem [thread:$0]  %s135, 4096, %s137, [#allocation15], 128, 128, 8
    $region41: #{filmcpi_forward.1} parent=1 // pred_fallthru
      _
    // Predicated region
    $region42: #{filmcpi_forward.1} parent=1 // pred_check
      _
    $region43: #{filmcpi_forward.1} parent=1 // pred_check_branch
      %144 = sbr.rel (0) target = $region45
    $region44: #{filmcpi_forward.1} parent=1 // pred_region
      _
    $region45: #{filmcpi_forward.1} parent=1 // pred_fallthru
      _
    // Predicated region
    $region46: #{filmcpi_forward.1} parent=1 // pred_check
      _
    $region47: #{filmcpi_forward.1} parent=1 // pred_check_branch
      %146 = sbr.rel (0) target = $region49
    $region48: #{filmcpi_forward.1} parent=1 // pred_region
      _
    $region49: #{filmcpi_forward.1} parent=1 // pred_fallthru
      _
    // Predicated region
    $region50: #{filmcpi_forward.1} parent=1 // pred_check
      _
    $region51: #{filmcpi_forward.1} parent=1 // pred_check_branch
      %148 = sbr.rel (0) target = $region53
    $region52: #{filmcpi_forward.1} parent=1 // pred_region
      _
    $region53: #{filmcpi_forward.1} parent=1 // pred_fallthru
      _
    // Predicated region
    $region54: #{filmcpi_forward.1} parent=1 // pred_check
      _
    $region55: #{filmcpi_forward.1} parent=1 // pred_check_branch
      %150 = sbr.rel (0) target = $region57
    $region56: #{filmcpi_forward.1} parent=1 // pred_region
      _
    $region57: #{filmcpi_forward.1} parent=1 // pred_fallthru
      _
    // Predicated region
    $region58: #{filmcpi_forward.1} parent=1 // pred_check
      _
    $region59: #{filmcpi_forward.1} parent=1 // pred_check_branch
      %152 = sbr.rel (0) target = $region61
    $region60: #{filmcpi_forward.1} parent=1 // pred_region
      %154 = dma.done [#allocation4], 256
    $region61: #{filmcpi_forward.1} parent=1 // pred_fallthru
      _
    // Predicated region
    $region62: #{filmcpi_forward.1} parent=1 // pred_check
      _
    $region63: #{filmcpi_forward.1} parent=1 // pred_check_branch
      %156 = sbr.rel (0) target = $region65
    $region64: #{filmcpi_forward.1} parent=1 // pred_region
      %158 = dma.done [#allocation6], 1024
    $region65: #{filmcpi_forward.1} parent=1 // pred_fallthru
      _
    // Predicated region
    $region66: #{filmcpi_forward.1} parent=1 // pred_check
      _
    $region67: #{filmcpi_forward.1} parent=1 // pred_check_branch
      %160 = sbr.rel (0) target = $region69
    $region68: #{filmcpi_forward.1} parent=1 // pred_region
      %162 = dma.done [#allocation6], 32768
    $region69: #{filmcpi_forward.1} parent=1 // pred_fallthru
      _
    // Predicated region
    $region70: #{filmcpi_forward.1} parent=1 // pred_check
      _
    $region71: #{filmcpi_forward.1} parent=1 // pred_check_branch
      %164 = sbr.rel (0) target = $region73
    $region72: #{filmcpi_forward.1} parent=1 // pred_region
      %166 = dma.done [#allocation9], 24576
    $region73: #{filmcpi_forward.1} parent=1 // pred_fallthru
      _
    // Predicated region
    $region74: #{filmcpi_forward.1} parent=1 // pred_check
      _
    $region75: #{filmcpi_forward.1} parent=1 // pred_check_branch
      %168 = sbr.rel (0) target = $region77
    $region76: #{filmcpi_forward.1} parent=1 // pred_region
      %170 = dma.done [#allocation9], 73728
    $region77: #{filmcpi_forward.1} parent=1 // pred_fallthru
      _
    // Predicated region
    $region78: #{filmcpi_forward.1} parent=1 // pred_check
      _
    $region79: #{filmcpi_forward.1} parent=1 // pred_check_branch
      %172 = sbr.rel (0) target = $region81
    $region80: #{filmcpi_forward.1} parent=1 // pred_region
      %174 = dma.done [#allocation12], 16384
    $region81: #{filmcpi_forward.1} parent=1 // pred_fallthru
      _
    // Predicated region
    $region82: #{filmcpi_forward.1} parent=1 // pred_check
      _
    $region83: #{filmcpi_forward.1} parent=1 // pred_check_branch
      %176 = sbr.rel (0) target = $region85
    $region84: #{filmcpi_forward.1} parent=1 // pred_region
      %178 = dma.done [#allocation12], 16384
    $region85: #{filmcpi_forward.1} parent=1 // pred_fallthru
      _
    // Predicated region
    $region86: #{filmcpi_forward.1} parent=1 // pred_check
      _
    $region87: #{filmcpi_forward.1} parent=1 // pred_check_branch
      %180 = sbr.rel (0) target = $region89
    $region88: #{filmcpi_forward.1} parent=1 // pred_region
      %182 = dma.done [#allocation15], 16384
    $region89: #{filmcpi_forward.1} parent=1 // pred_fallthru
      _
    // Predicated region
    $region90: #{filmcpi_forward.1} parent=1 // pred_check
      _
    $region91: #{filmcpi_forward.1} parent=1 // pred_check_branch
      %184 = sbr.rel (0) target = $region93
    $region92: #{filmcpi_forward.1} parent=1 // pred_region
      %186 = dma.done [#allocation15], 4096
    $region93: #{filmcpi_forward.1} parent=1 // pred_fallthru
      _
    %v187 = vld [vmem:[%s10] sm:$0xff]
    %v188 = vld [vmem:[%s10 + $0x8] sm:$0xff]
    %v189 = vld [vmem:[%s11] sm:$0xff]
    %v190 = vld [vmem:[%s12] sm:$0x3]
    %v191 = vld [vmem:[%s1] sm:$0xff]
    %v192 = vld [vmem:[%s1 + $0x8] sm:$0xff]
    %v193 = vld [vmem:[%s1 + $0x10] sm:$0xff]
    %v194 = vld [vmem:[%s1 + $0x18] sm:$0xff]
    %v195 = vld [vmem:[%s1 + $0x20] sm:$0xff]
    %v196 = vld [vmem:[%s1 + $0x28] sm:$0xff]
    %v197 = vld [vmem:[%s1 + $0x30] sm:$0xff]
    %v198 = vld [vmem:[%s1 + $0x38] sm:$0xff]
    %v199 = vlaneseq
    %v200 = vand.u32 %v199, 127
    %201 = vset.pattern.permute.xlu0 0
    %202 = vperm.xlu0 %201, %v191
    %v203 = vpop.permute.xlu0 %202
    %204 = vset.pattern.permute.xlu0 0
    %205 = vperm.xlu0 %204, %v192
    %v206 = vpop.permute.xlu0 %205
    %207 = vset.pattern.permute.xlu0 0
    %208 = vperm.xlu0 %207, %v193
    %v209 = vpop.permute.xlu0 %208
    %210 = vset.pattern.permute.xlu0 0
    %211 = vperm.xlu0 %210, %v194
    %v212 = vpop.permute.xlu0 %211
    %213 = vset.pattern.permute.xlu0 0
    %214 = vperm.xlu0 %213, %v195
    %v215 = vpop.permute.xlu0 %214
    %216 = vset.pattern.permute.xlu0 0
    %217 = vperm.xlu0 %216, %v196
    %v218 = vpop.permute.xlu0 %217
    %219 = vset.pattern.permute.xlu0 0
    %220 = vperm.xlu0 %219, %v197
    %v221 = vpop.permute.xlu0 %220
    %222 = vset.pattern.permute.xlu0 0
    %223 = vperm.xlu0 %222, %v198
    %v224 = vpop.permute.xlu0 %223
    %vm225 = vcmp.eq.s32.totalorder %v203, %v200
    %vm226 = vcmp.eq.s32.totalorder %v206, %v200
    %vm227 = vcmp.eq.s32.totalorder %v209, %v200
    %vm228 = vcmp.eq.s32.totalorder %v212, %v200
    %vm229 = vcmp.eq.s32.totalorder %v215, %v200
    %vm230 = vcmp.eq.s32.totalorder %v218, %v200
    %vm231 = vcmp.eq.s32.totalorder %v221, %v200
    %vm232 = vcmp.eq.s32.totalorder %v224, %v200
    %v233 = vsel %vm225, 1, 0
    %v234 = vsel %vm226, 1, 0
    %v235 = vsel %vm227, 1, 0
    %v236 = vsel %vm228, 1, 0
    %v237 = vsel %vm229, 1, 0
    %v238 = vsel %vm230, 1, 0
    %v239 = vsel %vm231, 1, 0
    %v240 = vsel %vm232, 1, 0
    %v241 = vcvt.s32.f32 %v233
    %v242 = vcvt.s32.f32 %v234
    %v243 = vcvt.s32.f32 %v235
    %v244 = vcvt.s32.f32 %v236
    %v245 = vcvt.s32.f32 %v237
    %v246 = vcvt.s32.f32 %v238
    %v247 = vcvt.s32.f32 %v239
    %v248 = vcvt.s32.f32 %v240
    %v249 = vld [vmem:[#allocation5] sm:$0xff]
    %v250 = vld [vmem:[#allocation5 + $0x8] sm:$0xff]
    %v251 = vld [vmem:[#allocation5 + $0x10] sm:$0xff]
    %v252 = vld [vmem:[#allocation5 + $0x18] sm:$0xff]
    %v253 = vld [vmem:[#allocation5 + $0x20] sm:$0xff]
    %v254 = vld [vmem:[#allocation5 + $0x28] sm:$0xff]
    %v255 = vld [vmem:[#allocation5 + $0x30] sm:$0x3]
    %v256 = vld [vmem:[#allocation5 + $0x38] sm:$0x3]
    %vm257 = vcmask 211968
    %v259 = vsel %vm257, %v241, 0
    %v262 = vsel %vm257, %v242, 0
    %v265 = vsel %vm257, %v243, 0
    %v268 = vsel %vm257, %v244, 0
    %v271 = vsel %vm257, %v245, 0
    %v274 = vsel %vm257, %v246, 0
    %v277 = vsel %vm257, %v247, 0
    %v280 = vsel %vm257, %v248, 0
    %vm282 = vcmask 1041408
    %v284 = vsel %vm282, %v255, 0
    %v287 = vsel %vm282, %v256, 0
    %289 = vmatpush.msra.mxu0 0.0
    %290 = vmatpush.msra.mxu0 0.0
    %291 = vmatpush.msra.mxu0 0.0
    %292 = vmatpush.msra.mxu0 0.0
    %293 = vmatpush.msra.mxu0 0.0
    %294 = vmatpush.msra.mxu0 0.0
    %295 = vmatpush.msra.mxu0 0.0
    %296 = vmatpush.msra.mxu0 0.0
    %297 = vmatpush.msra.mxu0 0.0
    %298 = vmatpush.msra.mxu0 0.0
    %299 = vmatpush.msra.mxu0 0.0
    %300 = vmatpush.msra.mxu0 0.0
    %301 = vmatpush.msra.mxu0 %v284
    %302 = vmatpush.msra.mxu0 %v253
    %303 = vmatpush.msra.mxu0 %v251
    %304 = vmatpush.msra.mxu0 %v249
    %305 = vmatmul.f32.gmra.mxu0 %v259
    %v306 = vpop.f32.mrf.mxu0
    %v307 = vadd.f32 0.0, %v306
    %308 = vmatmul.f32.gmra.mxu0 %v262
    %v309 = vpop.f32.mrf.mxu0
    %v310 = vadd.f32 0.0, %v309
    %311 = vmatmul.f32.gmra.mxu0 %v265
    %v312 = vpop.f32.mrf.mxu0
    %v313 = vadd.f32 0.0, %v312
    %314 = vmatmul.f32.gmra.mxu0 %v268
    %v315 = vpop.f32.mrf.mxu0
    %v316 = vadd.f32 0.0, %v315
    %317 = vmatmul.f32.gmra.mxu0 %v271
    %v318 = vpop.f32.mrf.mxu0
    %v319 = vadd.f32 0.0, %v318
    %320 = vmatmul.f32.gmra.mxu0 %v274
    %v321 = vpop.f32.mrf.mxu0
    %v322 = vadd.f32 0.0, %v321
    %323 = vmatmul.f32.gmra.mxu0 %v277
    %v324 = vpop.f32.mrf.mxu0
    %v325 = vadd.f32 0.0, %v324
    %326 = vmatmul.f32.gmra.mxu0 %v280
    %v327 = vpop.f32.mrf.mxu0
    %v328 = vadd.f32 0.0, %v327
    %329 = vdwg.mxu0
    %330 = vmatpush.msra.mxu0 0.0
    %331 = vmatpush.msra.mxu0 0.0
    %332 = vmatpush.msra.mxu0 0.0
    %333 = vmatpush.msra.mxu0 0.0
    %334 = vmatpush.msra.mxu0 0.0
    %335 = vmatpush.msra.mxu0 0.0
    %336 = vmatpush.msra.mxu0 0.0
    %337 = vmatpush.msra.mxu0 0.0
    %338 = vmatpush.msra.mxu0 0.0
    %339 = vmatpush.msra.mxu0 0.0
    %340 = vmatpush.msra.mxu0 0.0
    %341 = vmatpush.msra.mxu0 0.0
    %342 = vmatpush.msra.mxu0 %v287
    %343 = vmatpush.msra.mxu0 %v254
    %344 = vmatpush.msra.mxu0 %v252
    %345 = vmatpush.msra.mxu0 %v250
    %346 = vmatmul.f32.gmra.mxu0 %v259
    %v347 = vpop.f32.mrf.mxu0
    %v348 = vadd.f32 0.0, %v347
    %349 = vmatmul.f32.gmra.mxu0 %v262
    %v350 = vpop.f32.mrf.mxu0
    %v351 = vadd.f32 0.0, %v350
    %352 = vmatmul.f32.gmra.mxu0 %v265
    %v353 = vpop.f32.mrf.mxu0
    %v354 = vadd.f32 0.0, %v353
    %355 = vmatmul.f32.gmra.mxu0 %v268
    %v356 = vpop.f32.mrf.mxu0
    %v357 = vadd.f32 0.0, %v356
    %358 = vmatmul.f32.gmra.mxu0 %v271
    %v359 = vpop.f32.mrf.mxu0
    %v360 = vadd.f32 0.0, %v359
    %361 = vmatmul.f32.gmra.mxu0 %v274
    %v362 = vpop.f32.mrf.mxu0
    %v363 = vadd.f32 0.0, %v362
    %364 = vmatmul.f32.gmra.mxu0 %v277
    %v365 = vpop.f32.mrf.mxu0
    %v366 = vadd.f32 0.0, %v365
    %367 = vmatmul.f32.gmra.mxu0 %v280
    %v368 = vpop.f32.mrf.mxu0
    %v369 = vadd.f32 0.0, %v368
    %370 = vdwg.mxu0
    %vm387 = vcmask 1046528
    %v388 = vrot.slane %v307, 1
    %v389 = vrot.slane %v310, 1
    %v390 = vsel %vm387, %v388, %v389
    %v391 = vrot.slane %v348, 1
    %v392 = vrot.slane %v351, 1
    %v393 = vsel %vm387, %v391, %v392
    %v394 = vrot.slane %v313, 1
    %v395 = vsel %vm387, %v389, %v394
    %v396 = vrot.slane %v354, 1
    %v397 = vsel %vm387, %v392, %v396
    %v398 = vrot.slane %v316, 1
    %v399 = vsel %vm387, %v394, %v398
    %v400 = vrot.slane %v357, 1
    %v401 = vsel %vm387, %v396, %v400
    %v402 = vrot.slane %v319, 1
    %v403 = vsel %vm387, %v398, %v402
    %v404 = vrot.slane %v360, 1
    %v405 = vsel %vm387, %v400, %v404
    %v406 = vrot.slane %v322, 1
    %v407 = vsel %vm387, %v402, %v406
    %v408 = vrot.slane %v363, 1
    %v409 = vsel %vm387, %v404, %v408
    %v410 = vrot.slane %v325, 1
    %v411 = vsel %vm387, %v406, %v410
    %v412 = vrot.slane %v366, 1
    %v413 = vsel %vm387, %v408, %v412
    %v414 = vrot.slane %v328, 1
    %v415 = vsel %vm387, %v410, %v414
    %v416 = vrot.slane %v369, 1
    %v417 = vsel %vm387, %v412, %v416
    %vm434 = vcmask 1045504
    %v435 = vrot.slane %v307, 2
    %v436 = vrot.slane %v310, 2
    %v437 = vsel %vm434, %v435, %v436
    %v438 = vrot.slane %v348, 2
    %v439 = vrot.slane %v351, 2
    %v440 = vsel %vm434, %v438, %v439
    %v441 = vrot.slane %v313, 2
    %v442 = vsel %vm434, %v436, %v441
    %v443 = vrot.slane %v354, 2
    %v444 = vsel %vm434, %v439, %v443
    %v445 = vrot.slane %v316, 2
    %v446 = vsel %vm434, %v441, %v445
    %v447 = vrot.slane %v357, 2
    %v448 = vsel %vm434, %v443, %v447
    %v449 = vrot.slane %v319, 2
    %v450 = vsel %vm434, %v445, %v449
    %v451 = vrot.slane %v360, 2
    %v452 = vsel %vm434, %v447, %v451
    %v453 = vrot.slane %v322, 2
    %v454 = vsel %vm434, %v449, %v453
    %v455 = vrot.slane %v363, 2
    %v456 = vsel %vm434, %v451, %v455
    %v457 = vrot.slane %v325, 2
    %v458 = vsel %vm434, %v453, %v457
    %v459 = vrot.slane %v366, 2
    %v460 = vsel %vm434, %v455, %v459
    %v461 = vrot.slane %v328, 2
    %v462 = vsel %vm434, %v457, %v461
    %v463 = vrot.slane %v369, 2
    %v464 = vsel %vm434, %v459, %v463
    %v481 = vld [vmem:[#allocation8] sm:$0xff]
    %v482 = vld [vmem:[#allocation8 + $0x8] sm:$0xff]
    %v483 = vld [vmem:[#allocation8 + $0x10] sm:$0xff]
    %v484 = vld [vmem:[#allocation8 + $0x18] sm:$0xff]
    %v485 = vld [vmem:[#allocation8 + $0x20] sm:$0xff]
    %v486 = vld [vmem:[#allocation8 + $0x28] sm:$0xff]
    %v487 = vld [vmem:[#allocation8 + $0x30] sm:$0xff]
    %v488 = vld [vmem:[#allocation8 + $0x38] sm:$0xff]
    %v489 = vld [vmem:[#allocation8 + $0x40] sm:$0xff]
    %v490 = vld [vmem:[#allocation8 + $0x48] sm:$0xff]
    %v491 = vld [vmem:[#allocation8 + $0x50] sm:$0xff]
    %v492 = vld [vmem:[#allocation8 + $0x58] sm:$0xff]
    %v493 = vld [vmem:[#allocation8 + $0x60] sm:$0xff]
    %v494 = vld [vmem:[#allocation8 + $0x68] sm:$0xff]
    %v495 = vld [vmem:[#allocation8 + $0x70] sm:$0xff]
    %v496 = vld [vmem:[#allocation8 + $0x78] sm:$0xff]
    %v497 = vld [vmem:[#allocation8 + $0x80] sm:$0xff]
    %v498 = vld [vmem:[#allocation8 + $0x88] sm:$0xff]
    %v499 = vld [vmem:[#allocation8 + $0x90] sm:$0xff]
    %v500 = vld [vmem:[#allocation8 + $0x98] sm:$0xff]
    %v501 = vld [vmem:[#allocation8 + $0xa0] sm:$0xff]
    %v502 = vld [vmem:[#allocation8 + $0xa8] sm:$0xff]
    %v503 = vld [vmem:[#allocation8 + $0xb0] sm:$0xff]
    %v504 = vld [vmem:[#allocation8 + $0xb8] sm:$0xff]
    %v505 = vld [vmem:[#allocation8 + $0xc0] sm:$0xff]
    %v506 = vld [vmem:[#allocation8 + $0xc8] sm:$0xff]
    %v507 = vld [vmem:[#allocation8 + $0xd0] sm:$0xff]
    %v508 = vld [vmem:[#allocation8 + $0xd8] sm:$0xff]
    %v509 = vld [vmem:[#allocation8 + $0xe0] sm:$0xff]
    %v510 = vld [vmem:[#allocation8 + $0xe8] sm:$0xff]
    %v511 = vld [vmem:[#allocation8 + $0xf0] sm:$0xff]
    %v512 = vld [vmem:[#allocation8 + $0xf8] sm:$0xff]
    %v513 = vld [vmem:[#allocation8 + $0x100] sm:$0xff]
    %v514 = vld [vmem:[#allocation8 + $0x108] sm:$0xff]
    %v515 = vld [vmem:[#allocation8 + $0x110] sm:$0xff]
    %v516 = vld [vmem:[#allocation8 + $0x118] sm:$0xff]
    %v517 = vld [vmem:[#allocation8 + $0x120] sm:$0xff]
    %v518 = vld [vmem:[#allocation8 + $0x128] sm:$0xff]
    %v519 = vld [vmem:[#allocation8 + $0x130] sm:$0xff]
    %v520 = vld [vmem:[#allocation8 + $0x138] sm:$0xff]
    %v521 = vld [vmem:[#allocation8 + $0x140] sm:$0xff]
    %v522 = vld [vmem:[#allocation8 + $0x148] sm:$0xff]
    %v523 = vld [vmem:[#allocation8 + $0x150] sm:$0xff]
    %v524 = vld [vmem:[#allocation8 + $0x158] sm:$0xff]
    %v525 = vld [vmem:[#allocation8 + $0x160] sm:$0xff]
    %v526 = vld [vmem:[#allocation8 + $0x168] sm:$0xff]
    %v527 = vld [vmem:[#allocation8 + $0x170] sm:$0xff]
    %v528 = vld [vmem:[#allocation8 + $0x178] sm:$0xff]
    %v529 = vld [vmem:[#allocation8 + $0x180] sm:$0xff]
    %v530 = vld [vmem:[#allocation8 + $0x188] sm:$0xff]
    %v531 = vld [vmem:[#allocation8 + $0x190] sm:$0xff]
    %v532 = vld [vmem:[#allocation8 + $0x198] sm:$0xff]
    %v533 = vld [vmem:[#allocation8 + $0x1a0] sm:$0xff]
    %v534 = vld [vmem:[#allocation8 + $0x1a8] sm:$0xff]
    %v535 = vld [vmem:[#allocation8 + $0x1b0] sm:$0xff]
    %v536 = vld [vmem:[#allocation8 + $0x1b8] sm:$0xff]
    %v537 = vld [vmem:[#allocation8 + $0x1c0] sm:$0xff]
    %v538 = vld [vmem:[#allocation8 + $0x1c8] sm:$0xff]
    %v539 = vld [vmem:[#allocation8 + $0x1d0] sm:$0xff]
    %v540 = vld [vmem:[#allocation8 + $0x1d8] sm:$0xff]
    %v541 = vld [vmem:[#allocation8 + $0x1e0] sm:$0xff]
    %v542 = vld [vmem:[#allocation8 + $0x1e8] sm:$0xff]
    %v543 = vld [vmem:[#allocation8 + $0x1f0] sm:$0xff]
    %v544 = vld [vmem:[#allocation8 + $0x1f8] sm:$0xff]
    %v545 = vld [vmem:[#allocation8 + $0x200] sm:$0xff]
    %v546 = vld [vmem:[#allocation8 + $0x208] sm:$0xff]
    %v547 = vld [vmem:[#allocation8 + $0x210] sm:$0xff]
    %v548 = vld [vmem:[#allocation8 + $0x218] sm:$0xff]
    %v549 = vld [vmem:[#allocation8 + $0x220] sm:$0xff]
    %v550 = vld [vmem:[#allocation8 + $0x228] sm:$0xff]
    %v551 = vld [vmem:[#allocation8 + $0x230] sm:$0xff]
    %v552 = vld [vmem:[#allocation8 + $0x238] sm:$0xff]
    %v553 = vld [vmem:[#allocation8 + $0x240] sm:$0xff]
    %v554 = vld [vmem:[#allocation8 + $0x248] sm:$0xff]
    %v555 = vld [vmem:[#allocation8 + $0x250] sm:$0xff]
    %v556 = vld [vmem:[#allocation8 + $0x258] sm:$0xff]
    %v557 = vld [vmem:[#allocation8 + $0x260] sm:$0xff]
    %v558 = vld [vmem:[#allocation8 + $0x268] sm:$0xff]
    %v559 = vld [vmem:[#allocation8 + $0x270] sm:$0xff]
    %v560 = vld [vmem:[#allocation8 + $0x278] sm:$0xff]
    %v561 = vld [vmem:[#allocation8 + $0x280] sm:$0xff]
    %v562 = vld [vmem:[#allocation8 + $0x288] sm:$0xff]
    %v563 = vld [vmem:[#allocation8 + $0x290] sm:$0xff]
    %v564 = vld [vmem:[#allocation8 + $0x298] sm:$0xff]
    %v565 = vld [vmem:[#allocation8 + $0x2a0] sm:$0xff]
    %v566 = vld [vmem:[#allocation8 + $0x2a8] sm:$0xff]
    %v567 = vld [vmem:[#allocation8 + $0x2b0] sm:$0xff]
    %v568 = vld [vmem:[#allocation8 + $0x2b8] sm:$0xff]
    %v569 = vld [vmem:[#allocation8 + $0x2c0] sm:$0xff]
    %v570 = vld [vmem:[#allocation8 + $0x2c8] sm:$0xff]
    %v571 = vld [vmem:[#allocation8 + $0x2d0] sm:$0xff]
    %v572 = vld [vmem:[#allocation8 + $0x2d8] sm:$0xff]
    %v573 = vld [vmem:[#allocation8 + $0x2e0] sm:$0xff]
    %v574 = vld [vmem:[#allocation8 + $0x2e8] sm:$0xff]
    %v575 = vld [vmem:[#allocation8 + $0x2f0] sm:$0xff]
    %v576 = vld [vmem:[#allocation8 + $0x2f8] sm:$0xff]
    %v577 = vld [vmem:[#allocation8 + $0x300] sm:$0xff]
    %v578 = vld [vmem:[#allocation8 + $0x308] sm:$0xff]
    %v579 = vld [vmem:[#allocation8 + $0x310] sm:$0xff]
    %v580 = vld [vmem:[#allocation8 + $0x318] sm:$0xff]
    %v581 = vld [vmem:[#allocation8 + $0x320] sm:$0xff]
    %v582 = vld [vmem:[#allocation8 + $0x328] sm:$0xff]
    %v583 = vld [vmem:[#allocation8 + $0x330] sm:$0xff]
    %v584 = vld [vmem:[#allocation8 + $0x338] sm:$0xff]
    %v585 = vld [vmem:[#allocation8 + $0x340] sm:$0xff]
    %v586 = vld [vmem:[#allocation8 + $0x348] sm:$0xff]
    %v587 = vld [vmem:[#allocation8 + $0x350] sm:$0xff]
    %v588 = vld [vmem:[#allocation8 + $0x358] sm:$0xff]
    %v589 = vld [vmem:[#allocation8 + $0x360] sm:$0xff]
    %v590 = vld [vmem:[#allocation8 + $0x368] sm:$0xff]
    %v591 = vld [vmem:[#allocation8 + $0x370] sm:$0xff]
    %v592 = vld [vmem:[#allocation8 + $0x378] sm:$0xff]
    %v593 = vld [vmem:[#allocation8 + $0x380] sm:$0xff]
    %v594 = vld [vmem:[#allocation8 + $0x388] sm:$0xff]
    %v595 = vld [vmem:[#allocation8 + $0x390] sm:$0xff]
    %v596 = vld [vmem:[#allocation8 + $0x398] sm:$0xff]
    %v597 = vld [vmem:[#allocation8 + $0x3a0] sm:$0xff]
    %v598 = vld [vmem:[#allocation8 + $0x3a8] sm:$0xff]
    %v599 = vld [vmem:[#allocation8 + $0x3b0] sm:$0xff]
    %v600 = vld [vmem:[#allocation8 + $0x3b8] sm:$0xff]
    %v601 = vld [vmem:[#allocation8 + $0x3c0] sm:$0xff]
    %v602 = vld [vmem:[#allocation8 + $0x3c8] sm:$0xff]
    %v603 = vld [vmem:[#allocation8 + $0x3d0] sm:$0xff]
    %v604 = vld [vmem:[#allocation8 + $0x3d8] sm:$0xff]
    %v605 = vld [vmem:[#allocation8 + $0x3e0] sm:$0xff]
    %v606 = vld [vmem:[#allocation8 + $0x3e8] sm:$0xff]
    %v607 = vld [vmem:[#allocation8 + $0x3f0] sm:$0xff]
    %v608 = vld [vmem:[#allocation8 + $0x3f8] sm:$0xff]
    %v609 = vld [vmem:[#allocation8 + $0x400] sm:$0xff]
    %v610 = vld [vmem:[#allocation8 + $0x408] sm:$0xff]
    %v611 = vld [vmem:[#allocation8 + $0x410] sm:$0xff]
    %v612 = vld [vmem:[#allocation8 + $0x418] sm:$0xff]
    %v613 = vld [vmem:[#allocation8 + $0x420] sm:$0xff]
    %v614 = vld [vmem:[#allocation8 + $0x428] sm:$0xff]
    %v615 = vld [vmem:[#allocation8 + $0x430] sm:$0xff]
    %v616 = vld [vmem:[#allocation8 + $0x438] sm:$0xff]
    %v617 = vld [vmem:[#allocation8 + $0x440] sm:$0xff]
    %v618 = vld [vmem:[#allocation8 + $0x448] sm:$0xff]
    %v619 = vld [vmem:[#allocation8 + $0x450] sm:$0xff]
    %v620 = vld [vmem:[#allocation8 + $0x458] sm:$0xff]
    %v621 = vld [vmem:[#allocation8 + $0x460] sm:$0xff]
    %v622 = vld [vmem:[#allocation8 + $0x468] sm:$0xff]
    %v623 = vld [vmem:[#allocation8 + $0x470] sm:$0xff]
    %v624 = vld [vmem:[#allocation8 + $0x478] sm:$0xff]
    %v625 = vld [vmem:[#allocation8 + $0x480] sm:$0xff]
    %v626 = vld [vmem:[#allocation8 + $0x488] sm:$0xff]
    %v627 = vld [vmem:[#allocation8 + $0x490] sm:$0xff]
    %v628 = vld [vmem:[#allocation8 + $0x498] sm:$0xff]
    %v629 = vld [vmem:[#allocation8 + $0x4a0] sm:$0xff]
    %v630 = vld [vmem:[#allocation8 + $0x4a8] sm:$0xff]
    %v631 = vld [vmem:[#allocation8 + $0x4b0] sm:$0xff]
    %v632 = vld [vmem:[#allocation8 + $0x4b8] sm:$0xff]
    %v633 = vld [vmem:[#allocation8 + $0x4c0] sm:$0xff]
    %v634 = vld [vmem:[#allocation8 + $0x4c8] sm:$0xff]
    %v635 = vld [vmem:[#allocation8 + $0x4d0] sm:$0xff]
    %v636 = vld [vmem:[#allocation8 + $0x4d8] sm:$0xff]
    %v637 = vld [vmem:[#allocation8 + $0x4e0] sm:$0xff]
    %v638 = vld [vmem:[#allocation8 + $0x4e8] sm:$0xff]
    %v639 = vld [vmem:[#allocation8 + $0x4f0] sm:$0xff]
    %v640 = vld [vmem:[#allocation8 + $0x4f8] sm:$0xff]
    %v641 = vld [vmem:[#allocation8 + $0x500] sm:$0xff]
    %v642 = vld [vmem:[#allocation8 + $0x508] sm:$0xff]
    %v643 = vld [vmem:[#allocation8 + $0x510] sm:$0xff]
    %v644 = vld [vmem:[#allocation8 + $0x518] sm:$0xff]
    %v645 = vld [vmem:[#allocation8 + $0x520] sm:$0xff]
    %v646 = vld [vmem:[#allocation8 + $0x528] sm:$0xff]
    %v647 = vld [vmem:[#allocation8 + $0x530] sm:$0xff]
    %v648 = vld [vmem:[#allocation8 + $0x538] sm:$0xff]
    %v649 = vld [vmem:[#allocation8 + $0x540] sm:$0xff]
    %v650 = vld [vmem:[#allocation8 + $0x548] sm:$0xff]
    %v651 = vld [vmem:[#allocation8 + $0x550] sm:$0xff]
    %v652 = vld [vmem:[#allocation8 + $0x558] sm:$0xff]
    %v653 = vld [vmem:[#allocation8 + $0x560] sm:$0xff]
    %v654 = vld [vmem:[#allocation8 + $0x568] sm:$0xff]
    %v655 = vld [vmem:[#allocation8 + $0x570] sm:$0xff]
    %v656 = vld [vmem:[#allocation8 + $0x578] sm:$0xff]
    %v657 = vld [vmem:[#allocation8 + $0x580] sm:$0xff]
    %v658 = vld [vmem:[#allocation8 + $0x588] sm:$0xff]
    %v659 = vld [vmem:[#allocation8 + $0x590] sm:$0xff]
    %v660 = vld [vmem:[#allocation8 + $0x598] sm:$0xff]
    %v661 = vld [vmem:[#allocation8 + $0x5a0] sm:$0xff]
    %v662 = vld [vmem:[#allocation8 + $0x5a8] sm:$0xff]
    %v663 = vld [vmem:[#allocation8 + $0x5b0] sm:$0xff]
    %v664 = vld [vmem:[#allocation8 + $0x5b8] sm:$0xff]
    %v665 = vld [vmem:[#allocation8 + $0x5c0] sm:$0xff]
    %v666 = vld [vmem:[#allocation8 + $0x5c8] sm:$0xff]
    %v667 = vld [vmem:[#allocation8 + $0x5d0] sm:$0xff]
    %v668 = vld [vmem:[#allocation8 + $0x5d8] sm:$0xff]
    %v669 = vld [vmem:[#allocation8 + $0x5e0] sm:$0xff]
    %v670 = vld [vmem:[#allocation8 + $0x5e8] sm:$0xff]
    %v671 = vld [vmem:[#allocation8 + $0x5f0] sm:$0xff]
    %v672 = vld [vmem:[#allocation8 + $0x5f8] sm:$0xff]
    %v673 = vperm.slane %v187, 0
    %v674 = vperm.slane %v188, 0
    %675 = vmatpush.msra.mxu0 %v511
    %676 = vmatpush.msra.mxu0 %v509
    %677 = vmatpush.msra.mxu0 %v507
    %678 = vmatpush.msra.mxu0 %v505
    %679 = vmatpush.msra.mxu0 %v503
    %680 = vmatpush.msra.mxu0 %v501
    %681 = vmatpush.msra.mxu0 %v499
    %682 = vmatpush.msra.mxu0 %v497
    %683 = vmatpush.msra.mxu0 %v495
    %684 = vmatpush.msra.mxu0 %v493
    %685 = vmatpush.msra.mxu0 %v491
    %686 = vmatpush.msra.mxu0 %v489
    %687 = vmatpush.msra.mxu0 %v487
    %688 = vmatpush.msra.mxu0 %v485
    %689 = vmatpush.msra.mxu0 %v483
    %690 = vmatpush.msra.mxu0 %v481
    %691 = vmatmul.f32.gmra.mxu0 %v307
    %v692 = vpop.f32.mrf.mxu0
    %v693 = vadd.f32 %v673, %v692
    %694 = vmatmul.f32.gmra.mxu0 %v310
    %v695 = vpop.f32.mrf.mxu0
    %v696 = vadd.f32 %v673, %v695
    %697 = vmatmul.f32.gmra.mxu0 %v313
    %v698 = vpop.f32.mrf.mxu0
    %v699 = vadd.f32 %v673, %v698
    %700 = vmatmul.f32.gmra.mxu0 %v316
    %v701 = vpop.f32.mrf.mxu0
    %v702 = vadd.f32 %v673, %v701
    %703 = vmatmul.f32.gmra.mxu0 %v319
    %v704 = vpop.f32.mrf.mxu0
    %v705 = vadd.f32 %v673, %v704
    %706 = vmatmul.f32.gmra.mxu0 %v322
    %v707 = vpop.f32.mrf.mxu0
    %v708 = vadd.f32 %v673, %v707
    %709 = vmatmul.f32.gmra.mxu0 %v325
    %v710 = vpop.f32.mrf.mxu0
    %v711 = vadd.f32 %v673, %v710
    %712 = vmatmul.f32.gmra.mxu0 %v328
    %v713 = vpop.f32.mrf.mxu0
    %v714 = vadd.f32 %v673, %v713
    %715 = vdwg.mxu0
    %716 = vmatpush.msra.mxu0 %v543
    %717 = vmatpush.msra.mxu0 %v541
    %718 = vmatpush.msra.mxu0 %v539
    %719 = vmatpush.msra.mxu0 %v537
    %720 = vmatpush.msra.mxu0 %v535
    %721 = vmatpush.msra.mxu0 %v533
    %722 = vmatpush.msra.mxu0 %v531
    %723 = vmatpush.msra.mxu0 %v529
    %724 = vmatpush.msra.mxu0 %v527
    %725 = vmatpush.msra.mxu0 %v525
    %726 = vmatpush.msra.mxu0 %v523
    %727 = vmatpush.msra.mxu0 %v521
    %728 = vmatpush.msra.mxu0 %v519
    %729 = vmatpush.msra.mxu0 %v517
    %730 = vmatpush.msra.mxu0 %v515
    %731 = vmatpush.msra.mxu0 %v513
    %732 = vmatmul.f32.gmra.mxu0 %v348
    %v733 = vpop.f32.mrf.mxu0
    %v734 = vadd.f32 %v693, %v733
    %735 = vmatmul.f32.gmra.mxu0 %v351
    %v736 = vpop.f32.mrf.mxu0
    %v737 = vadd.f32 %v696, %v736
    %738 = vmatmul.f32.gmra.mxu0 %v354
    %v739 = vpop.f32.mrf.mxu0
    %v740 = vadd.f32 %v699, %v739
    %741 = vmatmul.f32.gmra.mxu0 %v357
    %v742 = vpop.f32.mrf.mxu0
    %v743 = vadd.f32 %v702, %v742
    %744 = vmatmul.f32.gmra.mxu0 %v360
    %v745 = vpop.f32.mrf.mxu0
    %v746 = vadd.f32 %v705, %v745
    %747 = vmatmul.f32.gmra.mxu0 %v363
    %v748 = vpop.f32.mrf.mxu0
    %v749 = vadd.f32 %v708, %v748
    %750 = vmatmul.f32.gmra.mxu0 %v366
    %v751 = vpop.f32.mrf.mxu0
    %v752 = vadd.f32 %v711, %v751
    %753 = vmatmul.f32.gmra.mxu0 %v369
    %v754 = vpop.f32.mrf.mxu0
    %v755 = vadd.f32 %v714, %v754
    %756 = vdwg.mxu0
    %757 = vmatpush.msra.mxu0 %v575
    %758 = vmatpush.msra.mxu0 %v573
    %759 = vmatpush.msra.mxu0 %v571
    %760 = vmatpush.msra.mxu0 %v569
    %761 = vmatpush.msra.mxu0 %v567
    %762 = vmatpush.msra.mxu0 %v565
    %763 = vmatpush.msra.mxu0 %v563
    %764 = vmatpush.msra.mxu0 %v561
    %765 = vmatpush.msra.mxu0 %v559
    %766 = vmatpush.msra.mxu0 %v557
    %767 = vmatpush.msra.mxu0 %v555
    %768 = vmatpush.msra.mxu0 %v553
    %769 = vmatpush.msra.mxu0 %v551
    %770 = vmatpush.msra.mxu0 %v549
    %771 = vmatpush.msra.mxu0 %v547
    %772 = vmatpush.msra.mxu0 %v545
    %773 = vmatmul.f32.gmra.mxu0 %v390
    %v774 = vpop.f32.mrf.mxu0
    %v775 = vadd.f32 %v734, %v774
    %776 = vmatmul.f32.gmra.mxu0 %v395
    %v777 = vpop.f32.mrf.mxu0
    %v778 = vadd.f32 %v737, %v777
    %779 = vmatmul.f32.gmra.mxu0 %v399
    %v780 = vpop.f32.mrf.mxu0
    %v781 = vadd.f32 %v740, %v780
    %782 = vmatmul.f32.gmra.mxu0 %v403
    %v783 = vpop.f32.mrf.mxu0
    %v784 = vadd.f32 %v743, %v783
    %785 = vmatmul.f32.gmra.mxu0 %v407
    %v786 = vpop.f32.mrf.mxu0
    %v787 = vadd.f32 %v746, %v786
    %788 = vmatmul.f32.gmra.mxu0 %v411
    %v789 = vpop.f32.mrf.mxu0
    %v790 = vadd.f32 %v749, %v789
    %791 = vmatmul.f32.gmra.mxu0 %v415
    %v792 = vpop.f32.mrf.mxu0
    %v793 = vadd.f32 %v752, %v792
    %794 = vmatmul.f32.gmra.mxu0 %v414
    %v795 = vpop.f32.mrf.mxu0
    %v796 = vadd.f32 %v755, %v795
    %797 = vdwg.mxu0
    %798 = vmatpush.msra.mxu0 %v607
    %799 = vmatpush.msra.mxu0 %v605
    %800 = vmatpush.msra.mxu0 %v603
    %801 = vmatpush.msra.mxu0 %v601
    %802 = vmatpush.msra.mxu0 %v599
    %803 = vmatpush.msra.mxu0 %v597
    %804 = vmatpush.msra.mxu0 %v595
    %805 = vmatpush.msra.mxu0 %v593
    %806 = vmatpush.msra.mxu0 %v591
    %807 = vmatpush.msra.mxu0 %v589
    %808 = vmatpush.msra.mxu0 %v587
    %809 = vmatpush.msra.mxu0 %v585
    %810 = vmatpush.msra.mxu0 %v583
    %811 = vmatpush.msra.mxu0 %v581
    %812 = vmatpush.msra.mxu0 %v579
    %813 = vmatpush.msra.mxu0 %v577
    %814 = vmatmul.f32.gmra.mxu0 %v393
    %v815 = vpop.f32.mrf.mxu0
    %v816 = vadd.f32 %v775, %v815
    %817 = vmatmul.f32.gmra.mxu0 %v397
    %v818 = vpop.f32.mrf.mxu0
    %v819 = vadd.f32 %v778, %v818
    %820 = vmatmul.f32.gmra.mxu0 %v401
    %v821 = vpop.f32.mrf.mxu0
    %v822 = vadd.f32 %v781, %v821
    %823 = vmatmul.f32.gmra.mxu0 %v405
    %v824 = vpop.f32.mrf.mxu0
    %v825 = vadd.f32 %v784, %v824
    %826 = vmatmul.f32.gmra.mxu0 %v409
    %v827 = vpop.f32.mrf.mxu0
    %v828 = vadd.f32 %v787, %v827
    %829 = vmatmul.f32.gmra.mxu0 %v413
    %v830 = vpop.f32.mrf.mxu0
    %v831 = vadd.f32 %v790, %v830
    %832 = vmatmul.f32.gmra.mxu0 %v417
    %v833 = vpop.f32.mrf.mxu0
    %v834 = vadd.f32 %v793, %v833
    %835 = vmatmul.f32.gmra.mxu0 %v416
    %v836 = vpop.f32.mrf.mxu0
    %v837 = vadd.f32 %v796, %v836
    %838 = vdwg.mxu0
    %839 = vmatpush.msra.mxu0 %v639
    %840 = vmatpush.msra.mxu0 %v637
    %841 = vmatpush.msra.mxu0 %v635
    %842 = vmatpush.msra.mxu0 %v633
    %843 = vmatpush.msra.mxu0 %v631
    %844 = vmatpush.msra.mxu0 %v629
    %845 = vmatpush.msra.mxu0 %v627
    %846 = vmatpush.msra.mxu0 %v625
    %847 = vmatpush.msra.mxu0 %v623
    %848 = vmatpush.msra.mxu0 %v621
    %849 = vmatpush.msra.mxu0 %v619
    %850 = vmatpush.msra.mxu0 %v617
    %851 = vmatpush.msra.mxu0 %v615
    %852 = vmatpush.msra.mxu0 %v613
    %853 = vmatpush.msra.mxu0 %v611
    %854 = vmatpush.msra.mxu0 %v609
    %855 = vmatmul.f32.gmra.mxu0 %v437
    %v856 = vpop.f32.mrf.mxu0
    %v857 = vadd.f32 %v816, %v856
    %858 = vmatmul.f32.gmra.mxu0 %v442
    %v859 = vpop.f32.mrf.mxu0
    %v860 = vadd.f32 %v819, %v859
    %861 = vmatmul.f32.gmra.mxu0 %v446
    %v862 = vpop.f32.mrf.mxu0
    %v863 = vadd.f32 %v822, %v862
    %864 = vmatmul.f32.gmra.mxu0 %v450
    %v865 = vpop.f32.mrf.mxu0
    %v866 = vadd.f32 %v825, %v865
    %867 = vmatmul.f32.gmra.mxu0 %v454
    %v868 = vpop.f32.mrf.mxu0
    %v869 = vadd.f32 %v828, %v868
    %870 = vmatmul.f32.gmra.mxu0 %v458
    %v871 = vpop.f32.mrf.mxu0
    %v872 = vadd.f32 %v831, %v871
    %873 = vmatmul.f32.gmra.mxu0 %v462
    %v874 = vpop.f32.mrf.mxu0
    %v875 = vadd.f32 %v834, %v874
    %876 = vmatmul.f32.gmra.mxu0 %v461
    %v877 = vpop.f32.mrf.mxu0
    %v878 = vadd.f32 %v837, %v877
    %879 = vdwg.mxu0
    %880 = vmatpush.msra.mxu0 %v671
    %881 = vmatpush.msra.mxu0 %v669
    %882 = vmatpush.msra.mxu0 %v667
    %883 = vmatpush.msra.mxu0 %v665
    %884 = vmatpush.msra.mxu0 %v663
    %885 = vmatpush.msra.mxu0 %v661
    %886 = vmatpush.msra.mxu0 %v659
    %887 = vmatpush.msra.mxu0 %v657
    %888 = vmatpush.msra.mxu0 %v655
    %889 = vmatpush.msra.mxu0 %v653
    %890 = vmatpush.msra.mxu0 %v651
    %891 = vmatpush.msra.mxu0 %v649
    %892 = vmatpush.msra.mxu0 %v647
    %893 = vmatpush.msra.mxu0 %v645
    %894 = vmatpush.msra.mxu0 %v643
    %895 = vmatpush.msra.mxu0 %v641
    %896 = vmatmul.f32.gmra.mxu0 %v440
    %v897 = vpop.f32.mrf.mxu0
    %v898 = vadd.f32 %v857, %v897
    %899 = vmatmul.f32.gmra.mxu0 %v444
    %v900 = vpop.f32.mrf.mxu0
    %v901 = vadd.f32 %v860, %v900
    %902 = vmatmul.f32.gmra.mxu0 %v448
    %v903 = vpop.f32.mrf.mxu0
    %v904 = vadd.f32 %v863, %v903
    %905 = vmatmul.f32.gmra.mxu0 %v452
    %v906 = vpop.f32.mrf.mxu0
    %v907 = vadd.f32 %v866, %v906
    %908 = vmatmul.f32.gmra.mxu0 %v456
    %v909 = vpop.f32.mrf.mxu0
    %v910 = vadd.f32 %v869, %v909
    %911 = vmatmul.f32.gmra.mxu0 %v460
    %v912 = vpop.f32.mrf.mxu0
    %v913 = vadd.f32 %v872, %v912
    %914 = vmatmul.f32.gmra.mxu0 %v464
    %v915 = vpop.f32.mrf.mxu0
    %v916 = vadd.f32 %v875, %v915
    %917 = vmatmul.f32.gmra.mxu0 %v463
    %v918 = vpop.f32.mrf.mxu0
    %v919 = vadd.f32 %v878, %v918
    %920 = vdwg.mxu0
    %921 = vmatpush.msra.mxu0 %v512
    %922 = vmatpush.msra.mxu0 %v510
    %923 = vmatpush.msra.mxu0 %v508
    %924 = vmatpush.msra.mxu0 %v506
    %925 = vmatpush.msra.mxu0 %v504
    %926 = vmatpush.msra.mxu0 %v502
    %927 = vmatpush.msra.mxu0 %v500
    %928 = vmatpush.msra.mxu0 %v498
    %929 = vmatpush.msra.mxu0 %v496
    %930 = vmatpush.msra.mxu0 %v494
    %931 = vmatpush.msra.mxu0 %v492
    %932 = vmatpush.msra.mxu0 %v490
    %933 = vmatpush.msra.mxu0 %v488
    %934 = vmatpush.msra.mxu0 %v486
    %935 = vmatpush.msra.mxu0 %v484
    %936 = vmatpush.msra.mxu0 %v482
    %937 = vmatmul.f32.gmra.mxu0 %v307
    %v938 = vpop.f32.mrf.mxu0
    %v939 = vadd.f32 %v674, %v938
    %940 = vmatmul.f32.gmra.mxu0 %v310
    %v941 = vpop.f32.mrf.mxu0
    %v942 = vadd.f32 %v674, %v941
    %943 = vmatmul.f32.gmra.mxu0 %v313
    %v944 = vpop.f32.mrf.mxu0
    %v945 = vadd.f32 %v674, %v944
    %946 = vmatmul.f32.gmra.mxu0 %v316
    %v947 = vpop.f32.mrf.mxu0
    %v948 = vadd.f32 %v674, %v947
    %949 = vmatmul.f32.gmra.mxu0 %v319
    %v950 = vpop.f32.mrf.mxu0
    %v951 = vadd.f32 %v674, %v950
    %952 = vmatmul.f32.gmra.mxu0 %v322
    %v953 = vpop.f32.mrf.mxu0
    %v954 = vadd.f32 %v674, %v953
    %955 = vmatmul.f32.gmra.mxu0 %v325
    %v956 = vpop.f32.mrf.mxu0
    %v957 = vadd.f32 %v674, %v956
    %958 = vmatmul.f32.gmra.mxu0 %v328
    %v959 = vpop.f32.mrf.mxu0
    %v960 = vadd.f32 %v674, %v959
    %961 = vdwg.mxu0
    %962 = vmatpush.msra.mxu0 %v544
    %963 = vmatpush.msra.mxu0 %v542
    %964 = vmatpush.msra.mxu0 %v540
    %965 = vmatpush.msra.mxu0 %v538
    %966 = vmatpush.msra.mxu0 %v536
    %967 = vmatpush.msra.mxu0 %v534
    %968 = vmatpush.msra.mxu0 %v532
    %969 = vmatpush.msra.mxu0 %v530
    %970 = vmatpush.msra.mxu0 %v528
    %971 = vmatpush.msra.mxu0 %v526
    %972 = vmatpush.msra.mxu0 %v524
    %973 = vmatpush.msra.mxu0 %v522
    %974 = vmatpush.msra.mxu0 %v520
    %975 = vmatpush.msra.mxu0 %v518
    %976 = vmatpush.msra.mxu0 %v516
    %977 = vmatpush.msra.mxu0 %v514
    %978 = vmatmul.f32.gmra.mxu0 %v348
    %v979 = vpop.f32.mrf.mxu0
    %v980 = vadd.f32 %v939, %v979
    %981 = vmatmul.f32.gmra.mxu0 %v351
    %v982 = vpop.f32.mrf.mxu0
    %v983 = vadd.f32 %v942, %v982
    %984 = vmatmul.f32.gmra.mxu0 %v354
    %v985 = vpop.f32.mrf.mxu0
    %v986 = vadd.f32 %v945, %v985
    %987 = vmatmul.f32.gmra.mxu0 %v357
    %v988 = vpop.f32.mrf.mxu0
    %v989 = vadd.f32 %v948, %v988
    %990 = vmatmul.f32.gmra.mxu0 %v360
    %v991 = vpop.f32.mrf.mxu0
    %v992 = vadd.f32 %v951, %v991
    %993 = vmatmul.f32.gmra.mxu0 %v363
    %v994 = vpop.f32.mrf.mxu0
    %v995 = vadd.f32 %v954, %v994
    %996 = vmatmul.f32.gmra.mxu0 %v366
    %v997 = vpop.f32.mrf.mxu0
    %v998 = vadd.f32 %v957, %v997
    %999 = vmatmul.f32.gmra.mxu0 %v369
    %v1000 = vpop.f32.mrf.mxu0
    %v1001 = vadd.f32 %v960, %v1000
    %1002 = vdwg.mxu0
    %1003 = vmatpush.msra.mxu0 %v576
    %1004 = vmatpush.msra.mxu0 %v574
    %1005 = vmatpush.msra.mxu0 %v572
    %1006 = vmatpush.msra.mxu0 %v570
    %1007 = vmatpush.msra.mxu0 %v568
    %1008 = vmatpush.msra.mxu0 %v566
    %1009 = vmatpush.msra.mxu0 %v564
    %1010 = vmatpush.msra.mxu0 %v562
    %1011 = vmatpush.msra.mxu0 %v560
    %1012 = vmatpush.msra.mxu0 %v558
    %1013 = vmatpush.msra.mxu0 %v556
    %1014 = vmatpush.msra.mxu0 %v554
    %1015 = vmatpush.msra.mxu0 %v552
    %1016 = vmatpush.msra.mxu0 %v550
    %1017 = vmatpush.msra.mxu0 %v548
    %1018 = vmatpush.msra.mxu0 %v546
    %1019 = vmatmul.f32.gmra.mxu0 %v390
    %v1020 = vpop.f32.mrf.mxu0
    %v1021 = vadd.f32 %v980, %v1020
    %1022 = vmatmul.f32.gmra.mxu0 %v395
    %v1023 = vpop.f32.mrf.mxu0
    %v1024 = vadd.f32 %v983, %v1023
    %1025 = vmatmul.f32.gmra.mxu0 %v399
    %v1026 = vpop.f32.mrf.mxu0
    %v1027 = vadd.f32 %v986, %v1026
    %1028 = vmatmul.f32.gmra.mxu0 %v403
    %v1029 = vpop.f32.mrf.mxu0
    %v1030 = vadd.f32 %v989, %v1029
    %1031 = vmatmul.f32.gmra.mxu0 %v407
    %v1032 = vpop.f32.mrf.mxu0
    %v1033 = vadd.f32 %v992, %v1032
    %1034 = vmatmul.f32.gmra.mxu0 %v411
    %v1035 = vpop.f32.mrf.mxu0
    %v1036 = vadd.f32 %v995, %v1035
    %1037 = vmatmul.f32.gmra.mxu0 %v415
    %v1038 = vpop.f32.mrf.mxu0
    %v1039 = vadd.f32 %v998, %v1038
    %1040 = vmatmul.f32.gmra.mxu0 %v414
    %v1041 = vpop.f32.mrf.mxu0
    %v1042 = vadd.f32 %v1001, %v1041
    %1043 = vdwg.mxu0
    %1044 = vmatpush.msra.mxu0 %v608
    %1045 = vmatpush.msra.mxu0 %v606
    %1046 = vmatpush.msra.mxu0 %v604
    %1047 = vmatpush.msra.mxu0 %v602
    %1048 = vmatpush.msra.mxu0 %v600
    %1049 = vmatpush.msra.mxu0 %v598
    %1050 = vmatpush.msra.mxu0 %v596
    %1051 = vmatpush.msra.mxu0 %v594
    %1052 = vmatpush.msra.mxu0 %v592
    %1053 = vmatpush.msra.mxu0 %v590
    %1054 = vmatpush.msra.mxu0 %v588
    %1055 = vmatpush.msra.mxu0 %v586
    %1056 = vmatpush.msra.mxu0 %v584
    %1057 = vmatpush.msra.mxu0 %v582
    %1058 = vmatpush.msra.mxu0 %v580
    %1059 = vmatpush.msra.mxu0 %v578
    %1060 = vmatmul.f32.gmra.mxu0 %v393
    %v1061 = vpop.f32.mrf.mxu0
    %v1062 = vadd.f32 %v1021, %v1061
    %1063 = vmatmul.f32.gmra.mxu0 %v397
    %v1064 = vpop.f32.mrf.mxu0
    %v1065 = vadd.f32 %v1024, %v1064
    %1066 = vmatmul.f32.gmra.mxu0 %v401
    %v1067 = vpop.f32.mrf.mxu0
    %v1068 = vadd.f32 %v1027, %v1067
    %1069 = vmatmul.f32.gmra.mxu0 %v405
    %v1070 = vpop.f32.mrf.mxu0
    %v1071 = vadd.f32 %v1030, %v1070
    %1072 = vmatmul.f32.gmra.mxu0 %v409
    %v1073 = vpop.f32.mrf.mxu0
    %v1074 = vadd.f32 %v1033, %v1073
    %1075 = vmatmul.f32.gmra.mxu0 %v413
    %v1076 = vpop.f32.mrf.mxu0
    %v1077 = vadd.f32 %v1036, %v1076
    %1078 = vmatmul.f32.gmra.mxu0 %v417
    %v1079 = vpop.f32.mrf.mxu0
    %v1080 = vadd.f32 %v1039, %v1079
    %1081 = vmatmul.f32.gmra.mxu0 %v416
    %v1082 = vpop.f32.mrf.mxu0
    %v1083 = vadd.f32 %v1042, %v1082
    %1084 = vdwg.mxu0
    %1085 = vmatpush.msra.mxu0 %v640
    %1086 = vmatpush.msra.mxu0 %v638
    %1087 = vmatpush.msra.mxu0 %v636
    %1088 = vmatpush.msra.mxu0 %v634
    %1089 = vmatpush.msra.mxu0 %v632
    %1090 = vmatpush.msra.mxu0 %v630
    %1091 = vmatpush.msra.mxu0 %v628
    %1092 = vmatpush.msra.mxu0 %v626
    %1093 = vmatpush.msra.mxu0 %v624
    %1094 = vmatpush.msra.mxu0 %v622
    %1095 = vmatpush.msra.mxu0 %v620
    %1096 = vmatpush.msra.mxu0 %v618
    %1097 = vmatpush.msra.mxu0 %v616
    %1098 = vmatpush.msra.mxu0 %v614
    %1099 = vmatpush.msra.mxu0 %v612
    %1100 = vmatpush.msra.mxu0 %v610
    %1101 = vmatmul.f32.gmra.mxu0 %v437
    %v1102 = vpop.f32.mrf.mxu0
    %v1103 = vadd.f32 %v1062, %v1102
    %1104 = vmatmul.f32.gmra.mxu0 %v442
    %v1105 = vpop.f32.mrf.mxu0
    %v1106 = vadd.f32 %v1065, %v1105
    %1107 = vmatmul.f32.gmra.mxu0 %v446
    %v1108 = vpop.f32.mrf.mxu0
    %v1109 = vadd.f32 %v1068, %v1108
    %1110 = vmatmul.f32.gmra.mxu0 %v450
    %v1111 = vpop.f32.mrf.mxu0
    %v1112 = vadd.f32 %v1071, %v1111
    %1113 = vmatmul.f32.gmra.mxu0 %v454
    %v1114 = vpop.f32.mrf.mxu0
    %v1115 = vadd.f32 %v1074, %v1114
    %1116 = vmatmul.f32.gmra.mxu0 %v458
    %v1117 = vpop.f32.mrf.mxu0
    %v1118 = vadd.f32 %v1077, %v1117
    %1119 = vmatmul.f32.gmra.mxu0 %v462
    %v1120 = vpop.f32.mrf.mxu0
    %v1121 = vadd.f32 %v1080, %v1120
    %1122 = vmatmul.f32.gmra.mxu0 %v461
    %v1123 = vpop.f32.mrf.mxu0
    %v1124 = vadd.f32 %v1083, %v1123
    %1125 = vdwg.mxu0
    %1126 = vmatpush.msra.mxu0 %v672
    %1127 = vmatpush.msra.mxu0 %v670
    %1128 = vmatpush.msra.mxu0 %v668
    %1129 = vmatpush.msra.mxu0 %v666
    %1130 = vmatpush.msra.mxu0 %v664
    %1131 = vmatpush.msra.mxu0 %v662
    %1132 = vmatpush.msra.mxu0 %v660
    %1133 = vmatpush.msra.mxu0 %v658
    %1134 = vmatpush.msra.mxu0 %v656
    %1135 = vmatpush.msra.mxu0 %v654
    %1136 = vmatpush.msra.mxu0 %v652
    %1137 = vmatpush.msra.mxu0 %v650
    %1138 = vmatpush.msra.mxu0 %v648
    %1139 = vmatpush.msra.mxu0 %v646
    %1140 = vmatpush.msra.mxu0 %v644
    %1141 = vmatpush.msra.mxu0 %v642
    %1142 = vmatmul.f32.gmra.mxu0 %v440
    %v1143 = vpop.f32.mrf.mxu0
    %v1144 = vadd.f32 %v1103, %v1143
    %1145 = vmatmul.f32.gmra.mxu0 %v444
    %v1146 = vpop.f32.mrf.mxu0
    %v1147 = vadd.f32 %v1106, %v1146
    %1148 = vmatmul.f32.gmra.mxu0 %v448
    %v1149 = vpop.f32.mrf.mxu0
    %v1150 = vadd.f32 %v1109, %v1149
    %1151 = vmatmul.f32.gmra.mxu0 %v452
    %v1152 = vpop.f32.mrf.mxu0
    %v1153 = vadd.f32 %v1112, %v1152
    %1154 = vmatmul.f32.gmra.mxu0 %v456
    %v1155 = vpop.f32.mrf.mxu0
    %v1156 = vadd.f32 %v1115, %v1155
    %1157 = vmatmul.f32.gmra.mxu0 %v460
    %v1158 = vpop.f32.mrf.mxu0
    %v1159 = vadd.f32 %v1118, %v1158
    %1160 = vmatmul.f32.gmra.mxu0 %v464
    %v1161 = vpop.f32.mrf.mxu0
    %v1162 = vadd.f32 %v1121, %v1161
    %1163 = vmatmul.f32.gmra.mxu0 %v463
    %v1164 = vpop.f32.mrf.mxu0
    %v1165 = vadd.f32 %v1124, %v1164
    %1166 = vdwg.mxu0
    %v1167 = vmax.f32 %v898, 0.0
    %v1168 = vmax.f32 %v1144, 0.0
    %v1169 = vmax.f32 %v901, 0.0
    %v1170 = vmax.f32 %v1147, 0.0
    %v1171 = vmax.f32 %v904, 0.0
    %v1172 = vmax.f32 %v1150, 0.0
    %v1173 = vmax.f32 %v907, 0.0
    %v1174 = vmax.f32 %v1153, 0.0
    %v1175 = vmax.f32 %v910, 0.0
    %v1176 = vmax.f32 %v1156, 0.0
    %v1177 = vmax.f32 %v913, 0.0
    %v1178 = vmax.f32 %v1159, 0.0
    %v1179 = vmax.f32 %v916, 0.0
    %v1180 = vmax.f32 %v1162, 0.0
    %v1181 = vmax.f32 %v919, 0.0
    %v1182 = vmax.f32 %v1165, 0.0
    %vm1183 = vcmp.ne.f32.partialorder %v898, %v898
    %vm1184 = vcmp.ne.f32.partialorder %v1144, %v1144
    %vm1185 = vcmp.ne.f32.partialorder %v901, %v901
    %vm1186 = vcmp.ne.f32.partialorder %v1147, %v1147
    %vm1187 = vcmp.ne.f32.partialorder %v904, %v904
    %vm1188 = vcmp.ne.f32.partialorder %v1150, %v1150
    %vm1189 = vcmp.ne.f32.partialorder %v907, %v907
    %vm1190 = vcmp.ne.f32.partialorder %v1153, %v1153
    %vm1191 = vcmp.ne.f32.partialorder %v910, %v910
    %vm1192 = vcmp.ne.f32.partialorder %v1156, %v1156
    %vm1193 = vcmp.ne.f32.partialorder %v913, %v913
    %vm1194 = vcmp.ne.f32.partialorder %v1159, %v1159
    %vm1195 = vcmp.ne.f32.partialorder %v916, %v916
    %vm1196 = vcmp.ne.f32.partialorder %v1162, %v1162
    %vm1197 = vcmp.ne.f32.partialorder %v919, %v919
    %vm1198 = vcmp.ne.f32.partialorder %v1165, %v1165
    %v1199 = vadd.f32 %v898, 0.0
    %v1200 = vadd.f32 %v1144, 0.0
    %v1201 = vadd.f32 %v901, 0.0
    %v1202 = vadd.f32 %v1147, 0.0
    %v1203 = vadd.f32 %v904, 0.0
    %v1204 = vadd.f32 %v1150, 0.0
    %v1205 = vadd.f32 %v907, 0.0
    %v1206 = vadd.f32 %v1153, 0.0
    %v1207 = vadd.f32 %v910, 0.0
    %v1208 = vadd.f32 %v1156, 0.0
    %v1209 = vadd.f32 %v913, 0.0
    %v1210 = vadd.f32 %v1159, 0.0
    %v1211 = vadd.f32 %v916, 0.0
    %v1212 = vadd.f32 %v1162, 0.0
    %v1213 = vadd.f32 %v919, 0.0
    %v1214 = vadd.f32 %v1165, 0.0
    %v1215 = vand.u32 2147483647, %v898
    %v1216 = vand.u32 2147483647, %v1144
    %v1217 = vand.u32 2147483647, %v901
    %v1218 = vand.u32 2147483647, %v1147
    %v1219 = vand.u32 2147483647, %v904
    %v1220 = vand.u32 2147483647, %v1150
    %v1221 = vand.u32 2147483647, %v907
    %v1222 = vand.u32 2147483647, %v1153
    %v1223 = vand.u32 2147483647, %v910
    %v1224 = vand.u32 2147483647, %v1156
    %v1225 = vand.u32 2147483647, %v913
    %v1226 = vand.u32 2147483647, %v1159
    %v1227 = vand.u32 2147483647, %v916
    %v1228 = vand.u32 2147483647, %v1162
    %v1229 = vand.u32 2147483647, %v919
    %v1230 = vand.u32 2147483647, %v1165
    %v1231 = vsub.f32 0.0, %v1215
    %v1232 = vsub.f32 0.0, %v1216
    %v1233 = vsub.f32 0.0, %v1217
    %v1234 = vsub.f32 0.0, %v1218
    %v1235 = vsub.f32 0.0, %v1219
    %v1236 = vsub.f32 0.0, %v1220
    %v1237 = vsub.f32 0.0, %v1221
    %v1238 = vsub.f32 0.0, %v1222
    %v1239 = vsub.f32 0.0, %v1223
    %v1240 = vsub.f32 0.0, %v1224
    %v1241 = vsub.f32 0.0, %v1225
    %v1242 = vsub.f32 0.0, %v1226
    %v1243 = vsub.f32 0.0, %v1227
    %v1244 = vsub.f32 0.0, %v1228
    %v1245 = vsub.f32 0.0, %v1229
    %v1246 = vsub.f32 0.0, %v1230
    %v1247 = vmul.f32 %v1231, 1.442695
    %v1248 = vpow.pop %v1247
    %v1249 = vmul.f32 %v1232, 1.442695
    %v1250 = vpow.pop %v1249
    %v1251 = vmul.f32 %v1233, 1.442695
    %v1252 = vpow.pop %v1251
    %v1253 = vmul.f32 %v1234, 1.442695
    %v1254 = vpow.pop %v1253
    %v1255 = vmul.f32 %v1235, 1.442695
    %v1256 = vpow.pop %v1255
    %v1257 = vmul.f32 %v1236, 1.442695
    %v1258 = vpow.pop %v1257
    %v1259 = vmul.f32 %v1237, 1.442695
    %v1260 = vpow.pop %v1259
    %v1261 = vmul.f32 %v1238, 1.442695
    %v1262 = vpow.pop %v1261
    %v1263 = vmul.f32 %v1239, 1.442695
    %v1264 = vpow.pop %v1263
    %v1265 = vmul.f32 %v1240, 1.442695
    %v1266 = vpow.pop %v1265
    %v1267 = vmul.f32 %v1241, 1.442695
    %v1268 = vpow.pop %v1267
    %v1269 = vmul.f32 %v1242, 1.442695
    %v1270 = vpow.pop %v1269
    %v1271 = vmul.f32 %v1243, 1.442695
    %v1272 = vpow.pop %v1271
    %v1273 = vmul.f32 %v1244, 1.442695
    %v1274 = vpow.pop %v1273
    %v1275 = vmul.f32 %v1245, 1.442695
    %v1276 = vpow.pop %v1275
    %v1277 = vmul.f32 %v1246, 1.442695
    %v1278 = vpow.pop %v1277
    %v1279 = vadd.f32 %v1248, 1.0
    %v1280 = vlog2.pop %v1279
    %v1281 = vmul.f32 %v1280, 0.6931472
    %v1282 = vmul.f32 -0.5, %v1248
    %v1283 = vadd.f32 %v1282, 1.0
    %v1284 = vmul.f32 %v1283, %v1248
    %v1285 = vand.u32 2147483647, %v1248
    %vm1286 = vcmp.lt.f32.partialorder %v1285, 0.0004427343
    %v1287 = vsel %vm1286, %v1284, %v1281
    %v1288 = vadd.f32 %v1250, 1.0
    %v1289 = vlog2.pop %v1288
    %v1290 = vmul.f32 %v1289, 0.6931472
    %v1291 = vmul.f32 -0.5, %v1250
    %v1292 = vadd.f32 %v1291, 1.0
    %v1293 = vmul.f32 %v1292, %v1250
    %v1294 = vand.u32 2147483647, %v1250
    %vm1295 = vcmp.lt.f32.partialorder %v1294, 0.0004427343
    %v1296 = vsel %vm1295, %v1293, %v1290
    %v1297 = vadd.f32 %v1252, 1.0
    %v1298 = vlog2.pop %v1297
    %v1299 = vmul.f32 %v1298, 0.6931472
    %v1300 = vmul.f32 -0.5, %v1252
    %v1301 = vadd.f32 %v1300, 1.0
    %v1302 = vmul.f32 %v1301, %v1252
    %v1303 = vand.u32 2147483647, %v1252
    %vm1304 = vcmp.lt.f32.partialorder %v1303, 0.0004427343
    %v1305 = vsel %vm1304, %v1302, %v1299
    %v1306 = vadd.f32 %v1254, 1.0
    %v1307 = vlog2.pop %v1306
    %v1308 = vmul.f32 %v1307, 0.6931472
    %v1309 = vmul.f32 -0.5, %v1254
    %v1310 = vadd.f32 %v1309, 1.0
    %v1311 = vmul.f32 %v1310, %v1254
    %v1312 = vand.u32 2147483647, %v1254
    %vm1313 = vcmp.lt.f32.partialorder %v1312, 0.0004427343
    %v1314 = vsel %vm1313, %v1311, %v1308
    %v1315 = vadd.f32 %v1256, 1.0
    %v1316 = vlog2.pop %v1315
    %v1317 = vmul.f32 %v1316, 0.6931472
    %v1318 = vmul.f32 -0.5, %v1256
    %v1319 = vadd.f32 %v1318, 1.0
    %v1320 = vmul.f32 %v1319, %v1256
    %v1321 = vand.u32 2147483647, %v1256
    %vm1322 = vcmp.lt.f32.partialorder %v1321, 0.0004427343
    %v1323 = vsel %vm1322, %v1320, %v1317
    %v1324 = vadd.f32 %v1258, 1.0
    %v1325 = vlog2.pop %v1324
    %v1326 = vmul.f32 %v1325, 0.6931472
    %v1327 = vmul.f32 -0.5, %v1258
    %v1328 = vadd.f32 %v1327, 1.0
    %v1329 = vmul.f32 %v1328, %v1258
    %v1330 = vand.u32 2147483647, %v1258
    %vm1331 = vcmp.lt.f32.partialorder %v1330, 0.0004427343
    %v1332 = vsel %vm1331, %v1329, %v1326
    %v1333 = vadd.f32 %v1260, 1.0
    %v1334 = vlog2.pop %v1333
    %v1335 = vmul.f32 %v1334, 0.6931472
    %v1336 = vmul.f32 -0.5, %v1260
    %v1337 = vadd.f32 %v1336, 1.0
    %v1338 = vmul.f32 %v1337, %v1260
    %v1339 = vand.u32 2147483647, %v1260
    %vm1340 = vcmp.lt.f32.partialorder %v1339, 0.0004427343
    %v1341 = vsel %vm1340, %v1338, %v1335
    %v1342 = vadd.f32 %v1262, 1.0
    %v1343 = vlog2.pop %v1342
    %v1344 = vmul.f32 %v1343, 0.6931472
    %v1345 = vmul.f32 -0.5, %v1262
    %v1346 = vadd.f32 %v1345, 1.0
    %v1347 = vmul.f32 %v1346, %v1262
    %v1348 = vand.u32 2147483647, %v1262
    %vm1349 = vcmp.lt.f32.partialorder %v1348, 0.0004427343
    %v1350 = vsel %vm1349, %v1347, %v1344
    %v1351 = vadd.f32 %v1264, 1.0
    %v1352 = vlog2.pop %v1351
    %v1353 = vmul.f32 %v1352, 0.6931472
    %v1354 = vmul.f32 -0.5, %v1264
    %v1355 = vadd.f32 %v1354, 1.0
    %v1356 = vmul.f32 %v1355, %v1264
    %v1357 = vand.u32 2147483647, %v1264
    %vm1358 = vcmp.lt.f32.partialorder %v1357, 0.0004427343
    %v1359 = vsel %vm1358, %v1356, %v1353
    %v1360 = vadd.f32 %v1266, 1.0
    %v1361 = vlog2.pop %v1360
    %v1362 = vmul.f32 %v1361, 0.6931472
    %v1363 = vmul.f32 -0.5, %v1266
    %v1364 = vadd.f32 %v1363, 1.0
    %v1365 = vmul.f32 %v1364, %v1266
    %v1366 = vand.u32 2147483647, %v1266
    %vm1367 = vcmp.lt.f32.partialorder %v1366, 0.0004427343
    %v1368 = vsel %vm1367, %v1365, %v1362
    %v1369 = vadd.f32 %v1268, 1.0
    %v1370 = vlog2.pop %v1369
    %v1371 = vmul.f32 %v1370, 0.6931472
    %v1372 = vmul.f32 -0.5, %v1268
    %v1373 = vadd.f32 %v1372, 1.0
    %v1374 = vmul.f32 %v1373, %v1268
    %v1375 = vand.u32 2147483647, %v1268
    %vm1376 = vcmp.lt.f32.partialorder %v1375, 0.0004427343
    %v1377 = vsel %vm1376, %v1374, %v1371
    %v1378 = vadd.f32 %v1270, 1.0
    %v1379 = vlog2.pop %v1378
    %v1380 = vmul.f32 %v1379, 0.6931472
    %v1381 = vmul.f32 -0.5, %v1270
    %v1382 = vadd.f32 %v1381, 1.0
    %v1383 = vmul.f32 %v1382, %v1270
    %v1384 = vand.u32 2147483647, %v1270
    %vm1385 = vcmp.lt.f32.partialorder %v1384, 0.0004427343
    %v1386 = vsel %vm1385, %v1383, %v1380
    %v1387 = vadd.f32 %v1272, 1.0
    %v1388 = vlog2.pop %v1387
    %v1389 = vmul.f32 %v1388, 0.6931472
    %v1390 = vmul.f32 -0.5, %v1272
    %v1391 = vadd.f32 %v1390, 1.0
    %v1392 = vmul.f32 %v1391, %v1272
    %v1393 = vand.u32 2147483647, %v1272
    %vm1394 = vcmp.lt.f32.partialorder %v1393, 0.0004427343
    %v1395 = vsel %vm1394, %v1392, %v1389
    %v1396 = vadd.f32 %v1274, 1.0
    %v1397 = vlog2.pop %v1396
    %v1398 = vmul.f32 %v1397, 0.6931472
    %v1399 = vmul.f32 -0.5, %v1274
    %v1400 = vadd.f32 %v1399, 1.0
    %v1401 = vmul.f32 %v1400, %v1274
    %v1402 = vand.u32 2147483647, %v1274
    %vm1403 = vcmp.lt.f32.partialorder %v1402, 0.0004427343
    %v1404 = vsel %vm1403, %v1401, %v1398
    %v1405 = vadd.f32 %v1276, 1.0
    %v1406 = vlog2.pop %v1405
    %v1407 = vmul.f32 %v1406, 0.6931472
    %v1408 = vmul.f32 -0.5, %v1276
    %v1409 = vadd.f32 %v1408, 1.0
    %v1410 = vmul.f32 %v1409, %v1276
    %v1411 = vand.u32 2147483647, %v1276
    %vm1412 = vcmp.lt.f32.partialorder %v1411, 0.0004427343
    %v1413 = vsel %vm1412, %v1410, %v1407
    %v1414 = vadd.f32 %v1278, 1.0
    %v1415 = vlog2.pop %v1414
    %v1416 = vmul.f32 %v1415, 0.6931472
    %v1417 = vmul.f32 -0.5, %v1278
    %v1418 = vadd.f32 %v1417, 1.0
    %v1419 = vmul.f32 %v1418, %v1278
    %v1420 = vand.u32 2147483647, %v1278
    %vm1421 = vcmp.lt.f32.partialorder %v1420, 0.0004427343
    %v1422 = vsel %vm1421, %v1419, %v1416
    %v1423 = vadd.f32 %v1167, %v1287
    %v1424 = vadd.f32 %v1168, %v1296
    %v1425 = vadd.f32 %v1169, %v1305
    %v1426 = vadd.f32 %v1170, %v1314
    %v1427 = vadd.f32 %v1171, %v1323
    %v1428 = vadd.f32 %v1172, %v1332
    %v1429 = vadd.f32 %v1173, %v1341
    %v1430 = vadd.f32 %v1174, %v1350
    %v1431 = vadd.f32 %v1175, %v1359
    %v1432 = vadd.f32 %v1176, %v1368
    %v1433 = vadd.f32 %v1177, %v1377
    %v1434 = vadd.f32 %v1178, %v1386
    %v1435 = vadd.f32 %v1179, %v1395
    %v1436 = vadd.f32 %v1180, %v1404
    %v1437 = vadd.f32 %v1181, %v1413
    %v1438 = vadd.f32 %v1182, %v1422
    %v1439 = vsel %vm1183, %v1199, %v1423
    %v1440 = vsel %vm1184, %v1200, %v1424
    %v1441 = vsel %vm1185, %v1201, %v1425
    %v1442 = vsel %vm1186, %v1202, %v1426
    %v1443 = vsel %vm1187, %v1203, %v1427
    %v1444 = vsel %vm1188, %v1204, %v1428
    %v1445 = vsel %vm1189, %v1205, %v1429
    %v1446 = vsel %vm1190, %v1206, %v1430
    %v1447 = vsel %vm1191, %v1207, %v1431
    %v1448 = vsel %vm1192, %v1208, %v1432
    %v1449 = vsel %vm1193, %v1209, %v1433
    %v1450 = vsel %vm1194, %v1210, %v1434
    %v1451 = vsel %vm1195, %v1211, %v1435
    %v1452 = vsel %vm1196, %v1212, %v1436
    %v1453 = vsel %vm1197, %v1213, %v1437
    %v1454 = vsel %vm1198, %v1214, %v1438
    %v1455 = vperm.slane %v187, 1
    %v1456 = vperm.slane %v188, 1
    %v1457 = vmul.f32 %v1439, %v1455
    %v1458 = vmul.f32 %v1440, %v1456
    %v1459 = vmul.f32 %v1441, %v1455
    %v1460 = vmul.f32 %v1442, %v1456
    %v1461 = vmul.f32 %v1443, %v1455
    %v1462 = vmul.f32 %v1444, %v1456
    %v1463 = vmul.f32 %v1445, %v1455
    %v1464 = vmul.f32 %v1446, %v1456
    %v1465 = vmul.f32 %v1447, %v1455
    %v1466 = vmul.f32 %v1448, %v1456
    %v1467 = vmul.f32 %v1449, %v1455
    %v1468 = vmul.f32 %v1450, %v1456
    %v1469 = vmul.f32 %v1451, %v1455
    %v1470 = vmul.f32 %v1452, %v1456
    %v1471 = vmul.f32 %v1453, %v1455
    %v1472 = vmul.f32 %v1454, %v1456
    %v1473 = vperm.slane %v187, 2
    %v1474 = vperm.slane %v188, 2
    %v1475 = vadd.f32 %v1457, %v1473
    %v1476 = vadd.f32 %v1458, %v1474
    %v1477 = vadd.f32 %v1459, %v1473
    %v1478 = vadd.f32 %v1460, %v1474
    %v1479 = vadd.f32 %v1461, %v1473
    %v1480 = vadd.f32 %v1462, %v1474
    %v1481 = vadd.f32 %v1463, %v1473
    %v1482 = vadd.f32 %v1464, %v1474
    %v1483 = vadd.f32 %v1465, %v1473
    %v1484 = vadd.f32 %v1466, %v1474
    %v1485 = vadd.f32 %v1467, %v1473
    %v1486 = vadd.f32 %v1468, %v1474
    %v1487 = vadd.f32 %v1469, %v1473
    %v1488 = vadd.f32 %v1470, %v1474
    %v1489 = vadd.f32 %v1471, %v1473
    %v1490 = vadd.f32 %v1472, %v1474
    %v1503 = vrot.slane %v1475, 2
    %v1504 = vrot.slane %v1477, 2
    %v1505 = vsel %vm434, %v1503, %v1504
    %v1506 = vrot.slane %v1476, 2
    %v1507 = vrot.slane %v1478, 2
    %v1508 = vsel %vm434, %v1506, %v1507
    %v1509 = vrot.slane %v1479, 2
    %v1510 = vsel %vm434, %v1504, %v1509
    %v1511 = vrot.slane %v1480, 2
    %v1512 = vsel %vm434, %v1507, %v1511
    %v1513 = vrot.slane %v1481, 2
    %v1514 = vsel %vm434, %v1509, %v1513
    %v1515 = vrot.slane %v1482, 2
    %v1516 = vsel %vm434, %v1511, %v1515
    %v1517 = vrot.slane %v1483, 2
    %v1518 = vsel %vm434, %v1513, %v1517
    %v1519 = vrot.slane %v1484, 2
    %v1520 = vsel %vm434, %v1515, %v1519
    %v1521 = vrot.slane %v1485, 2
    %v1522 = vsel %vm434, %v1517, %v1521
    %v1523 = vrot.slane %v1486, 2
    %v1524 = vsel %vm434, %v1519, %v1523
    %vm1539 = vcmask 1043456
    %v1540 = vrot.slane %v1475, 4
    %v1541 = vrot.slane %v1477, 4
    %v1542 = vsel %vm1539, %v1540, %v1541
    %v1543 = vrot.slane %v1476, 4
    %v1544 = vrot.slane %v1478, 4
    %v1545 = vsel %vm1539, %v1543, %v1544
    %v1546 = vrot.slane %v1479, 4
    %v1547 = vsel %vm1539, %v1541, %v1546
    %v1548 = vrot.slane %v1480, 4
    %v1549 = vsel %vm1539, %v1544, %v1548
    %v1550 = vrot.slane %v1481, 4
    %v1551 = vsel %vm1539, %v1546, %v1550
    %v1552 = vrot.slane %v1482, 4
    %v1553 = vsel %vm1539, %v1548, %v1552
    %v1554 = vrot.slane %v1483, 4
    %v1555 = vsel %vm1539, %v1550, %v1554
    %v1556 = vrot.slane %v1484, 4
    %v1557 = vsel %vm1539, %v1552, %v1556
    %v1558 = vrot.slane %v1485, 4
    %v1559 = vsel %vm1539, %v1554, %v1558
    %v1560 = vrot.slane %v1486, 4
    %v1561 = vsel %vm1539, %v1556, %v1560
    %v1562 = vrot.slane %v1487, 4
    %v1563 = vsel %vm1539, %v1558, %v1562
    %v1564 = vrot.slane %v1488, 4
    %v1565 = vsel %vm1539, %v1560, %v1564
    %v1578 = vrot.slane %v1475, 6
    %v1579 = vrot.slane %v1477, 6
    %v1580 = vsel %vm282, %v1578, %v1579
    %v1581 = vrot.slane %v1476, 6
    %v1582 = vrot.slane %v1478, 6
    %v1583 = vsel %vm282, %v1581, %v1582
    %v1584 = vrot.slane %v1479, 6
    %v1585 = vsel %vm282, %v1579, %v1584
    %v1586 = vrot.slane %v1480, 6
    %v1587 = vsel %vm282, %v1582, %v1586
    %v1588 = vrot.slane %v1481, 6
    %v1589 = vsel %vm282, %v1584, %v1588
    %v1590 = vrot.slane %v1482, 6
    %v1591 = vsel %vm282, %v1586, %v1590
    %v1592 = vrot.slane %v1483, 6
    %v1593 = vsel %vm282, %v1588, %v1592
    %v1594 = vrot.slane %v1484, 6
    %v1595 = vsel %vm282, %v1590, %v1594
    %v1596 = vrot.slane %v1485, 6
    %v1597 = vsel %vm282, %v1592, %v1596
    %v1598 = vrot.slane %v1486, 6
    %v1599 = vsel %vm282, %v1594, %v1598
    %v1600 = vrot.slane %v1487, 6
    %v1601 = vsel %vm282, %v1596, %v1600
    %v1602 = vrot.slane %v1488, 6
    %v1603 = vsel %vm282, %v1598, %v1602
    %v1616 = vrot.slane %v1487, 2
    %v1617 = vsel %vm434, %v1521, %v1616
    %v1618 = vrot.slane %v1488, 2
    %v1619 = vsel %vm434, %v1523, %v1618
    %v1626 = vrot.slane %v1489, 4
    %v1627 = vsel %vm1539, %v1562, %v1626
    %v1628 = vrot.slane %v1490, 4
    %v1629 = vsel %vm1539, %v1564, %v1628
    %v1632 = vrot.slane %v1489, 6
    %v1633 = vsel %vm282, %v1600, %v1632
    %v1634 = vrot.slane %v1490, 6
    %v1635 = vsel %vm282, %v1602, %v1634
    %v1638 = vld [vmem:[#allocation10] sm:$0xff]
    %v1639 = vld [vmem:[#allocation10 + $0x8] sm:$0xff]
    %v1640 = vld [vmem:[#allocation10 + $0x10] sm:$0xff]
    %v1641 = vld [vmem:[#allocation10 + $0x18] sm:$0xff]
    %v1642 = vld [vmem:[#allocation10 + $0x20] sm:$0xff]
    %v1643 = vld [vmem:[#allocation10 + $0x28] sm:$0xff]
    %v1644 = vld [vmem:[#allocation10 + $0x30] sm:$0xff]
    %v1645 = vld [vmem:[#allocation10 + $0x38] sm:$0xff]
    %v1646 = vld [vmem:[#allocation10 + $0x40] sm:$0xff]
    %v1647 = vld [vmem:[#allocation10 + $0x48] sm:$0xff]
    %v1648 = vld [vmem:[#allocation10 + $0x50] sm:$0xff]
    %v1649 = vld [vmem:[#allocation10 + $0x58] sm:$0xff]
    %v1650 = vld [vmem:[#allocation10 + $0x60] sm:$0xff]
    %v1651 = vld [vmem:[#allocation10 + $0x68] sm:$0xff]
    %v1652 = vld [vmem:[#allocation10 + $0x70] sm:$0xff]
    %v1653 = vld [vmem:[#allocation10 + $0x78] sm:$0xff]
    %v1654 = vld [vmem:[#allocation10 + $0x80] sm:$0xff]
    %v1655 = vld [vmem:[#allocation10 + $0x88] sm:$0xff]
    %v1656 = vld [vmem:[#allocation10 + $0x90] sm:$0xff]
    %v1657 = vld [vmem:[#allocation10 + $0x98] sm:$0xff]
    %v1658 = vld [vmem:[#allocation10 + $0xa0] sm:$0xff]
    %v1659 = vld [vmem:[#allocation10 + $0xa8] sm:$0xff]
    %v1660 = vld [vmem:[#allocation10 + $0xb0] sm:$0xff]
    %v1661 = vld [vmem:[#allocation10 + $0xb8] sm:$0xff]
    %v1662 = vld [vmem:[#allocation10 + $0xc0] sm:$0xff]
    %v1663 = vld [vmem:[#allocation10 + $0xc8] sm:$0xff]
    %v1664 = vld [vmem:[#allocation10 + $0xd0] sm:$0xff]
    %v1665 = vld [vmem:[#allocation10 + $0xd8] sm:$0xff]
    %v1666 = vld [vmem:[#allocation10 + $0xe0] sm:$0xff]
    %v1667 = vld [vmem:[#allocation10 + $0xe8] sm:$0xff]
    %v1668 = vld [vmem:[#allocation10 + $0xf0] sm:$0xff]
    %v1669 = vld [vmem:[#allocation10 + $0xf8] sm:$0xff]
    %v1670 = vld [vmem:[#allocation10 + $0x100] sm:$0xff]
    %v1671 = vld [vmem:[#allocation10 + $0x108] sm:$0xff]
    %v1672 = vld [vmem:[#allocation10 + $0x110] sm:$0xff]
    %v1673 = vld [vmem:[#allocation10 + $0x118] sm:$0xff]
    %v1674 = vld [vmem:[#allocation10 + $0x120] sm:$0xff]
    %v1675 = vld [vmem:[#allocation10 + $0x128] sm:$0xff]
    %v1676 = vld [vmem:[#allocation10 + $0x130] sm:$0xff]
    %v1677 = vld [vmem:[#allocation10 + $0x138] sm:$0xff]
    %v1678 = vld [vmem:[#allocation10 + $0x140] sm:$0xff]
    %v1679 = vld [vmem:[#allocation10 + $0x148] sm:$0xff]
    %v1680 = vld [vmem:[#allocation10 + $0x150] sm:$0xff]
    %v1681 = vld [vmem:[#allocation10 + $0x158] sm:$0xff]
    %v1682 = vld [vmem:[#allocation10 + $0x160] sm:$0xff]
    %v1683 = vld [vmem:[#allocation10 + $0x168] sm:$0xff]
    %v1684 = vld [vmem:[#allocation10 + $0x170] sm:$0xff]
    %v1685 = vld [vmem:[#allocation10 + $0x178] sm:$0xff]
    %v1686 = vld [vmem:[#allocation10 + $0x180] sm:$0xff]
    %v1687 = vld [vmem:[#allocation10 + $0x188] sm:$0xff]
    %v1688 = vld [vmem:[#allocation10 + $0x190] sm:$0xff]
    %v1689 = vld [vmem:[#allocation10 + $0x198] sm:$0xff]
    %v1690 = vld [vmem:[#allocation10 + $0x1a0] sm:$0xff]
    %v1691 = vld [vmem:[#allocation10 + $0x1a8] sm:$0xff]
    %v1692 = vld [vmem:[#allocation10 + $0x1b0] sm:$0xff]
    %v1693 = vld [vmem:[#allocation10 + $0x1b8] sm:$0xff]
    %v1694 = vld [vmem:[#allocation10 + $0x1c0] sm:$0xff]
    %v1695 = vld [vmem:[#allocation10 + $0x1c8] sm:$0xff]
    %v1696 = vld [vmem:[#allocation10 + $0x1d0] sm:$0xff]
    %v1697 = vld [vmem:[#allocation10 + $0x1d8] sm:$0xff]
    %v1698 = vld [vmem:[#allocation10 + $0x1e0] sm:$0xff]
    %v1699 = vld [vmem:[#allocation10 + $0x1e8] sm:$0xff]
    %v1700 = vld [vmem:[#allocation10 + $0x1f0] sm:$0xff]
    %v1701 = vld [vmem:[#allocation10 + $0x1f8] sm:$0xff]
    %v1702 = vld [vmem:[#allocation10 + $0x200] sm:$0xff]
    %v1703 = vld [vmem:[#allocation10 + $0x208] sm:$0xff]
    %v1704 = vld [vmem:[#allocation10 + $0x210] sm:$0xff]
    %v1705 = vld [vmem:[#allocation10 + $0x218] sm:$0xff]
    %v1706 = vld [vmem:[#allocation10 + $0x220] sm:$0xff]
    %v1707 = vld [vmem:[#allocation10 + $0x228] sm:$0xff]
    %v1708 = vld [vmem:[#allocation10 + $0x230] sm:$0xff]
    %v1709 = vld [vmem:[#allocation10 + $0x238] sm:$0xff]
    %v1710 = vld [vmem:[#allocation10 + $0x240] sm:$0xff]
    %v1711 = vld [vmem:[#allocation10 + $0x248] sm:$0xff]
    %v1712 = vld [vmem:[#allocation10 + $0x250] sm:$0xff]
    %v1713 = vld [vmem:[#allocation10 + $0x258] sm:$0xff]
    %v1714 = vld [vmem:[#allocation10 + $0x260] sm:$0xff]
    %v1715 = vld [vmem:[#allocation10 + $0x268] sm:$0xff]
    %v1716 = vld [vmem:[#allocation10 + $0x270] sm:$0xff]
    %v1717 = vld [vmem:[#allocation10 + $0x278] sm:$0xff]
    %v1718 = vld [vmem:[#allocation10 + $0x280] sm:$0xff]
    %v1719 = vld [vmem:[#allocation10 + $0x288] sm:$0xff]
    %v1720 = vld [vmem:[#allocation10 + $0x290] sm:$0xff]
    %v1721 = vld [vmem:[#allocation10 + $0x298] sm:$0xff]
    %v1722 = vld [vmem:[#allocation10 + $0x2a0] sm:$0xff]
    %v1723 = vld [vmem:[#allocation10 + $0x2a8] sm:$0xff]
    %v1724 = vld [vmem:[#allocation10 + $0x2b0] sm:$0xff]
    %v1725 = vld [vmem:[#allocation10 + $0x2b8] sm:$0xff]
    %v1726 = vld [vmem:[#allocation10 + $0x2c0] sm:$0xff]
    %v1727 = vld [vmem:[#allocation10 + $0x2c8] sm:$0xff]
    %v1728 = vld [vmem:[#allocation10 + $0x2d0] sm:$0xff]
    %v1729 = vld [vmem:[#allocation10 + $0x2d8] sm:$0xff]
    %v1730 = vld [vmem:[#allocation10 + $0x2e0] sm:$0xff]
    %v1731 = vld [vmem:[#allocation10 + $0x2e8] sm:$0xff]
    %v1732 = vld [vmem:[#allocation10 + $0x2f0] sm:$0xff]
    %v1733 = vld [vmem:[#allocation10 + $0x2f8] sm:$0xff]
    %v1734 = vld [vmem:[#allocation10 + $0x300] sm:$0xff]
    %v1735 = vld [vmem:[#allocation10 + $0x308] sm:$0xff]
    %v1736 = vld [vmem:[#allocation10 + $0x310] sm:$0xff]
    %v1737 = vld [vmem:[#allocation10 + $0x318] sm:$0xff]
    %v1738 = vld [vmem:[#allocation10 + $0x320] sm:$0xff]
    %v1739 = vld [vmem:[#allocation10 + $0x328] sm:$0xff]
    %v1740 = vld [vmem:[#allocation10 + $0x330] sm:$0xff]
    %v1741 = vld [vmem:[#allocation10 + $0x338] sm:$0xff]
    %v1742 = vld [vmem:[#allocation10 + $0x340] sm:$0xff]
    %v1743 = vld [vmem:[#allocation10 + $0x348] sm:$0xff]
    %v1744 = vld [vmem:[#allocation10 + $0x350] sm:$0xff]
    %v1745 = vld [vmem:[#allocation10 + $0x358] sm:$0xff]
    %v1746 = vld [vmem:[#allocation10 + $0x360] sm:$0xff]
    %v1747 = vld [vmem:[#allocation10 + $0x368] sm:$0xff]
    %v1748 = vld [vmem:[#allocation10 + $0x370] sm:$0xff]
    %v1749 = vld [vmem:[#allocation10 + $0x378] sm:$0xff]
    %v1750 = vld [vmem:[#allocation10 + $0x380] sm:$0xff]
    %v1751 = vld [vmem:[#allocation10 + $0x388] sm:$0xff]
    %v1752 = vld [vmem:[#allocation10 + $0x390] sm:$0xff]
    %v1753 = vld [vmem:[#allocation10 + $0x398] sm:$0xff]
    %v1754 = vld [vmem:[#allocation10 + $0x3a0] sm:$0xff]
    %v1755 = vld [vmem:[#allocation10 + $0x3a8] sm:$0xff]
    %v1756 = vld [vmem:[#allocation10 + $0x3b0] sm:$0xff]
    %v1757 = vld [vmem:[#allocation10 + $0x3b8] sm:$0xff]
    %v1758 = vld [vmem:[#allocation10 + $0x3c0] sm:$0xff]
    %v1759 = vld [vmem:[#allocation10 + $0x3c8] sm:$0xff]
    %v1760 = vld [vmem:[#allocation10 + $0x3d0] sm:$0xff]
    %v1761 = vld [vmem:[#allocation10 + $0x3d8] sm:$0xff]
    %v1762 = vld [vmem:[#allocation10 + $0x3e0] sm:$0xff]
    %v1763 = vld [vmem:[#allocation10 + $0x3e8] sm:$0xff]
    %v1764 = vld [vmem:[#allocation10 + $0x3f0] sm:$0xff]
    %v1765 = vld [vmem:[#allocation10 + $0x3f8] sm:$0xff]
    %v1766 = vld [vmem:[#allocation10 + $0x400] sm:$0xff]
    %v1767 = vld [vmem:[#allocation10 + $0x408] sm:$0xff]
    %v1768 = vld [vmem:[#allocation10 + $0x410] sm:$0xff]
    %v1769 = vld [vmem:[#allocation10 + $0x418] sm:$0xff]
    %v1770 = vld [vmem:[#allocation10 + $0x420] sm:$0xff]
    %v1771 = vld [vmem:[#allocation10 + $0x428] sm:$0xff]
    %v1772 = vld [vmem:[#allocation10 + $0x430] sm:$0xff]
    %v1773 = vld [vmem:[#allocation10 + $0x438] sm:$0xff]
    %v1774 = vld [vmem:[#allocation10 + $0x440] sm:$0xff]
    %v1775 = vld [vmem:[#allocation10 + $0x448] sm:$0xff]
    %v1776 = vld [vmem:[#allocation10 + $0x450] sm:$0xff]
    %v1777 = vld [vmem:[#allocation10 + $0x458] sm:$0xff]
    %v1778 = vld [vmem:[#allocation10 + $0x460] sm:$0xff]
    %v1779 = vld [vmem:[#allocation10 + $0x468] sm:$0xff]
    %v1780 = vld [vmem:[#allocation10 + $0x470] sm:$0xff]
    %v1781 = vld [vmem:[#allocation10 + $0x478] sm:$0xff]
    %v1782 = vld [vmem:[#allocation10 + $0x480] sm:$0xff]
    %v1783 = vld [vmem:[#allocation10 + $0x488] sm:$0xff]
    %v1784 = vld [vmem:[#allocation10 + $0x490] sm:$0xff]
    %v1785 = vld [vmem:[#allocation10 + $0x498] sm:$0xff]
    %v1786 = vld [vmem:[#allocation10 + $0x4a0] sm:$0xff]
    %v1787 = vld [vmem:[#allocation10 + $0x4a8] sm:$0xff]
    %v1788 = vld [vmem:[#allocation10 + $0x4b0] sm:$0xff]
    %v1789 = vld [vmem:[#allocation10 + $0x4b8] sm:$0xff]
    %v1790 = vld [vmem:[#allocation10 + $0x4c0] sm:$0xff]
    %v1791 = vld [vmem:[#allocation10 + $0x4c8] sm:$0xff]
    %v1792 = vld [vmem:[#allocation10 + $0x4d0] sm:$0xff]
    %v1793 = vld [vmem:[#allocation10 + $0x4d8] sm:$0xff]
    %v1794 = vld [vmem:[#allocation10 + $0x4e0] sm:$0xff]
    %v1795 = vld [vmem:[#allocation10 + $0x4e8] sm:$0xff]
    %v1796 = vld [vmem:[#allocation10 + $0x4f0] sm:$0xff]
    %v1797 = vld [vmem:[#allocation10 + $0x4f8] sm:$0xff]
    %v1798 = vld [vmem:[#allocation10 + $0x500] sm:$0xff]
    %v1799 = vld [vmem:[#allocation10 + $0x508] sm:$0xff]
    %v1800 = vld [vmem:[#allocation10 + $0x510] sm:$0xff]
    %v1801 = vld [vmem:[#allocation10 + $0x518] sm:$0xff]
    %v1802 = vld [vmem:[#allocation10 + $0x520] sm:$0xff]
    %v1803 = vld [vmem:[#allocation10 + $0x528] sm:$0xff]
    %v1804 = vld [vmem:[#allocation10 + $0x530] sm:$0xff]
    %v1805 = vld [vmem:[#allocation10 + $0x538] sm:$0xff]
    %v1806 = vld [vmem:[#allocation10 + $0x540] sm:$0xff]
    %v1807 = vld [vmem:[#allocation10 + $0x548] sm:$0xff]
    %v1808 = vld [vmem:[#allocation10 + $0x550] sm:$0xff]
    %v1809 = vld [vmem:[#allocation10 + $0x558] sm:$0xff]
    %v1810 = vld [vmem:[#allocation10 + $0x560] sm:$0xff]
    %v1811 = vld [vmem:[#allocation10 + $0x568] sm:$0xff]
    %v1812 = vld [vmem:[#allocation10 + $0x570] sm:$0xff]
    %v1813 = vld [vmem:[#allocation10 + $0x578] sm:$0xff]
    %v1814 = vld [vmem:[#allocation10 + $0x580] sm:$0xff]
    %v1815 = vld [vmem:[#allocation10 + $0x588] sm:$0xff]
    %v1816 = vld [vmem:[#allocation10 + $0x590] sm:$0xff]
    %v1817 = vld [vmem:[#allocation10 + $0x598] sm:$0xff]
    %v1818 = vld [vmem:[#allocation10 + $0x5a0] sm:$0xff]
    %v1819 = vld [vmem:[#allocation10 + $0x5a8] sm:$0xff]
    %v1820 = vld [vmem:[#allocation10 + $0x5b0] sm:$0xff]
    %v1821 = vld [vmem:[#allocation10 + $0x5b8] sm:$0xff]
    %v1822 = vld [vmem:[#allocation10 + $0x5c0] sm:$0xff]
    %v1823 = vld [vmem:[#allocation10 + $0x5c8] sm:$0xff]
    %v1824 = vld [vmem:[#allocation10 + $0x5d0] sm:$0xff]
    %v1825 = vld [vmem:[#allocation10 + $0x5d8] sm:$0xff]
    %v1826 = vld [vmem:[#allocation10 + $0x5e0] sm:$0xff]
    %v1827 = vld [vmem:[#allocation10 + $0x5e8] sm:$0xff]
    %v1828 = vld [vmem:[#allocation10 + $0x5f0] sm:$0xff]
    %v1829 = vld [vmem:[#allocation10 + $0x5f8] sm:$0xff]
    %v1830 = vld [vmem:[#allocation10 + $0x600] sm:$0xff]
    %v1831 = vld [vmem:[#allocation10 + $0x608] sm:$0xff]
    %v1832 = vld [vmem:[#allocation10 + $0x610] sm:$0xff]
    %v1833 = vld [vmem:[#allocation10 + $0x618] sm:$0xff]
    %v1834 = vld [vmem:[#allocation10 + $0x620] sm:$0xff]
    %v1835 = vld [vmem:[#allocation10 + $0x628] sm:$0xff]
    %v1836 = vld [vmem:[#allocation10 + $0x630] sm:$0xff]
    %v1837 = vld [vmem:[#allocation10 + $0x638] sm:$0xff]
    %v1838 = vld [vmem:[#allocation10 + $0x640] sm:$0xff]
    %v1839 = vld [vmem:[#allocation10 + $0x648] sm:$0xff]
    %v1840 = vld [vmem:[#allocation10 + $0x650] sm:$0xff]
    %v1841 = vld [vmem:[#allocation10 + $0x658] sm:$0xff]
    %v1842 = vld [vmem:[#allocation10 + $0x660] sm:$0xff]
    %v1843 = vld [vmem:[#allocation10 + $0x668] sm:$0xff]
    %v1844 = vld [vmem:[#allocation10 + $0x670] sm:$0xff]
    %v1845 = vld [vmem:[#allocation10 + $0x678] sm:$0xff]
    %v1846 = vld [vmem:[#allocation10 + $0x680] sm:$0xff]
    %v1847 = vld [vmem:[#allocation10 + $0x688] sm:$0xff]
    %v1848 = vld [vmem:[#allocation10 + $0x690] sm:$0xff]
    %v1849 = vld [vmem:[#allocation10 + $0x698] sm:$0xff]
    %v1850 = vld [vmem:[#allocation10 + $0x6a0] sm:$0xff]
    %v1851 = vld [vmem:[#allocation10 + $0x6a8] sm:$0xff]
    %v1852 = vld [vmem:[#allocation10 + $0x6b0] sm:$0xff]
    %v1853 = vld [vmem:[#allocation10 + $0x6b8] sm:$0xff]
    %v1854 = vld [vmem:[#allocation10 + $0x6c0] sm:$0xff]
    %v1855 = vld [vmem:[#allocation10 + $0x6c8] sm:$0xff]
    %v1856 = vld [vmem:[#allocation10 + $0x6d0] sm:$0xff]
    %v1857 = vld [vmem:[#allocation10 + $0x6d8] sm:$0xff]
    %v1858 = vld [vmem:[#allocation10 + $0x6e0] sm:$0xff]
    %v1859 = vld [vmem:[#allocation10 + $0x6e8] sm:$0xff]
    %v1860 = vld [vmem:[#allocation10 + $0x6f0] sm:$0xff]
    %v1861 = vld [vmem:[#allocation10 + $0x6f8] sm:$0xff]
    %v1862 = vld [vmem:[#allocation10 + $0x700] sm:$0xff]
    %v1863 = vld [vmem:[#allocation10 + $0x708] sm:$0xff]
    %v1864 = vld [vmem:[#allocation10 + $0x710] sm:$0xff]
    %v1865 = vld [vmem:[#allocation10 + $0x718] sm:$0xff]
    %v1866 = vld [vmem:[#allocation10 + $0x720] sm:$0xff]
    %v1867 = vld [vmem:[#allocation10 + $0x728] sm:$0xff]
    %v1868 = vld [vmem:[#allocation10 + $0x730] sm:$0xff]
    %v1869 = vld [vmem:[#allocation10 + $0x738] sm:$0xff]
    %v1870 = vld [vmem:[#allocation10 + $0x740] sm:$0xff]
    %v1871 = vld [vmem:[#allocation10 + $0x748] sm:$0xff]
    %v1872 = vld [vmem:[#allocation10 + $0x750] sm:$0xff]
    %v1873 = vld [vmem:[#allocation10 + $0x758] sm:$0xff]
    %v1874 = vld [vmem:[#allocation10 + $0x760] sm:$0xff]
    %v1875 = vld [vmem:[#allocation10 + $0x768] sm:$0xff]
    %v1876 = vld [vmem:[#allocation10 + $0x770] sm:$0xff]
    %v1877 = vld [vmem:[#allocation10 + $0x778] sm:$0xff]
    %v1878 = vld [vmem:[#allocation10 + $0x780] sm:$0xff]
    %v1879 = vld [vmem:[#allocation10 + $0x788] sm:$0xff]
    %v1880 = vld [vmem:[#allocation10 + $0x790] sm:$0xff]
    %v1881 = vld [vmem:[#allocation10 + $0x798] sm:$0xff]
    %v1882 = vld [vmem:[#allocation10 + $0x7a0] sm:$0xff]
    %v1883 = vld [vmem:[#allocation10 + $0x7a8] sm:$0xff]
    %v1884 = vld [vmem:[#allocation10 + $0x7b0] sm:$0xff]
    %v1885 = vld [vmem:[#allocation10 + $0x7b8] sm:$0xff]
    %v1886 = vld [vmem:[#allocation10 + $0x7c0] sm:$0xff]
    %v1887 = vld [vmem:[#allocation10 + $0x7c8] sm:$0xff]
    %v1888 = vld [vmem:[#allocation10 + $0x7d0] sm:$0xff]
    %v1889 = vld [vmem:[#allocation10 + $0x7d8] sm:$0xff]
    %v1890 = vld [vmem:[#allocation10 + $0x7e0] sm:$0xff]
    %v1891 = vld [vmem:[#allocation10 + $0x7e8] sm:$0xff]
    %v1892 = vld [vmem:[#allocation10 + $0x7f0] sm:$0xff]
    %v1893 = vld [vmem:[#allocation10 + $0x7f8] sm:$0xff]
    %v1894 = vld [vmem:[#allocation10 + $0x800] sm:$0xff]
    %v1895 = vld [vmem:[#allocation10 + $0x808] sm:$0xff]
    %v1896 = vld [vmem:[#allocation10 + $0x810] sm:$0xff]
    %v1897 = vld [vmem:[#allocation10 + $0x818] sm:$0xff]
    %v1898 = vld [vmem:[#allocation10 + $0x820] sm:$0xff]
    %v1899 = vld [vmem:[#allocation10 + $0x828] sm:$0xff]
    %v1900 = vld [vmem:[#allocation10 + $0x830] sm:$0xff]
    %v1901 = vld [vmem:[#allocation10 + $0x838] sm:$0xff]
    %v1902 = vld [vmem:[#allocation10 + $0x840] sm:$0xff]
    %v1903 = vld [vmem:[#allocation10 + $0x848] sm:$0xff]
    %v1904 = vld [vmem:[#allocation10 + $0x850] sm:$0xff]
    %v1905 = vld [vmem:[#allocation10 + $0x858] sm:$0xff]
    %v1906 = vld [vmem:[#allocation10 + $0x860] sm:$0xff]
    %v1907 = vld [vmem:[#allocation10 + $0x868] sm:$0xff]
    %v1908 = vld [vmem:[#allocation10 + $0x870] sm:$0xff]
    %v1909 = vld [vmem:[#allocation10 + $0x878] sm:$0xff]
    %v1910 = vld [vmem:[#allocation10 + $0x880] sm:$0xff]
    %v1911 = vld [vmem:[#allocation10 + $0x888] sm:$0xff]
    %v1912 = vld [vmem:[#allocation10 + $0x890] sm:$0xff]
    %v1913 = vld [vmem:[#allocation10 + $0x898] sm:$0xff]
    %v1914 = vld [vmem:[#allocation10 + $0x8a0] sm:$0xff]
    %v1915 = vld [vmem:[#allocation10 + $0x8a8] sm:$0xff]
    %v1916 = vld [vmem:[#allocation10 + $0x8b0] sm:$0xff]
    %v1917 = vld [vmem:[#allocation10 + $0x8b8] sm:$0xff]
    %v1918 = vld [vmem:[#allocation10 + $0x8c0] sm:$0xff]
    %v1919 = vld [vmem:[#allocation10 + $0x8c8] sm:$0xff]
    %v1920 = vld [vmem:[#allocation10 + $0x8d0] sm:$0xff]
    %v1921 = vld [vmem:[#allocation10 + $0x8d8] sm:$0xff]
    %v1922 = vld [vmem:[#allocation10 + $0x8e0] sm:$0xff]
    %v1923 = vld [vmem:[#allocation10 + $0x8e8] sm:$0xff]
    %v1924 = vld [vmem:[#allocation10 + $0x8f0] sm:$0xff]
    %v1925 = vld [vmem:[#allocation10 + $0x8f8] sm:$0xff]
    %v1926 = vld [vmem:[#allocation10 + $0x900] sm:$0xff]
    %v1927 = vld [vmem:[#allocation10 + $0x908] sm:$0xff]
    %v1928 = vld [vmem:[#allocation10 + $0x910] sm:$0xff]
    %v1929 = vld [vmem:[#allocation10 + $0x918] sm:$0xff]
    %v1930 = vld [vmem:[#allocation10 + $0x920] sm:$0xff]
    %v1931 = vld [vmem:[#allocation10 + $0x928] sm:$0xff]
    %v1932 = vld [vmem:[#allocation10 + $0x930] sm:$0xff]
    %v1933 = vld [vmem:[#allocation10 + $0x938] sm:$0xff]
    %v1934 = vld [vmem:[#allocation10 + $0x940] sm:$0xff]
    %v1935 = vld [vmem:[#allocation10 + $0x948] sm:$0xff]
    %v1936 = vld [vmem:[#allocation10 + $0x950] sm:$0xff]
    %v1937 = vld [vmem:[#allocation10 + $0x958] sm:$0xff]
    %v1938 = vld [vmem:[#allocation10 + $0x960] sm:$0xff]
    %v1939 = vld [vmem:[#allocation10 + $0x968] sm:$0xff]
    %v1940 = vld [vmem:[#allocation10 + $0x970] sm:$0xff]
    %v1941 = vld [vmem:[#allocation10 + $0x978] sm:$0xff]
    %v1942 = vld [vmem:[#allocation10 + $0x980] sm:$0xff]
    %v1943 = vld [vmem:[#allocation10 + $0x988] sm:$0xff]
    %v1944 = vld [vmem:[#allocation10 + $0x990] sm:$0xff]
    %v1945 = vld [vmem:[#allocation10 + $0x998] sm:$0xff]
    %v1946 = vld [vmem:[#allocation10 + $0x9a0] sm:$0xff]
    %v1947 = vld [vmem:[#allocation10 + $0x9a8] sm:$0xff]
    %v1948 = vld [vmem:[#allocation10 + $0x9b0] sm:$0xff]
    %v1949 = vld [vmem:[#allocation10 + $0x9b8] sm:$0xff]
    %v1950 = vld [vmem:[#allocation10 + $0x9c0] sm:$0xff]
    %v1951 = vld [vmem:[#allocation10 + $0x9c8] sm:$0xff]
    %v1952 = vld [vmem:[#allocation10 + $0x9d0] sm:$0xff]
    %v1953 = vld [vmem:[#allocation10 + $0x9d8] sm:$0xff]
    %v1954 = vld [vmem:[#allocation10 + $0x9e0] sm:$0xff]
    %v1955 = vld [vmem:[#allocation10 + $0x9e8] sm:$0xff]
    %v1956 = vld [vmem:[#allocation10 + $0x9f0] sm:$0xff]
    %v1957 = vld [vmem:[#allocation10 + $0x9f8] sm:$0xff]
    %v1958 = vld [vmem:[#allocation10 + $0xa00] sm:$0xff]
    %v1959 = vld [vmem:[#allocation10 + $0xa08] sm:$0xff]
    %v1960 = vld [vmem:[#allocation10 + $0xa10] sm:$0xff]
    %v1961 = vld [vmem:[#allocation10 + $0xa18] sm:$0xff]
    %v1962 = vld [vmem:[#allocation10 + $0xa20] sm:$0xff]
    %v1963 = vld [vmem:[#allocation10 + $0xa28] sm:$0xff]
    %v1964 = vld [vmem:[#allocation10 + $0xa30] sm:$0xff]
    %v1965 = vld [vmem:[#allocation10 + $0xa38] sm:$0xff]
    %v1966 = vld [vmem:[#allocation10 + $0xa40] sm:$0xff]
    %v1967 = vld [vmem:[#allocation10 + $0xa48] sm:$0xff]
    %v1968 = vld [vmem:[#allocation10 + $0xa50] sm:$0xff]
    %v1969 = vld [vmem:[#allocation10 + $0xa58] sm:$0xff]
    %v1970 = vld [vmem:[#allocation10 + $0xa60] sm:$0xff]
    %v1971 = vld [vmem:[#allocation10 + $0xa68] sm:$0xff]
    %v1972 = vld [vmem:[#allocation10 + $0xa70] sm:$0xff]
    %v1973 = vld [vmem:[#allocation10 + $0xa78] sm:$0xff]
    %v1974 = vld [vmem:[#allocation10 + $0xa80] sm:$0xff]
    %v1975 = vld [vmem:[#allocation10 + $0xa88] sm:$0xff]
    %v1976 = vld [vmem:[#allocation10 + $0xa90] sm:$0xff]
    %v1977 = vld [vmem:[#allocation10 + $0xa98] sm:$0xff]
    %v1978 = vld [vmem:[#allocation10 + $0xaa0] sm:$0xff]
    %v1979 = vld [vmem:[#allocation10 + $0xaa8] sm:$0xff]
    %v1980 = vld [vmem:[#allocation10 + $0xab0] sm:$0xff]
    %v1981 = vld [vmem:[#allocation10 + $0xab8] sm:$0xff]
    %v1982 = vld [vmem:[#allocation10 + $0xac0] sm:$0xff]
    %v1983 = vld [vmem:[#allocation10 + $0xac8] sm:$0xff]
    %v1984 = vld [vmem:[#allocation10 + $0xad0] sm:$0xff]
    %v1985 = vld [vmem:[#allocation10 + $0xad8] sm:$0xff]
    %v1986 = vld [vmem:[#allocation10 + $0xae0] sm:$0xff]
    %v1987 = vld [vmem:[#allocation10 + $0xae8] sm:$0xff]
    %v1988 = vld [vmem:[#allocation10 + $0xaf0] sm:$0xff]
    %v1989 = vld [vmem:[#allocation10 + $0xaf8] sm:$0xff]
    %v1990 = vld [vmem:[#allocation10 + $0xb00] sm:$0xff]
    %v1991 = vld [vmem:[#allocation10 + $0xb08] sm:$0xff]
    %v1992 = vld [vmem:[#allocation10 + $0xb10] sm:$0xff]
    %v1993 = vld [vmem:[#allocation10 + $0xb18] sm:$0xff]
    %v1994 = vld [vmem:[#allocation10 + $0xb20] sm:$0xff]
    %v1995 = vld [vmem:[#allocation10 + $0xb28] sm:$0xff]
    %v1996 = vld [vmem:[#allocation10 + $0xb30] sm:$0xff]
    %v1997 = vld [vmem:[#allocation10 + $0xb38] sm:$0xff]
    %v1998 = vld [vmem:[#allocation10 + $0xb40] sm:$0xff]
    %v1999 = vld [vmem:[#allocation10 + $0xb48] sm:$0xff]
    %v2000 = vld [vmem:[#allocation10 + $0xb50] sm:$0xff]
    %v2001 = vld [vmem:[#allocation10 + $0xb58] sm:$0xff]
    %v2002 = vld [vmem:[#allocation10 + $0xb60] sm:$0xff]
    %v2003 = vld [vmem:[#allocation10 + $0xb68] sm:$0xff]
    %v2004 = vld [vmem:[#allocation10 + $0xb70] sm:$0xff]
    %v2005 = vld [vmem:[#allocation10 + $0xb78] sm:$0xff]
    %v2006 = vld [vmem:[#allocation10 + $0xb80] sm:$0xff]
    %v2007 = vld [vmem:[#allocation10 + $0xb88] sm:$0xff]
    %v2008 = vld [vmem:[#allocation10 + $0xb90] sm:$0xff]
    %v2009 = vld [vmem:[#allocation10 + $0xb98] sm:$0xff]
    %v2010 = vld [vmem:[#allocation10 + $0xba0] sm:$0xff]
    %v2011 = vld [vmem:[#allocation10 + $0xba8] sm:$0xff]
    %v2012 = vld [vmem:[#allocation10 + $0xbb0] sm:$0xff]
    %v2013 = vld [vmem:[#allocation10 + $0xbb8] sm:$0xff]
    %v2014 = vld [vmem:[#allocation10 + $0xbc0] sm:$0xff]
    %v2015 = vld [vmem:[#allocation10 + $0xbc8] sm:$0xff]
    %v2016 = vld [vmem:[#allocation10 + $0xbd0] sm:$0xff]
    %v2017 = vld [vmem:[#allocation10 + $0xbd8] sm:$0xff]
    %v2018 = vld [vmem:[#allocation10 + $0xbe0] sm:$0xff]
    %v2019 = vld [vmem:[#allocation10 + $0xbe8] sm:$0xff]
    %v2020 = vld [vmem:[#allocation10 + $0xbf0] sm:$0xff]
    %v2021 = vld [vmem:[#allocation10 + $0xbf8] sm:$0xff]
    %v2022 = vld [vmem:[#allocation10 + $0xc00] sm:$0xff]
    %v2023 = vld [vmem:[#allocation10 + $0xc08] sm:$0xff]
    %v2024 = vld [vmem:[#allocation10 + $0xc10] sm:$0xff]
    %v2025 = vld [vmem:[#allocation10 + $0xc18] sm:$0xff]
    %v2026 = vld [vmem:[#allocation10 + $0xc20] sm:$0xff]
    %v2027 = vld [vmem:[#allocation10 + $0xc28] sm:$0xff]
    %v2028 = vld [vmem:[#allocation10 + $0xc30] sm:$0xff]
    %v2029 = vld [vmem:[#allocation10 + $0xc38] sm:$0xff]
    %v2030 = vld [vmem:[#allocation10 + $0xc40] sm:$0xff]
    %v2031 = vld [vmem:[#allocation10 + $0xc48] sm:$0xff]
    %v2032 = vld [vmem:[#allocation10 + $0xc50] sm:$0xff]
    %v2033 = vld [vmem:[#allocation10 + $0xc58] sm:$0xff]
    %v2034 = vld [vmem:[#allocation10 + $0xc60] sm:$0xff]
    %v2035 = vld [vmem:[#allocation10 + $0xc68] sm:$0xff]
    %v2036 = vld [vmem:[#allocation10 + $0xc70] sm:$0xff]
    %v2037 = vld [vmem:[#allocation10 + $0xc78] sm:$0xff]
    %v2038 = vld [vmem:[#allocation10 + $0xc80] sm:$0xff]
    %v2039 = vld [vmem:[#allocation10 + $0xc88] sm:$0xff]
    %v2040 = vld [vmem:[#allocation10 + $0xc90] sm:$0xff]
    %v2041 = vld [vmem:[#allocation10 + $0xc98] sm:$0xff]
    %v2042 = vld [vmem:[#allocation10 + $0xca0] sm:$0xff]
    %v2043 = vld [vmem:[#allocation10 + $0xca8] sm:$0xff]
    %v2044 = vld [vmem:[#allocation10 + $0xcb0] sm:$0xff]
    %v2045 = vld [vmem:[#allocation10 + $0xcb8] sm:$0xff]
    %v2046 = vld [vmem:[#allocation10 + $0xcc0] sm:$0xff]
    %v2047 = vld [vmem:[#allocation10 + $0xcc8] sm:$0xff]
    %v2048 = vld [vmem:[#allocation10 + $0xcd0] sm:$0xff]
    %v2049 = vld [vmem:[#allocation10 + $0xcd8] sm:$0xff]
    %v2050 = vld [vmem:[#allocation10 + $0xce0] sm:$0xff]
    %v2051 = vld [vmem:[#allocation10 + $0xce8] sm:$0xff]
    %v2052 = vld [vmem:[#allocation10 + $0xcf0] sm:$0xff]
    %v2053 = vld [vmem:[#allocation10 + $0xcf8] sm:$0xff]
    %v2054 = vld [vmem:[#allocation10 + $0xd00] sm:$0xff]
    %v2055 = vld [vmem:[#allocation10 + $0xd08] sm:$0xff]
    %v2056 = vld [vmem:[#allocation10 + $0xd10] sm:$0xff]
    %v2057 = vld [vmem:[#allocation10 + $0xd18] sm:$0xff]
    %v2058 = vld [vmem:[#allocation10 + $0xd20] sm:$0xff]
    %v2059 = vld [vmem:[#allocation10 + $0xd28] sm:$0xff]
    %v2060 = vld [vmem:[#allocation10 + $0xd30] sm:$0xff]
    %v2061 = vld [vmem:[#allocation10 + $0xd38] sm:$0xff]
    %v2062 = vld [vmem:[#allocation10 + $0xd40] sm:$0xff]
    %v2063 = vld [vmem:[#allocation10 + $0xd48] sm:$0xff]
    %v2064 = vld [vmem:[#allocation10 + $0xd50] sm:$0xff]
    %v2065 = vld [vmem:[#allocation10 + $0xd58] sm:$0xff]
    %v2066 = vld [vmem:[#allocation10 + $0xd60] sm:$0xff]
    %v2067 = vld [vmem:[#allocation10 + $0xd68] sm:$0xff]
    %v2068 = vld [vmem:[#allocation10 + $0xd70] sm:$0xff]
    %v2069 = vld [vmem:[#allocation10 + $0xd78] sm:$0xff]
    %v2070 = vld [vmem:[#allocation10 + $0xd80] sm:$0xff]
    %v2071 = vld [vmem:[#allocation10 + $0xd88] sm:$0xff]
    %v2072 = vld [vmem:[#allocation10 + $0xd90] sm:$0xff]
    %v2073 = vld [vmem:[#allocation10 + $0xd98] sm:$0xff]
    %v2074 = vld [vmem:[#allocation10 + $0xda0] sm:$0xff]
    %v2075 = vld [vmem:[#allocation10 + $0xda8] sm:$0xff]
    %v2076 = vld [vmem:[#allocation10 + $0xdb0] sm:$0xff]
    %v2077 = vld [vmem:[#allocation10 + $0xdb8] sm:$0xff]
    %v2078 = vld [vmem:[#allocation10 + $0xdc0] sm:$0xff]
    %v2079 = vld [vmem:[#allocation10 + $0xdc8] sm:$0xff]
    %v2080 = vld [vmem:[#allocation10 + $0xdd0] sm:$0xff]
    %v2081 = vld [vmem:[#allocation10 + $0xdd8] sm:$0xff]
    %v2082 = vld [vmem:[#allocation10 + $0xde0] sm:$0xff]
    %v2083 = vld [vmem:[#allocation10 + $0xde8] sm:$0xff]
    %v2084 = vld [vmem:[#allocation10 + $0xdf0] sm:$0xff]
    %v2085 = vld [vmem:[#allocation10 + $0xdf8] sm:$0xff]
    %v2086 = vld [vmem:[#allocation10 + $0xe00] sm:$0xff]
    %v2087 = vld [vmem:[#allocation10 + $0xe08] sm:$0xff]
    %v2088 = vld [vmem:[#allocation10 + $0xe10] sm:$0xff]
    %v2089 = vld [vmem:[#allocation10 + $0xe18] sm:$0xff]
    %v2090 = vld [vmem:[#allocation10 + $0xe20] sm:$0xff]
    %v2091 = vld [vmem:[#allocation10 + $0xe28] sm:$0xff]
    %v2092 = vld [vmem:[#allocation10 + $0xe30] sm:$0xff]
    %v2093 = vld [vmem:[#allocation10 + $0xe38] sm:$0xff]
    %v2094 = vld [vmem:[#allocation10 + $0xe40] sm:$0xff]
    %v2095 = vld [vmem:[#allocation10 + $0xe48] sm:$0xff]
    %v2096 = vld [vmem:[#allocation10 + $0xe50] sm:$0xff]
    %v2097 = vld [vmem:[#allocation10 + $0xe58] sm:$0xff]
    %v2098 = vld [vmem:[#allocation10 + $0xe60] sm:$0xff]
    %v2099 = vld [vmem:[#allocation10 + $0xe68] sm:$0xff]
    %v2100 = vld [vmem:[#allocation10 + $0xe70] sm:$0xff]
    %v2101 = vld [vmem:[#allocation10 + $0xe78] sm:$0xff]
    %v2102 = vld [vmem:[#allocation10 + $0xe80] sm:$0xff]
    %v2103 = vld [vmem:[#allocation10 + $0xe88] sm:$0xff]
    %v2104 = vld [vmem:[#allocation10 + $0xe90] sm:$0xff]
    %v2105 = vld [vmem:[#allocation10 + $0xe98] sm:$0xff]
    %v2106 = vld [vmem:[#allocation10 + $0xea0] sm:$0xff]
    %v2107 = vld [vmem:[#allocation10 + $0xea8] sm:$0xff]
    %v2108 = vld [vmem:[#allocation10 + $0xeb0] sm:$0xff]
    %v2109 = vld [vmem:[#allocation10 + $0xeb8] sm:$0xff]
    %v2110 = vld [vmem:[#allocation10 + $0xec0] sm:$0xff]
    %v2111 = vld [vmem:[#allocation10 + $0xec8] sm:$0xff]
    %v2112 = vld [vmem:[#allocation10 + $0xed0] sm:$0xff]
    %v2113 = vld [vmem:[#allocation10 + $0xed8] sm:$0xff]
    %v2114 = vld [vmem:[#allocation10 + $0xee0] sm:$0xff]
    %v2115 = vld [vmem:[#allocation10 + $0xee8] sm:$0xff]
    %v2116 = vld [vmem:[#allocation10 + $0xef0] sm:$0xff]
    %v2117 = vld [vmem:[#allocation10 + $0xef8] sm:$0xff]
    %v2118 = vld [vmem:[#allocation10 + $0xf00] sm:$0xff]
    %v2119 = vld [vmem:[#allocation10 + $0xf08] sm:$0xff]
    %v2120 = vld [vmem:[#allocation10 + $0xf10] sm:$0xff]
    %v2121 = vld [vmem:[#allocation10 + $0xf18] sm:$0xff]
    %v2122 = vld [vmem:[#allocation10 + $0xf20] sm:$0xff]
    %v2123 = vld [vmem:[#allocation10 + $0xf28] sm:$0xff]
    %v2124 = vld [vmem:[#allocation10 + $0xf30] sm:$0xff]
    %v2125 = vld [vmem:[#allocation10 + $0xf38] sm:$0xff]
    %v2126 = vld [vmem:[#allocation10 + $0xf40] sm:$0xff]
    %v2127 = vld [vmem:[#allocation10 + $0xf48] sm:$0xff]
    %v2128 = vld [vmem:[#allocation10 + $0xf50] sm:$0xff]
    %v2129 = vld [vmem:[#allocation10 + $0xf58] sm:$0xff]
    %v2130 = vld [vmem:[#allocation10 + $0xf60] sm:$0xff]
    %v2131 = vld [vmem:[#allocation10 + $0xf68] sm:$0xff]
    %v2132 = vld [vmem:[#allocation10 + $0xf70] sm:$0xff]
    %v2133 = vld [vmem:[#allocation10 + $0xf78] sm:$0xff]
    %v2134 = vld [vmem:[#allocation10 + $0xf80] sm:$0xff]
    %v2135 = vld [vmem:[#allocation10 + $0xf88] sm:$0xff]
    %v2136 = vld [vmem:[#allocation10 + $0xf90] sm:$0xff]
    %v2137 = vld [vmem:[#allocation10 + $0xf98] sm:$0xff]
    %v2138 = vld [vmem:[#allocation10 + $0xfa0] sm:$0xff]
    %v2139 = vld [vmem:[#allocation10 + $0xfa8] sm:$0xff]
    %v2140 = vld [vmem:[#allocation10 + $0xfb0] sm:$0xff]
    %v2141 = vld [vmem:[#allocation10 + $0xfb8] sm:$0xff]
    %v2142 = vld [vmem:[#allocation10 + $0xfc0] sm:$0xff]
    %v2143 = vld [vmem:[#allocation10 + $0xfc8] sm:$0xff]
    %v2144 = vld [vmem:[#allocation10 + $0xfd0] sm:$0xff]
    %v2145 = vld [vmem:[#allocation10 + $0xfd8] sm:$0xff]
    %v2146 = vld [vmem:[#allocation10 + $0xfe0] sm:$0xff]
    %v2147 = vld [vmem:[#allocation10 + $0xfe8] sm:$0xff]
    %v2148 = vld [vmem:[#allocation10 + $0xff0] sm:$0xff]
    %v2149 = vld [vmem:[#allocation10 + $0xff8] sm:$0xff]
    %v2150 = vld [vmem:[#allocation10 + $0x1000] sm:$0xff]
    %v2151 = vld [vmem:[#allocation10 + $0x1008] sm:$0xff]
    %v2152 = vld [vmem:[#allocation10 + $0x1010] sm:$0xff]
    %v2153 = vld [vmem:[#allocation10 + $0x1018] sm:$0xff]
    %v2154 = vld [vmem:[#allocation10 + $0x1020] sm:$0xff]
    %v2155 = vld [vmem:[#allocation10 + $0x1028] sm:$0xff]
    %v2156 = vld [vmem:[#allocation10 + $0x1030] sm:$0xff]
    %v2157 = vld [vmem:[#allocation10 + $0x1038] sm:$0xff]
    %v2158 = vld [vmem:[#allocation10 + $0x1040] sm:$0xff]
    %v2159 = vld [vmem:[#allocation10 + $0x1048] sm:$0xff]
    %v2160 = vld [vmem:[#allocation10 + $0x1050] sm:$0xff]
    %v2161 = vld [vmem:[#allocation10 + $0x1058] sm:$0xff]
    %v2162 = vld [vmem:[#allocation10 + $0x1060] sm:$0xff]
    %v2163 = vld [vmem:[#allocation10 + $0x1068] sm:$0xff]
    %v2164 = vld [vmem:[#allocation10 + $0x1070] sm:$0xff]
    %v2165 = vld [vmem:[#allocation10 + $0x1078] sm:$0xff]
    %v2166 = vld [vmem:[#allocation10 + $0x1080] sm:$0xff]
    %v2167 = vld [vmem:[#allocation10 + $0x1088] sm:$0xff]
    %v2168 = vld [vmem:[#allocation10 + $0x1090] sm:$0xff]
    %v2169 = vld [vmem:[#allocation10 + $0x1098] sm:$0xff]
    %v2170 = vld [vmem:[#allocation10 + $0x10a0] sm:$0xff]
    %v2171 = vld [vmem:[#allocation10 + $0x10a8] sm:$0xff]
    %v2172 = vld [vmem:[#allocation10 + $0x10b0] sm:$0xff]
    %v2173 = vld [vmem:[#allocation10 + $0x10b8] sm:$0xff]
    %v2174 = vld [vmem:[#allocation10 + $0x10c0] sm:$0xff]
    %v2175 = vld [vmem:[#allocation10 + $0x10c8] sm:$0xff]
    %v2176 = vld [vmem:[#allocation10 + $0x10d0] sm:$0xff]
    %v2177 = vld [vmem:[#allocation10 + $0x10d8] sm:$0xff]
    %v2178 = vld [vmem:[#allocation10 + $0x10e0] sm:$0xff]
    %v2179 = vld [vmem:[#allocation10 + $0x10e8] sm:$0xff]
    %v2180 = vld [vmem:[#allocation10 + $0x10f0] sm:$0xff]
    %v2181 = vld [vmem:[#allocation10 + $0x10f8] sm:$0xff]
    %v2182 = vld [vmem:[#allocation10 + $0x1100] sm:$0xff]
    %v2183 = vld [vmem:[#allocation10 + $0x1108] sm:$0xff]
    %v2184 = vld [vmem:[#allocation10 + $0x1110] sm:$0xff]
    %v2185 = vld [vmem:[#allocation10 + $0x1118] sm:$0xff]
    %v2186 = vld [vmem:[#allocation10 + $0x1120] sm:$0xff]
    %v2187 = vld [vmem:[#allocation10 + $0x1128] sm:$0xff]
    %v2188 = vld [vmem:[#allocation10 + $0x1130] sm:$0xff]
    %v2189 = vld [vmem:[#allocation10 + $0x1138] sm:$0xff]
    %v2190 = vld [vmem:[#allocation10 + $0x1140] sm:$0xff]
    %v2191 = vld [vmem:[#allocation10 + $0x1148] sm:$0xff]
    %v2192 = vld [vmem:[#allocation10 + $0x1150] sm:$0xff]
    %v2193 = vld [vmem:[#allocation10 + $0x1158] sm:$0xff]
    %v2194 = vld [vmem:[#allocation10 + $0x1160] sm:$0xff]
    %v2195 = vld [vmem:[#allocation10 + $0x1168] sm:$0xff]
    %v2196 = vld [vmem:[#allocation10 + $0x1170] sm:$0xff]
    %v2197 = vld [vmem:[#allocation10 + $0x1178] sm:$0xff]
    %v2198 = vld [vmem:[#allocation10 + $0x1180] sm:$0xff]
    %v2199 = vld [vmem:[#allocation10 + $0x1188] sm:$0xff]
    %v2200 = vld [vmem:[#allocation10 + $0x1190] sm:$0xff]
    %v2201 = vld [vmem:[#allocation10 + $0x1198] sm:$0xff]
    %v2202 = vld [vmem:[#allocation10 + $0x11a0] sm:$0xff]
    %v2203 = vld [vmem:[#allocation10 + $0x11a8] sm:$0xff]
    %v2204 = vld [vmem:[#allocation10 + $0x11b0] sm:$0xff]
    %v2205 = vld [vmem:[#allocation10 + $0x11b8] sm:$0xff]
    %v2206 = vld [vmem:[#allocation10 + $0x11c0] sm:$0xff]
    %v2207 = vld [vmem:[#allocation10 + $0x11c8] sm:$0xff]
    %v2208 = vld [vmem:[#allocation10 + $0x11d0] sm:$0xff]
    %v2209 = vld [vmem:[#allocation10 + $0x11d8] sm:$0xff]
    %v2210 = vld [vmem:[#allocation10 + $0x11e0] sm:$0xff]
    %v2211 = vld [vmem:[#allocation10 + $0x11e8] sm:$0xff]
    %v2212 = vld [vmem:[#allocation10 + $0x11f0] sm:$0xff]
    %v2213 = vld [vmem:[#allocation10 + $0x11f8] sm:$0xff]
    %v2214 = vperm.slane %v187, 3
    %v2215 = vperm.slane %v188, 3
    %2216 = vmatpush.msra.mxu0 %v1668
    %2217 = vmatpush.msra.mxu0 %v1666
    %2218 = vmatpush.msra.mxu0 %v1664
    %2219 = vmatpush.msra.mxu0 %v1662
    %2220 = vmatpush.msra.mxu0 %v1660
    %2221 = vmatpush.msra.mxu0 %v1658
    %2222 = vmatpush.msra.mxu0 %v1656
    %2223 = vmatpush.msra.mxu0 %v1654
    %2224 = vmatpush.msra.mxu0 %v1652
    %2225 = vmatpush.msra.mxu0 %v1650
    %2226 = vmatpush.msra.mxu0 %v1648
    %2227 = vmatpush.msra.mxu0 %v1646
    %2228 = vmatpush.msra.mxu0 %v1644
    %2229 = vmatpush.msra.mxu0 %v1642
    %2230 = vmatpush.msra.mxu0 %v1640
    %2231 = vmatpush.msra.mxu0 %v1638
    %2232 = vmatmul.f32.gmra.mxu0 %v1475
    %v2233 = vpop.f32.mrf.mxu0
    %v2234 = vadd.f32 %v2214, %v2233
    %2235 = vmatmul.f32.gmra.mxu0 %v1477
    %v2236 = vpop.f32.mrf.mxu0
    %v2237 = vadd.f32 %v2214, %v2236
    %2238 = vmatmul.f32.gmra.mxu0 %v1479
    %v2239 = vpop.f32.mrf.mxu0
    %2240 = vmatmul.f32.gmra.mxu0 %v1481
    %v2241 = vpop.f32.mrf.mxu0
    %2242 = vmatmul.f32.gmra.mxu0 %v1483
    %v2243 = vpop.f32.mrf.mxu0
    %v2244 = vadd.f32 %v2214, %v2243
    %2245 = vmatmul.f32.gmra.mxu0 %v1485
    %v2246 = vpop.f32.mrf.mxu0
    %v2247 = vadd.f32 %v2214, %v2246
    %2248 = vdwg.mxu0
    %2249 = vmatpush.msra.mxu0 %v1700
    %2250 = vmatpush.msra.mxu0 %v1698
    %2251 = vmatpush.msra.mxu0 %v1696
    %2252 = vmatpush.msra.mxu0 %v1694
    %2253 = vmatpush.msra.mxu0 %v1692
    %2254 = vmatpush.msra.mxu0 %v1690
    %2255 = vmatpush.msra.mxu0 %v1688
    %2256 = vmatpush.msra.mxu0 %v1686
    %2257 = vmatpush.msra.mxu0 %v1684
    %2258 = vmatpush.msra.mxu0 %v1682
    %2259 = vmatpush.msra.mxu0 %v1680
    %2260 = vmatpush.msra.mxu0 %v1678
    %2261 = vmatpush.msra.mxu0 %v1676
    %2262 = vmatpush.msra.mxu0 %v1674
    %2263 = vmatpush.msra.mxu0 %v1672
    %2264 = vmatpush.msra.mxu0 %v1670
    %2265 = vmatmul.f32.gmra.mxu0 %v1476
    %v2266 = vpop.f32.mrf.mxu0
    %v2267 = vadd.f32 %v2234, %v2266
    %2268 = vmatmul.f32.gmra.mxu0 %v1478
    %v2269 = vpop.f32.mrf.mxu0
    %v2270 = vadd.f32 %v2237, %v2269
    %2271 = vmatmul.f32.gmra.mxu0 %v1480
    %v2272 = vpop.f32.mrf.mxu0
    %2273 = vmatmul.f32.gmra.mxu0 %v1482
    %v2274 = vpop.f32.mrf.mxu0
    %2275 = vmatmul.f32.gmra.mxu0 %v1484
    %v2276 = vpop.f32.mrf.mxu0
    %v2277 = vadd.f32 %v2244, %v2276
    %2278 = vmatmul.f32.gmra.mxu0 %v1486
    %v2279 = vpop.f32.mrf.mxu0
    %v2280 = vadd.f32 %v2247, %v2279
    %2281 = vdwg.mxu0
    %2282 = vmatpush.msra.mxu0 %v1732
    %2283 = vmatpush.msra.mxu0 %v1730
    %2284 = vmatpush.msra.mxu0 %v1728
    %2285 = vmatpush.msra.mxu0 %v1726
    %2286 = vmatpush.msra.mxu0 %v1724
    %2287 = vmatpush.msra.mxu0 %v1722
    %2288 = vmatpush.msra.mxu0 %v1720
    %2289 = vmatpush.msra.mxu0 %v1718
    %2290 = vmatpush.msra.mxu0 %v1716
    %2291 = vmatpush.msra.mxu0 %v1714
    %2292 = vmatpush.msra.mxu0 %v1712
    %2293 = vmatpush.msra.mxu0 %v1710
    %2294 = vmatpush.msra.mxu0 %v1708
    %2295 = vmatpush.msra.mxu0 %v1706
    %2296 = vmatpush.msra.mxu0 %v1704
    %2297 = vmatpush.msra.mxu0 %v1702
    %2298 = vmatmul.f32.gmra.mxu0 %v1505
    %v2299 = vpop.f32.mrf.mxu0
    %v2300 = vadd.f32 %v2267, %v2299
    %2301 = vmatmul.f32.gmra.mxu0 %v1510
    %v2302 = vpop.f32.mrf.mxu0
    %v2303 = vadd.f32 %v2270, %v2302
    %2304 = vmatmul.f32.gmra.mxu0 %v1514
    %v2305 = vpop.f32.mrf.mxu0
    %2306 = vmatmul.f32.gmra.mxu0 %v1518
    %v2307 = vpop.f32.mrf.mxu0
    %2308 = vmatmul.f32.gmra.mxu0 %v1522
    %v2309 = vpop.f32.mrf.mxu0
    %v2310 = vadd.f32 %v2277, %v2309
    %2311 = vmatmul.f32.gmra.mxu0 %v1521
    %v2312 = vpop.f32.mrf.mxu0
    %v2313 = vadd.f32 %v2280, %v2312
    %2314 = vdwg.mxu0
    %2315 = vmatpush.msra.mxu0 %v1764
    %2316 = vmatpush.msra.mxu0 %v1762
    %2317 = vmatpush.msra.mxu0 %v1760
    %2318 = vmatpush.msra.mxu0 %v1758
    %2319 = vmatpush.msra.mxu0 %v1756
    %2320 = vmatpush.msra.mxu0 %v1754
    %2321 = vmatpush.msra.mxu0 %v1752
    %2322 = vmatpush.msra.mxu0 %v1750
    %2323 = vmatpush.msra.mxu0 %v1748
    %2324 = vmatpush.msra.mxu0 %v1746
    %2325 = vmatpush.msra.mxu0 %v1744
    %2326 = vmatpush.msra.mxu0 %v1742
    %2327 = vmatpush.msra.mxu0 %v1740
    %2328 = vmatpush.msra.mxu0 %v1738
    %2329 = vmatpush.msra.mxu0 %v1736
    %2330 = vmatpush.msra.mxu0 %v1734
    %2331 = vmatmul.f32.gmra.mxu0 %v1508
    %v2332 = vpop.f32.mrf.mxu0
    %v2333 = vadd.f32 %v2300, %v2332
    %2334 = vmatmul.f32.gmra.mxu0 %v1512
    %v2335 = vpop.f32.mrf.mxu0
    %v2336 = vadd.f32 %v2303, %v2335
    %2337 = vmatmul.f32.gmra.mxu0 %v1516
    %v2338 = vpop.f32.mrf.mxu0
    %2339 = vmatmul.f32.gmra.mxu0 %v1520
    %v2340 = vpop.f32.mrf.mxu0
    %2341 = vmatmul.f32.gmra.mxu0 %v1524
    %v2342 = vpop.f32.mrf.mxu0
    %v2343 = vadd.f32 %v2310, %v2342
    %2344 = vmatmul.f32.gmra.mxu0 %v1523
    %v2345 = vpop.f32.mrf.mxu0
    %v2346 = vadd.f32 %v2313, %v2345
    %2347 = vdwg.mxu0
    %2348 = vmatpush.msra.mxu0 %v1796
    %2349 = vmatpush.msra.mxu0 %v1794
    %2350 = vmatpush.msra.mxu0 %v1792
    %2351 = vmatpush.msra.mxu0 %v1790
    %2352 = vmatpush.msra.mxu0 %v1788
    %2353 = vmatpush.msra.mxu0 %v1786
    %2354 = vmatpush.msra.mxu0 %v1784
    %2355 = vmatpush.msra.mxu0 %v1782
    %2356 = vmatpush.msra.mxu0 %v1780
    %2357 = vmatpush.msra.mxu0 %v1778
    %2358 = vmatpush.msra.mxu0 %v1776
    %2359 = vmatpush.msra.mxu0 %v1774
    %2360 = vmatpush.msra.mxu0 %v1772
    %2361 = vmatpush.msra.mxu0 %v1770
    %2362 = vmatpush.msra.mxu0 %v1768
    %2363 = vmatpush.msra.mxu0 %v1766
    %2364 = vmatmul.f32.gmra.mxu0 %v1542
    %v2365 = vpop.f32.mrf.mxu0
    %v2366 = vadd.f32 %v2333, %v2365
    %2367 = vmatmul.f32.gmra.mxu0 %v1547
    %v2368 = vpop.f32.mrf.mxu0
    %v2369 = vadd.f32 %v2336, %v2368
    %2370 = vmatmul.f32.gmra.mxu0 %v1551
    %v2371 = vpop.f32.mrf.mxu0
    %2372 = vmatmul.f32.gmra.mxu0 %v1555
    %v2373 = vpop.f32.mrf.mxu0
    %2374 = vmatmul.f32.gmra.mxu0 %v1559
    %v2375 = vpop.f32.mrf.mxu0
    %v2376 = vadd.f32 %v2343, %v2375
    %2377 = vmatmul.f32.gmra.mxu0 %v1563
    %v2378 = vpop.f32.mrf.mxu0
    %v2379 = vadd.f32 %v2346, %v2378
    %2380 = vdwg.mxu0
    %2381 = vmatpush.msra.mxu0 %v1828
    %2382 = vmatpush.msra.mxu0 %v1826
    %2383 = vmatpush.msra.mxu0 %v1824
    %2384 = vmatpush.msra.mxu0 %v1822
    %2385 = vmatpush.msra.mxu0 %v1820
    %2386 = vmatpush.msra.mxu0 %v1818
    %2387 = vmatpush.msra.mxu0 %v1816
    %2388 = vmatpush.msra.mxu0 %v1814
    %2389 = vmatpush.msra.mxu0 %v1812
    %2390 = vmatpush.msra.mxu0 %v1810
    %2391 = vmatpush.msra.mxu0 %v1808
    %2392 = vmatpush.msra.mxu0 %v1806
    %2393 = vmatpush.msra.mxu0 %v1804
    %2394 = vmatpush.msra.mxu0 %v1802
    %2395 = vmatpush.msra.mxu0 %v1800
    %2396 = vmatpush.msra.mxu0 %v1798
    %2397 = vmatmul.f32.gmra.mxu0 %v1545
    %v2398 = vpop.f32.mrf.mxu0
    %v2399 = vadd.f32 %v2366, %v2398
    %2400 = vmatmul.f32.gmra.mxu0 %v1549
    %v2401 = vpop.f32.mrf.mxu0
    %v2402 = vadd.f32 %v2369, %v2401
    %2403 = vmatmul.f32.gmra.mxu0 %v1553
    %v2404 = vpop.f32.mrf.mxu0
    %2405 = vmatmul.f32.gmra.mxu0 %v1557
    %v2406 = vpop.f32.mrf.mxu0
    %2407 = vmatmul.f32.gmra.mxu0 %v1561
    %v2408 = vpop.f32.mrf.mxu0
    %v2409 = vadd.f32 %v2376, %v2408
    %2410 = vmatmul.f32.gmra.mxu0 %v1565
    %v2411 = vpop.f32.mrf.mxu0
    %v2412 = vadd.f32 %v2379, %v2411
    %2413 = vdwg.mxu0
    %2414 = vmatpush.msra.mxu0 %v1860
    %2415 = vmatpush.msra.mxu0 %v1858
    %2416 = vmatpush.msra.mxu0 %v1856
    %2417 = vmatpush.msra.mxu0 %v1854
    %2418 = vmatpush.msra.mxu0 %v1852
    %2419 = vmatpush.msra.mxu0 %v1850
    %2420 = vmatpush.msra.mxu0 %v1848
    %2421 = vmatpush.msra.mxu0 %v1846
    %2422 = vmatpush.msra.mxu0 %v1844
    %2423 = vmatpush.msra.mxu0 %v1842
    %2424 = vmatpush.msra.mxu0 %v1840
    %2425 = vmatpush.msra.mxu0 %v1838
    %2426 = vmatpush.msra.mxu0 %v1836
    %2427 = vmatpush.msra.mxu0 %v1834
    %2428 = vmatpush.msra.mxu0 %v1832
    %2429 = vmatpush.msra.mxu0 %v1830
    %2430 = vmatmul.f32.gmra.mxu0 %v1580
    %v2431 = vpop.f32.mrf.mxu0
    %v2432 = vadd.f32 %v2399, %v2431
    %2433 = vmatmul.f32.gmra.mxu0 %v1585
    %v2434 = vpop.f32.mrf.mxu0
    %v2435 = vadd.f32 %v2402, %v2434
    %2436 = vmatmul.f32.gmra.mxu0 %v1589
    %v2437 = vpop.f32.mrf.mxu0
    %2438 = vmatmul.f32.gmra.mxu0 %v1593
    %v2439 = vpop.f32.mrf.mxu0
    %2440 = vmatmul.f32.gmra.mxu0 %v1597
    %v2441 = vpop.f32.mrf.mxu0
    %v2442 = vadd.f32 %v2409, %v2441
    %2443 = vmatmul.f32.gmra.mxu0 %v1601
    %v2444 = vpop.f32.mrf.mxu0
    %v2445 = vadd.f32 %v2412, %v2444
    %2446 = vdwg.mxu0
    %2447 = vmatpush.msra.mxu0 %v1892
    %2448 = vmatpush.msra.mxu0 %v1890
    %2449 = vmatpush.msra.mxu0 %v1888
    %2450 = vmatpush.msra.mxu0 %v1886
    %2451 = vmatpush.msra.mxu0 %v1884
    %2452 = vmatpush.msra.mxu0 %v1882
    %2453 = vmatpush.msra.mxu0 %v1880
    %2454 = vmatpush.msra.mxu0 %v1878
    %2455 = vmatpush.msra.mxu0 %v1876
    %2456 = vmatpush.msra.mxu0 %v1874
    %2457 = vmatpush.msra.mxu0 %v1872
    %2458 = vmatpush.msra.mxu0 %v1870
    %2459 = vmatpush.msra.mxu0 %v1868
    %2460 = vmatpush.msra.mxu0 %v1866
    %2461 = vmatpush.msra.mxu0 %v1864
    %2462 = vmatpush.msra.mxu0 %v1862
    %2463 = vmatmul.f32.gmra.mxu0 %v1583
    %v2464 = vpop.f32.mrf.mxu0
    %v2465 = vadd.f32 %v2432, %v2464
    %2466 = vmatmul.f32.gmra.mxu0 %v1587
    %v2467 = vpop.f32.mrf.mxu0
    %v2468 = vadd.f32 %v2435, %v2467
    %2469 = vmatmul.f32.gmra.mxu0 %v1591
    %v2470 = vpop.f32.mrf.mxu0
    %2471 = vmatmul.f32.gmra.mxu0 %v1595
    %v2472 = vpop.f32.mrf.mxu0
    %2473 = vmatmul.f32.gmra.mxu0 %v1599
    %v2474 = vpop.f32.mrf.mxu0
    %v2475 = vadd.f32 %v2442, %v2474
    %2476 = vmatmul.f32.gmra.mxu0 %v1603
    %v2477 = vpop.f32.mrf.mxu0
    %v2478 = vadd.f32 %v2445, %v2477
    %2479 = vdwg.mxu0
    %2480 = vmatpush.msra.mxu0 %v1924
    %2481 = vmatpush.msra.mxu0 %v1922
    %2482 = vmatpush.msra.mxu0 %v1920
    %2483 = vmatpush.msra.mxu0 %v1918
    %2484 = vmatpush.msra.mxu0 %v1916
    %2485 = vmatpush.msra.mxu0 %v1914
    %2486 = vmatpush.msra.mxu0 %v1912
    %2487 = vmatpush.msra.mxu0 %v1910
    %2488 = vmatpush.msra.mxu0 %v1908
    %2489 = vmatpush.msra.mxu0 %v1906
    %2490 = vmatpush.msra.mxu0 %v1904
    %2491 = vmatpush.msra.mxu0 %v1902
    %2492 = vmatpush.msra.mxu0 %v1900
    %2493 = vmatpush.msra.mxu0 %v1898
    %2494 = vmatpush.msra.mxu0 %v1896
    %2495 = vmatpush.msra.mxu0 %v1894
    %2496 = vmatmul.f32.gmra.mxu0 %v1477
    %v2497 = vpop.f32.mrf.mxu0
    %v2498 = vadd.f32 %v2465, %v2497
    %2499 = vmatmul.f32.gmra.mxu0 %v1479
    %v2500 = vpop.f32.mrf.mxu0
    %v2501 = vadd.f32 %v2468, %v2500
    %2502 = vmatmul.f32.gmra.mxu0 %v1481
    %v2503 = vpop.f32.mrf.mxu0
    %2504 = vmatmul.f32.gmra.mxu0 %v1483
    %v2505 = vpop.f32.mrf.mxu0
    %2506 = vmatmul.f32.gmra.mxu0 %v1485
    %v2507 = vpop.f32.mrf.mxu0
    %v2508 = vadd.f32 %v2475, %v2507
    %2509 = vmatmul.f32.gmra.mxu0 %v1487
    %v2510 = vpop.f32.mrf.mxu0
    %v2511 = vadd.f32 %v2478, %v2510
    %2512 = vdwg.mxu0
    %2513 = vmatpush.msra.mxu0 %v1956
    %2514 = vmatpush.msra.mxu0 %v1954
    %2515 = vmatpush.msra.mxu0 %v1952
    %2516 = vmatpush.msra.mxu0 %v1950
    %2517 = vmatpush.msra.mxu0 %v1948
    %2518 = vmatpush.msra.mxu0 %v1946
    %2519 = vmatpush.msra.mxu0 %v1944
    %2520 = vmatpush.msra.mxu0 %v1942
    %2521 = vmatpush.msra.mxu0 %v1940
    %2522 = vmatpush.msra.mxu0 %v1938
    %2523 = vmatpush.msra.mxu0 %v1936
    %2524 = vmatpush.msra.mxu0 %v1934
    %2525 = vmatpush.msra.mxu0 %v1932
    %2526 = vmatpush.msra.mxu0 %v1930
    %2527 = vmatpush.msra.mxu0 %v1928
    %2528 = vmatpush.msra.mxu0 %v1926
    %2529 = vmatmul.f32.gmra.mxu0 %v1478
    %v2530 = vpop.f32.mrf.mxu0
    %v2531 = vadd.f32 %v2498, %v2530
    %2532 = vmatmul.f32.gmra.mxu0 %v1480
    %v2533 = vpop.f32.mrf.mxu0
    %v2534 = vadd.f32 %v2501, %v2533
    %2535 = vmatmul.f32.gmra.mxu0 %v1482
    %v2536 = vpop.f32.mrf.mxu0
    %2537 = vmatmul.f32.gmra.mxu0 %v1484
    %v2538 = vpop.f32.mrf.mxu0
    %2539 = vmatmul.f32.gmra.mxu0 %v1486
    %v2540 = vpop.f32.mrf.mxu0
    %v2541 = vadd.f32 %v2508, %v2540
    %2542 = vmatmul.f32.gmra.mxu0 %v1488
    %v2543 = vpop.f32.mrf.mxu0
    %v2544 = vadd.f32 %v2511, %v2543
    %2545 = vdwg.mxu0
    %2546 = vmatpush.msra.mxu0 %v1988
    %2547 = vmatpush.msra.mxu0 %v1986
    %2548 = vmatpush.msra.mxu0 %v1984
    %2549 = vmatpush.msra.mxu0 %v1982
    %2550 = vmatpush.msra.mxu0 %v1980
    %2551 = vmatpush.msra.mxu0 %v1978
    %2552 = vmatpush.msra.mxu0 %v1976
    %2553 = vmatpush.msra.mxu0 %v1974
    %2554 = vmatpush.msra.mxu0 %v1972
    %2555 = vmatpush.msra.mxu0 %v1970
    %2556 = vmatpush.msra.mxu0 %v1968
    %2557 = vmatpush.msra.mxu0 %v1966
    %2558 = vmatpush.msra.mxu0 %v1964
    %2559 = vmatpush.msra.mxu0 %v1962
    %2560 = vmatpush.msra.mxu0 %v1960
    %2561 = vmatpush.msra.mxu0 %v1958
    %2562 = vmatmul.f32.gmra.mxu0 %v1510
    %v2563 = vpop.f32.mrf.mxu0
    %v2564 = vadd.f32 %v2531, %v2563
    %2565 = vmatmul.f32.gmra.mxu0 %v1514
    %v2566 = vpop.f32.mrf.mxu0
    %v2567 = vadd.f32 %v2534, %v2566
    %2568 = vmatmul.f32.gmra.mxu0 %v1518
    %v2569 = vpop.f32.mrf.mxu0
    %2570 = vmatmul.f32.gmra.mxu0 %v1522
    %v2571 = vpop.f32.mrf.mxu0
    %2572 = vmatmul.f32.gmra.mxu0 %v1617
    %v2573 = vpop.f32.mrf.mxu0
    %v2574 = vadd.f32 %v2541, %v2573
    %2575 = vmatmul.f32.gmra.mxu0 %v1616
    %v2576 = vpop.f32.mrf.mxu0
    %v2577 = vadd.f32 %v2544, %v2576
    %2578 = vdwg.mxu0
    %2579 = vmatpush.msra.mxu0 %v2020
    %2580 = vmatpush.msra.mxu0 %v2018
    %2581 = vmatpush.msra.mxu0 %v2016
    %2582 = vmatpush.msra.mxu0 %v2014
    %2583 = vmatpush.msra.mxu0 %v2012
    %2584 = vmatpush.msra.mxu0 %v2010
    %2585 = vmatpush.msra.mxu0 %v2008
    %2586 = vmatpush.msra.mxu0 %v2006
    %2587 = vmatpush.msra.mxu0 %v2004
    %2588 = vmatpush.msra.mxu0 %v2002
    %2589 = vmatpush.msra.mxu0 %v2000
    %2590 = vmatpush.msra.mxu0 %v1998
    %2591 = vmatpush.msra.mxu0 %v1996
    %2592 = vmatpush.msra.mxu0 %v1994
    %2593 = vmatpush.msra.mxu0 %v1992
    %2594 = vmatpush.msra.mxu0 %v1990
    %2595 = vmatmul.f32.gmra.mxu0 %v1512
    %v2596 = vpop.f32.mrf.mxu0
    %v2597 = vadd.f32 %v2564, %v2596
    %2598 = vmatmul.f32.gmra.mxu0 %v1516
    %v2599 = vpop.f32.mrf.mxu0
    %v2600 = vadd.f32 %v2567, %v2599
    %2601 = vmatmul.f32.gmra.mxu0 %v1520
    %v2602 = vpop.f32.mrf.mxu0
    %2603 = vmatmul.f32.gmra.mxu0 %v1524
    %v2604 = vpop.f32.mrf.mxu0
    %2605 = vmatmul.f32.gmra.mxu0 %v1619
    %v2606 = vpop.f32.mrf.mxu0
    %v2607 = vadd.f32 %v2574, %v2606
    %2608 = vmatmul.f32.gmra.mxu0 %v1618
    %v2609 = vpop.f32.mrf.mxu0
    %v2610 = vadd.f32 %v2577, %v2609
    %2611 = vdwg.mxu0
    %2612 = vmatpush.msra.mxu0 %v2052
    %2613 = vmatpush.msra.mxu0 %v2050
    %2614 = vmatpush.msra.mxu0 %v2048
    %2615 = vmatpush.msra.mxu0 %v2046
    %2616 = vmatpush.msra.mxu0 %v2044
    %2617 = vmatpush.msra.mxu0 %v2042
    %2618 = vmatpush.msra.mxu0 %v2040
    %2619 = vmatpush.msra.mxu0 %v2038
    %2620 = vmatpush.msra.mxu0 %v2036
    %2621 = vmatpush.msra.mxu0 %v2034
    %2622 = vmatpush.msra.mxu0 %v2032
    %2623 = vmatpush.msra.mxu0 %v2030
    %2624 = vmatpush.msra.mxu0 %v2028
    %2625 = vmatpush.msra.mxu0 %v2026
    %2626 = vmatpush.msra.mxu0 %v2024
    %2627 = vmatpush.msra.mxu0 %v2022
    %2628 = vmatmul.f32.gmra.mxu0 %v1547
    %v2629 = vpop.f32.mrf.mxu0
    %v2630 = vadd.f32 %v2597, %v2629
    %2631 = vmatmul.f32.gmra.mxu0 %v1551
    %v2632 = vpop.f32.mrf.mxu0
    %v2633 = vadd.f32 %v2600, %v2632
    %2634 = vmatmul.f32.gmra.mxu0 %v1555
    %v2635 = vpop.f32.mrf.mxu0
    %2636 = vmatmul.f32.gmra.mxu0 %v1559
    %v2637 = vpop.f32.mrf.mxu0
    %2638 = vmatmul.f32.gmra.mxu0 %v1563
    %v2639 = vpop.f32.mrf.mxu0
    %v2640 = vadd.f32 %v2607, %v2639
    %2641 = vmatmul.f32.gmra.mxu0 %v1627
    %v2642 = vpop.f32.mrf.mxu0
    %v2643 = vadd.f32 %v2610, %v2642
    %2644 = vdwg.mxu0
    %2645 = vmatpush.msra.mxu0 %v2084
    %2646 = vmatpush.msra.mxu0 %v2082
    %2647 = vmatpush.msra.mxu0 %v2080
    %2648 = vmatpush.msra.mxu0 %v2078
    %2649 = vmatpush.msra.mxu0 %v2076
    %2650 = vmatpush.msra.mxu0 %v2074
    %2651 = vmatpush.msra.mxu0 %v2072
    %2652 = vmatpush.msra.mxu0 %v2070
    %2653 = vmatpush.msra.mxu0 %v2068
    %2654 = vmatpush.msra.mxu0 %v2066
    %2655 = vmatpush.msra.mxu0 %v2064
    %2656 = vmatpush.msra.mxu0 %v2062
    %2657 = vmatpush.msra.mxu0 %v2060
    %2658 = vmatpush.msra.mxu0 %v2058
    %2659 = vmatpush.msra.mxu0 %v2056
    %2660 = vmatpush.msra.mxu0 %v2054
    %2661 = vmatmul.f32.gmra.mxu0 %v1549
    %v2662 = vpop.f32.mrf.mxu0
    %v2663 = vadd.f32 %v2630, %v2662
    %2664 = vmatmul.f32.gmra.mxu0 %v1553
    %v2665 = vpop.f32.mrf.mxu0
    %v2666 = vadd.f32 %v2633, %v2665
    %2667 = vmatmul.f32.gmra.mxu0 %v1557
    %v2668 = vpop.f32.mrf.mxu0
    %2669 = vmatmul.f32.gmra.mxu0 %v1561
    %v2670 = vpop.f32.mrf.mxu0
    %2671 = vmatmul.f32.gmra.mxu0 %v1565
    %v2672 = vpop.f32.mrf.mxu0
    %v2673 = vadd.f32 %v2640, %v2672
    %2674 = vmatmul.f32.gmra.mxu0 %v1629
    %v2675 = vpop.f32.mrf.mxu0
    %v2676 = vadd.f32 %v2643, %v2675
    %2677 = vdwg.mxu0
    %2678 = vmatpush.msra.mxu0 %v2116
    %2679 = vmatpush.msra.mxu0 %v2114
    %2680 = vmatpush.msra.mxu0 %v2112
    %2681 = vmatpush.msra.mxu0 %v2110
    %2682 = vmatpush.msra.mxu0 %v2108
    %2683 = vmatpush.msra.mxu0 %v2106
    %2684 = vmatpush.msra.mxu0 %v2104
    %2685 = vmatpush.msra.mxu0 %v2102
    %2686 = vmatpush.msra.mxu0 %v2100
    %2687 = vmatpush.msra.mxu0 %v2098
    %2688 = vmatpush.msra.mxu0 %v2096
    %2689 = vmatpush.msra.mxu0 %v2094
    %2690 = vmatpush.msra.mxu0 %v2092
    %2691 = vmatpush.msra.mxu0 %v2090
    %2692 = vmatpush.msra.mxu0 %v2088
    %2693 = vmatpush.msra.mxu0 %v2086
    %2694 = vmatmul.f32.gmra.mxu0 %v1585
    %v2695 = vpop.f32.mrf.mxu0
    %v2696 = vadd.f32 %v2663, %v2695
    %2697 = vmatmul.f32.gmra.mxu0 %v1589
    %v2698 = vpop.f32.mrf.mxu0
    %v2699 = vadd.f32 %v2666, %v2698
    %2700 = vmatmul.f32.gmra.mxu0 %v1593
    %v2701 = vpop.f32.mrf.mxu0
    %2702 = vmatmul.f32.gmra.mxu0 %v1597
    %v2703 = vpop.f32.mrf.mxu0
    %2704 = vmatmul.f32.gmra.mxu0 %v1601
    %v2705 = vpop.f32.mrf.mxu0
    %v2706 = vadd.f32 %v2673, %v2705
    %2707 = vmatmul.f32.gmra.mxu0 %v1633
    %v2708 = vpop.f32.mrf.mxu0
    %v2709 = vadd.f32 %v2676, %v2708
    %2710 = vdwg.mxu0
    %2711 = vmatpush.msra.mxu0 %v2148
    %2712 = vmatpush.msra.mxu0 %v2146
    %2713 = vmatpush.msra.mxu0 %v2144
    %2714 = vmatpush.msra.mxu0 %v2142
    %2715 = vmatpush.msra.mxu0 %v2140
    %2716 = vmatpush.msra.mxu0 %v2138
    %2717 = vmatpush.msra.mxu0 %v2136
    %2718 = vmatpush.msra.mxu0 %v2134
    %2719 = vmatpush.msra.mxu0 %v2132
    %2720 = vmatpush.msra.mxu0 %v2130
    %2721 = vmatpush.msra.mxu0 %v2128
    %2722 = vmatpush.msra.mxu0 %v2126
    %2723 = vmatpush.msra.mxu0 %v2124
    %2724 = vmatpush.msra.mxu0 %v2122
    %2725 = vmatpush.msra.mxu0 %v2120
    %2726 = vmatpush.msra.mxu0 %v2118
    %2727 = vmatmul.f32.gmra.mxu0 %v1587
    %v2728 = vpop.f32.mrf.mxu0
    %v2729 = vadd.f32 %v2696, %v2728
    %2730 = vmatmul.f32.gmra.mxu0 %v1591
    %v2731 = vpop.f32.mrf.mxu0
    %v2732 = vadd.f32 %v2699, %v2731
    %2733 = vmatmul.f32.gmra.mxu0 %v1595
    %v2734 = vpop.f32.mrf.mxu0
    %2735 = vmatmul.f32.gmra.mxu0 %v1599
    %v2736 = vpop.f32.mrf.mxu0
    %2737 = vmatmul.f32.gmra.mxu0 %v1603
    %v2738 = vpop.f32.mrf.mxu0
    %v2739 = vadd.f32 %v2706, %v2738
    %2740 = vmatmul.f32.gmra.mxu0 %v1635
    %v2741 = vpop.f32.mrf.mxu0
    %v2742 = vadd.f32 %v2709, %v2741
    %2743 = vdwg.mxu0
    %2744 = vmatpush.msra.mxu0 %v2180
    %2745 = vmatpush.msra.mxu0 %v2178
    %2746 = vmatpush.msra.mxu0 %v2176
    %2747 = vmatpush.msra.mxu0 %v2174
    %2748 = vmatpush.msra.mxu0 %v2172
    %2749 = vmatpush.msra.mxu0 %v2170
    %2750 = vmatpush.msra.mxu0 %v2168
    %2751 = vmatpush.msra.mxu0 %v2166
    %2752 = vmatpush.msra.mxu0 %v2164
    %2753 = vmatpush.msra.mxu0 %v2162
    %2754 = vmatpush.msra.mxu0 %v2160
    %2755 = vmatpush.msra.mxu0 %v2158
    %2756 = vmatpush.msra.mxu0 %v2156
    %2757 = vmatpush.msra.mxu0 %v2154
    %2758 = vmatpush.msra.mxu0 %v2152
    %2759 = vmatpush.msra.mxu0 %v2150
    %2760 = vmatmul.f32.gmra.mxu0 %v1479
    %v2761 = vpop.f32.mrf.mxu0
    %v2762 = vadd.f32 %v2729, %v2761
    %2763 = vmatmul.f32.gmra.mxu0 %v1481
    %v2764 = vpop.f32.mrf.mxu0
    %v2765 = vadd.f32 %v2732, %v2764
    %2766 = vmatmul.f32.gmra.mxu0 %v1483
    %v2767 = vpop.f32.mrf.mxu0
    %2768 = vmatmul.f32.gmra.mxu0 %v1485
    %v2769 = vpop.f32.mrf.mxu0
    %2770 = vmatmul.f32.gmra.mxu0 %v1487
    %v2771 = vpop.f32.mrf.mxu0
    %v2772 = vadd.f32 %v2739, %v2771
    %2773 = vmatmul.f32.gmra.mxu0 %v1489
    %v2774 = vpop.f32.mrf.mxu0
    %v2775 = vadd.f32 %v2742, %v2774
    %2776 = vdwg.mxu0
    %2777 = vmatpush.msra.mxu0 %v2212
    %2778 = vmatpush.msra.mxu0 %v2210
    %2779 = vmatpush.msra.mxu0 %v2208
    %2780 = vmatpush.msra.mxu0 %v2206
    %2781 = vmatpush.msra.mxu0 %v2204
    %2782 = vmatpush.msra.mxu0 %v2202
    %2783 = vmatpush.msra.mxu0 %v2200
    %2784 = vmatpush.msra.mxu0 %v2198
    %2785 = vmatpush.msra.mxu0 %v2196
    %2786 = vmatpush.msra.mxu0 %v2194
    %2787 = vmatpush.msra.mxu0 %v2192
    %2788 = vmatpush.msra.mxu0 %v2190
    %2789 = vmatpush.msra.mxu0 %v2188
    %2790 = vmatpush.msra.mxu0 %v2186
    %2791 = vmatpush.msra.mxu0 %v2184
    %2792 = vmatpush.msra.mxu0 %v2182
    %2793 = vmatmul.f32.gmra.mxu0 %v1480
    %v2794 = vpop.f32.mrf.mxu0
    %v2795 = vadd.f32 %v2762, %v2794
    %2796 = vmatmul.f32.gmra.mxu0 %v1482
    %v2797 = vpop.f32.mrf.mxu0
    %v2798 = vadd.f32 %v2765, %v2797
    %2799 = vmatmul.f32.gmra.mxu0 %v1484
    %v2800 = vpop.f32.mrf.mxu0
    %2801 = vmatmul.f32.gmra.mxu0 %v1486
    %v2802 = vpop.f32.mrf.mxu0
    %2803 = vmatmul.f32.gmra.mxu0 %v1488
    %v2804 = vpop.f32.mrf.mxu0
    %v2805 = vadd.f32 %v2772, %v2804
    %2806 = vmatmul.f32.gmra.mxu0 %v1490
    %v2807 = vpop.f32.mrf.mxu0
    %v2808 = vadd.f32 %v2775, %v2807
    %2809 = vdwg.mxu0
    %2810 = vmatpush.msra.mxu0 %v1669
    %2811 = vmatpush.msra.mxu0 %v1667
    %2812 = vmatpush.msra.mxu0 %v1665
    %2813 = vmatpush.msra.mxu0 %v1663
    %2814 = vmatpush.msra.mxu0 %v1661
    %2815 = vmatpush.msra.mxu0 %v1659
    %2816 = vmatpush.msra.mxu0 %v1657
    %2817 = vmatpush.msra.mxu0 %v1655
    %2818 = vmatpush.msra.mxu0 %v1653
    %2819 = vmatpush.msra.mxu0 %v1651
    %2820 = vmatpush.msra.mxu0 %v1649
    %2821 = vmatpush.msra.mxu0 %v1647
    %2822 = vmatpush.msra.mxu0 %v1645
    %2823 = vmatpush.msra.mxu0 %v1643
    %2824 = vmatpush.msra.mxu0 %v1641
    %2825 = vmatpush.msra.mxu0 %v1639
    %2826 = vmatmul.f32.gmra.mxu0 %v1475
    %v2827 = vpop.f32.mrf.mxu0
    %v2828 = vadd.f32 %v2215, %v2827
    %2829 = vmatmul.f32.gmra.mxu0 %v1477
    %v2830 = vpop.f32.mrf.mxu0
    %v2831 = vadd.f32 %v2215, %v2830
    %2832 = vmatmul.f32.gmra.mxu0 %v1479
    %v2833 = vpop.f32.mrf.mxu0
    %2834 = vmatmul.f32.gmra.mxu0 %v1481
    %v2835 = vpop.f32.mrf.mxu0
    %2836 = vmatmul.f32.gmra.mxu0 %v1483
    %v2837 = vpop.f32.mrf.mxu0
    %v2838 = vadd.f32 %v2215, %v2837
    %2839 = vmatmul.f32.gmra.mxu0 %v1485
    %v2840 = vpop.f32.mrf.mxu0
    %v2841 = vadd.f32 %v2215, %v2840
    %2842 = vdwg.mxu0
    %2843 = vmatpush.msra.mxu0 %v1701
    %2844 = vmatpush.msra.mxu0 %v1699
    %2845 = vmatpush.msra.mxu0 %v1697
    %2846 = vmatpush.msra.mxu0 %v1695
    %2847 = vmatpush.msra.mxu0 %v1693
    %2848 = vmatpush.msra.mxu0 %v1691
    %2849 = vmatpush.msra.mxu0 %v1689
    %2850 = vmatpush.msra.mxu0 %v1687
    %2851 = vmatpush.msra.mxu0 %v1685
    %2852 = vmatpush.msra.mxu0 %v1683
    %2853 = vmatpush.msra.mxu0 %v1681
    %2854 = vmatpush.msra.mxu0 %v1679
    %2855 = vmatpush.msra.mxu0 %v1677
    %2856 = vmatpush.msra.mxu0 %v1675
    %2857 = vmatpush.msra.mxu0 %v1673
    %2858 = vmatpush.msra.mxu0 %v1671
    %2859 = vmatmul.f32.gmra.mxu0 %v1476
    %v2860 = vpop.f32.mrf.mxu0
    %v2861 = vadd.f32 %v2828, %v2860
    %2862 = vmatmul.f32.gmra.mxu0 %v1478
    %v2863 = vpop.f32.mrf.mxu0
    %v2864 = vadd.f32 %v2831, %v2863
    %2865 = vmatmul.f32.gmra.mxu0 %v1480
    %v2866 = vpop.f32.mrf.mxu0
    %2867 = vmatmul.f32.gmra.mxu0 %v1482
    %v2868 = vpop.f32.mrf.mxu0
    %2869 = vmatmul.f32.gmra.mxu0 %v1484
    %v2870 = vpop.f32.mrf.mxu0
    %v2871 = vadd.f32 %v2838, %v2870
    %2872 = vmatmul.f32.gmra.mxu0 %v1486
    %v2873 = vpop.f32.mrf.mxu0
    %v2874 = vadd.f32 %v2841, %v2873
    %2875 = vdwg.mxu0
    %2876 = vmatpush.msra.mxu0 %v1733
    %2877 = vmatpush.msra.mxu0 %v1731
    %2878 = vmatpush.msra.mxu0 %v1729
    %2879 = vmatpush.msra.mxu0 %v1727
    %2880 = vmatpush.msra.mxu0 %v1725
    %2881 = vmatpush.msra.mxu0 %v1723
    %2882 = vmatpush.msra.mxu0 %v1721
    %2883 = vmatpush.msra.mxu0 %v1719
    %2884 = vmatpush.msra.mxu0 %v1717
    %2885 = vmatpush.msra.mxu0 %v1715
    %2886 = vmatpush.msra.mxu0 %v1713
    %2887 = vmatpush.msra.mxu0 %v1711
    %2888 = vmatpush.msra.mxu0 %v1709
    %2889 = vmatpush.msra.mxu0 %v1707
    %2890 = vmatpush.msra.mxu0 %v1705
    %2891 = vmatpush.msra.mxu0 %v1703
    %2892 = vmatmul.f32.gmra.mxu0 %v1505
    %v2893 = vpop.f32.mrf.mxu0
    %v2894 = vadd.f32 %v2861, %v2893
    %2895 = vmatmul.f32.gmra.mxu0 %v1510
    %v2896 = vpop.f32.mrf.mxu0
    %v2897 = vadd.f32 %v2864, %v2896
    %2898 = vmatmul.f32.gmra.mxu0 %v1514
    %v2899 = vpop.f32.mrf.mxu0
    %2900 = vmatmul.f32.gmra.mxu0 %v1518
    %v2901 = vpop.f32.mrf.mxu0
    %2902 = vmatmul.f32.gmra.mxu0 %v1522
    %v2903 = vpop.f32.mrf.mxu0
    %v2904 = vadd.f32 %v2871, %v2903
    %2905 = vmatmul.f32.gmra.mxu0 %v1521
    %v2906 = vpop.f32.mrf.mxu0
    %v2907 = vadd.f32 %v2874, %v2906
    %2908 = vdwg.mxu0
    %2909 = vmatpush.msra.mxu0 %v1765
    %2910 = vmatpush.msra.mxu0 %v1763
    %2911 = vmatpush.msra.mxu0 %v1761
    %2912 = vmatpush.msra.mxu0 %v1759
    %2913 = vmatpush.msra.mxu0 %v1757
    %2914 = vmatpush.msra.mxu0 %v1755
    %2915 = vmatpush.msra.mxu0 %v1753
    %2916 = vmatpush.msra.mxu0 %v1751
    %2917 = vmatpush.msra.mxu0 %v1749
    %2918 = vmatpush.msra.mxu0 %v1747
    %2919 = vmatpush.msra.mxu0 %v1745
    %2920 = vmatpush.msra.mxu0 %v1743
    %2921 = vmatpush.msra.mxu0 %v1741
    %2922 = vmatpush.msra.mxu0 %v1739
    %2923 = vmatpush.msra.mxu0 %v1737
    %2924 = vmatpush.msra.mxu0 %v1735
    %2925 = vmatmul.f32.gmra.mxu0 %v1508
    %v2926 = vpop.f32.mrf.mxu0
    %v2927 = vadd.f32 %v2894, %v2926
    %2928 = vmatmul.f32.gmra.mxu0 %v1512
    %v2929 = vpop.f32.mrf.mxu0
    %v2930 = vadd.f32 %v2897, %v2929
    %2931 = vmatmul.f32.gmra.mxu0 %v1516
    %v2932 = vpop.f32.mrf.mxu0
    %2933 = vmatmul.f32.gmra.mxu0 %v1520
    %v2934 = vpop.f32.mrf.mxu0
    %2935 = vmatmul.f32.gmra.mxu0 %v1524
    %v2936 = vpop.f32.mrf.mxu0
    %v2937 = vadd.f32 %v2904, %v2936
    %2938 = vmatmul.f32.gmra.mxu0 %v1523
    %v2939 = vpop.f32.mrf.mxu0
    %v2940 = vadd.f32 %v2907, %v2939
    %2941 = vdwg.mxu0
    %2942 = vmatpush.msra.mxu0 %v1797
    %2943 = vmatpush.msra.mxu0 %v1795
    %2944 = vmatpush.msra.mxu0 %v1793
    %2945 = vmatpush.msra.mxu0 %v1791
    %2946 = vmatpush.msra.mxu0 %v1789
    %2947 = vmatpush.msra.mxu0 %v1787
    %2948 = vmatpush.msra.mxu0 %v1785
    %2949 = vmatpush.msra.mxu0 %v1783
    %2950 = vmatpush.msra.mxu0 %v1781
    %2951 = vmatpush.msra.mxu0 %v1779
    %2952 = vmatpush.msra.mxu0 %v1777
    %2953 = vmatpush.msra.mxu0 %v1775
    %2954 = vmatpush.msra.mxu0 %v1773
    %2955 = vmatpush.msra.mxu0 %v1771
    %2956 = vmatpush.msra.mxu0 %v1769
    %2957 = vmatpush.msra.mxu0 %v1767
    %2958 = vmatmul.f32.gmra.mxu0 %v1542
    %v2959 = vpop.f32.mrf.mxu0
    %v2960 = vadd.f32 %v2927, %v2959
    %2961 = vmatmul.f32.gmra.mxu0 %v1547
    %v2962 = vpop.f32.mrf.mxu0
    %v2963 = vadd.f32 %v2930, %v2962
    %2964 = vmatmul.f32.gmra.mxu0 %v1551
    %v2965 = vpop.f32.mrf.mxu0
    %2966 = vmatmul.f32.gmra.mxu0 %v1555
    %v2967 = vpop.f32.mrf.mxu0
    %2968 = vmatmul.f32.gmra.mxu0 %v1559
    %v2969 = vpop.f32.mrf.mxu0
    %v2970 = vadd.f32 %v2937, %v2969
    %2971 = vmatmul.f32.gmra.mxu0 %v1563
    %v2972 = vpop.f32.mrf.mxu0
    %v2973 = vadd.f32 %v2940, %v2972
    %2974 = vdwg.mxu0
    %2975 = vmatpush.msra.mxu0 %v1829
    %2976 = vmatpush.msra.mxu0 %v1827
    %2977 = vmatpush.msra.mxu0 %v1825
    %2978 = vmatpush.msra.mxu0 %v1823
    %2979 = vmatpush.msra.mxu0 %v1821
    %2980 = vmatpush.msra.mxu0 %v1819
    %2981 = vmatpush.msra.mxu0 %v1817
    %2982 = vmatpush.msra.mxu0 %v1815
    %2983 = vmatpush.msra.mxu0 %v1813
    %2984 = vmatpush.msra.mxu0 %v1811
    %2985 = vmatpush.msra.mxu0 %v1809
    %2986 = vmatpush.msra.mxu0 %v1807
    %2987 = vmatpush.msra.mxu0 %v1805
    %2988 = vmatpush.msra.mxu0 %v1803
    %2989 = vmatpush.msra.mxu0 %v1801
    %2990 = vmatpush.msra.mxu0 %v1799
    %2991 = vmatmul.f32.gmra.mxu0 %v1545
    %v2992 = vpop.f32.mrf.mxu0
    %v2993 = vadd.f32 %v2960, %v2992
    %2994 = vmatmul.f32.gmra.mxu0 %v1549
    %v2995 = vpop.f32.mrf.mxu0
    %v2996 = vadd.f32 %v2963, %v2995
    %2997 = vmatmul.f32.gmra.mxu0 %v1553
    %v2998 = vpop.f32.mrf.mxu0
    %2999 = vmatmul.f32.gmra.mxu0 %v1557
    %v3000 = vpop.f32.mrf.mxu0
    %3001 = vmatmul.f32.gmra.mxu0 %v1561
    %v3002 = vpop.f32.mrf.mxu0
    %v3003 = vadd.f32 %v2970, %v3002
    %3004 = vmatmul.f32.gmra.mxu0 %v1565
    %v3005 = vpop.f32.mrf.mxu0
    %v3006 = vadd.f32 %v2973, %v3005
    %3007 = vdwg.mxu0
    %3008 = vmatpush.msra.mxu0 %v1861
    %3009 = vmatpush.msra.mxu0 %v1859
    %3010 = vmatpush.msra.mxu0 %v1857
    %3011 = vmatpush.msra.mxu0 %v1855
    %3012 = vmatpush.msra.mxu0 %v1853
    %3013 = vmatpush.msra.mxu0 %v1851
    %3014 = vmatpush.msra.mxu0 %v1849
    %3015 = vmatpush.msra.mxu0 %v1847
    %3016 = vmatpush.msra.mxu0 %v1845
    %3017 = vmatpush.msra.mxu0 %v1843
    %3018 = vmatpush.msra.mxu0 %v1841
    %3019 = vmatpush.msra.mxu0 %v1839
    %3020 = vmatpush.msra.mxu0 %v1837
    %3021 = vmatpush.msra.mxu0 %v1835
    %3022 = vmatpush.msra.mxu0 %v1833
    %3023 = vmatpush.msra.mxu0 %v1831
    %3024 = vmatmul.f32.gmra.mxu0 %v1580
    %v3025 = vpop.f32.mrf.mxu0
    %v3026 = vadd.f32 %v2993, %v3025
    %3027 = vmatmul.f32.gmra.mxu0 %v1585
    %v3028 = vpop.f32.mrf.mxu0
    %v3029 = vadd.f32 %v2996, %v3028
    %3030 = vmatmul.f32.gmra.mxu0 %v1589
    %v3031 = vpop.f32.mrf.mxu0
    %3032 = vmatmul.f32.gmra.mxu0 %v1593
    %v3033 = vpop.f32.mrf.mxu0
    %3034 = vmatmul.f32.gmra.mxu0 %v1597
    %v3035 = vpop.f32.mrf.mxu0
    %v3036 = vadd.f32 %v3003, %v3035
    %3037 = vmatmul.f32.gmra.mxu0 %v1601
    %v3038 = vpop.f32.mrf.mxu0
    %v3039 = vadd.f32 %v3006, %v3038
    %3040 = vdwg.mxu0
    %3041 = vmatpush.msra.mxu0 %v1893
    %3042 = vmatpush.msra.mxu0 %v1891
    %3043 = vmatpush.msra.mxu0 %v1889
    %3044 = vmatpush.msra.mxu0 %v1887
    %3045 = vmatpush.msra.mxu0 %v1885
    %3046 = vmatpush.msra.mxu0 %v1883
    %3047 = vmatpush.msra.mxu0 %v1881
    %3048 = vmatpush.msra.mxu0 %v1879
    %3049 = vmatpush.msra.mxu0 %v1877
    %3050 = vmatpush.msra.mxu0 %v1875
    %3051 = vmatpush.msra.mxu0 %v1873
    %3052 = vmatpush.msra.mxu0 %v1871
    %3053 = vmatpush.msra.mxu0 %v1869
    %3054 = vmatpush.msra.mxu0 %v1867
    %3055 = vmatpush.msra.mxu0 %v1865
    %3056 = vmatpush.msra.mxu0 %v1863
    %3057 = vmatmul.f32.gmra.mxu0 %v1583
    %v3058 = vpop.f32.mrf.mxu0
    %v3059 = vadd.f32 %v3026, %v3058
    %3060 = vmatmul.f32.gmra.mxu0 %v1587
    %v3061 = vpop.f32.mrf.mxu0
    %v3062 = vadd.f32 %v3029, %v3061
    %3063 = vmatmul.f32.gmra.mxu0 %v1591
    %v3064 = vpop.f32.mrf.mxu0
    %3065 = vmatmul.f32.gmra.mxu0 %v1595
    %v3066 = vpop.f32.mrf.mxu0
    %3067 = vmatmul.f32.gmra.mxu0 %v1599
    %v3068 = vpop.f32.mrf.mxu0
    %v3069 = vadd.f32 %v3036, %v3068
    %3070 = vmatmul.f32.gmra.mxu0 %v1603
    %v3071 = vpop.f32.mrf.mxu0
    %v3072 = vadd.f32 %v3039, %v3071
    %3073 = vdwg.mxu0
    %3074 = vmatpush.msra.mxu0 %v1925
    %3075 = vmatpush.msra.mxu0 %v1923
    %3076 = vmatpush.msra.mxu0 %v1921
    %3077 = vmatpush.msra.mxu0 %v1919
    %3078 = vmatpush.msra.mxu0 %v1917
    %3079 = vmatpush.msra.mxu0 %v1915
    %3080 = vmatpush.msra.mxu0 %v1913
    %3081 = vmatpush.msra.mxu0 %v1911
    %3082 = vmatpush.msra.mxu0 %v1909
    %3083 = vmatpush.msra.mxu0 %v1907
    %3084 = vmatpush.msra.mxu0 %v1905
    %3085 = vmatpush.msra.mxu0 %v1903
    %3086 = vmatpush.msra.mxu0 %v1901
    %3087 = vmatpush.msra.mxu0 %v1899
    %3088 = vmatpush.msra.mxu0 %v1897
    %3089 = vmatpush.msra.mxu0 %v1895
    %3090 = vmatmul.f32.gmra.mxu0 %v1477
    %v3091 = vpop.f32.mrf.mxu0
    %v3092 = vadd.f32 %v3059, %v3091
    %3093 = vmatmul.f32.gmra.mxu0 %v1479
    %v3094 = vpop.f32.mrf.mxu0
    %v3095 = vadd.f32 %v3062, %v3094
    %3096 = vmatmul.f32.gmra.mxu0 %v1481
    %v3097 = vpop.f32.mrf.mxu0
    %3098 = vmatmul.f32.gmra.mxu0 %v1483
    %v3099 = vpop.f32.mrf.mxu0
    %3100 = vmatmul.f32.gmra.mxu0 %v1485
    %v3101 = vpop.f32.mrf.mxu0
    %v3102 = vadd.f32 %v3069, %v3101
    %3103 = vmatmul.f32.gmra.mxu0 %v1487
    %v3104 = vpop.f32.mrf.mxu0
    %v3105 = vadd.f32 %v3072, %v3104
    %3106 = vdwg.mxu0
    %3107 = vmatpush.msra.mxu0 %v1957
    %3108 = vmatpush.msra.mxu0 %v1955
    %3109 = vmatpush.msra.mxu0 %v1953
    %3110 = vmatpush.msra.mxu0 %v1951
    %3111 = vmatpush.msra.mxu0 %v1949
    %3112 = vmatpush.msra.mxu0 %v1947
    %3113 = vmatpush.msra.mxu0 %v1945
    %3114 = vmatpush.msra.mxu0 %v1943
    %3115 = vmatpush.msra.mxu0 %v1941
    %3116 = vmatpush.msra.mxu0 %v1939
    %3117 = vmatpush.msra.mxu0 %v1937
    %3118 = vmatpush.msra.mxu0 %v1935
    %3119 = vmatpush.msra.mxu0 %v1933
    %3120 = vmatpush.msra.mxu0 %v1931
    %3121 = vmatpush.msra.mxu0 %v1929
    %3122 = vmatpush.msra.mxu0 %v1927
    %3123 = vmatmul.f32.gmra.mxu0 %v1478
    %v3124 = vpop.f32.mrf.mxu0
    %v3125 = vadd.f32 %v3092, %v3124
    %3126 = vmatmul.f32.gmra.mxu0 %v1480
    %v3127 = vpop.f32.mrf.mxu0
    %v3128 = vadd.f32 %v3095, %v3127
    %3129 = vmatmul.f32.gmra.mxu0 %v1482
    %v3130 = vpop.f32.mrf.mxu0
    %3131 = vmatmul.f32.gmra.mxu0 %v1484
    %v3132 = vpop.f32.mrf.mxu0
    %3133 = vmatmul.f32.gmra.mxu0 %v1486
    %v3134 = vpop.f32.mrf.mxu0
    %v3135 = vadd.f32 %v3102, %v3134
    %3136 = vmatmul.f32.gmra.mxu0 %v1488
    %v3137 = vpop.f32.mrf.mxu0
    %v3138 = vadd.f32 %v3105, %v3137
    %3139 = vdwg.mxu0
    %3140 = vmatpush.msra.mxu0 %v1989
    %3141 = vmatpush.msra.mxu0 %v1987
    %3142 = vmatpush.msra.mxu0 %v1985
    %3143 = vmatpush.msra.mxu0 %v1983
    %3144 = vmatpush.msra.mxu0 %v1981
    %3145 = vmatpush.msra.mxu0 %v1979
    %3146 = vmatpush.msra.mxu0 %v1977
    %3147 = vmatpush.msra.mxu0 %v1975
    %3148 = vmatpush.msra.mxu0 %v1973
    %3149 = vmatpush.msra.mxu0 %v1971
    %3150 = vmatpush.msra.mxu0 %v1969
    %3151 = vmatpush.msra.mxu0 %v1967
    %3152 = vmatpush.msra.mxu0 %v1965
    %3153 = vmatpush.msra.mxu0 %v1963
    %3154 = vmatpush.msra.mxu0 %v1961
    %3155 = vmatpush.msra.mxu0 %v1959
    %3156 = vmatmul.f32.gmra.mxu0 %v1510
    %v3157 = vpop.f32.mrf.mxu0
    %v3158 = vadd.f32 %v3125, %v3157
    %3159 = vmatmul.f32.gmra.mxu0 %v1514
    %v3160 = vpop.f32.mrf.mxu0
    %v3161 = vadd.f32 %v3128, %v3160
    %3162 = vmatmul.f32.gmra.mxu0 %v1518
    %v3163 = vpop.f32.mrf.mxu0
    %3164 = vmatmul.f32.gmra.mxu0 %v1522
    %v3165 = vpop.f32.mrf.mxu0
    %3166 = vmatmul.f32.gmra.mxu0 %v1617
    %v3167 = vpop.f32.mrf.mxu0
    %v3168 = vadd.f32 %v3135, %v3167
    %3169 = vmatmul.f32.gmra.mxu0 %v1616
    %v3170 = vpop.f32.mrf.mxu0
    %v3171 = vadd.f32 %v3138, %v3170
    %3172 = vdwg.mxu0
    %3173 = vmatpush.msra.mxu0 %v2021
    %3174 = vmatpush.msra.mxu0 %v2019
    %3175 = vmatpush.msra.mxu0 %v2017
    %3176 = vmatpush.msra.mxu0 %v2015
    %3177 = vmatpush.msra.mxu0 %v2013
    %3178 = vmatpush.msra.mxu0 %v2011
    %3179 = vmatpush.msra.mxu0 %v2009
    %3180 = vmatpush.msra.mxu0 %v2007
    %3181 = vmatpush.msra.mxu0 %v2005
    %3182 = vmatpush.msra.mxu0 %v2003
    %3183 = vmatpush.msra.mxu0 %v2001
    %3184 = vmatpush.msra.mxu0 %v1999
    %3185 = vmatpush.msra.mxu0 %v1997
    %3186 = vmatpush.msra.mxu0 %v1995
    %3187 = vmatpush.msra.mxu0 %v1993
    %3188 = vmatpush.msra.mxu0 %v1991
    %3189 = vmatmul.f32.gmra.mxu0 %v1512
    %v3190 = vpop.f32.mrf.mxu0
    %v3191 = vadd.f32 %v3158, %v3190
    %3192 = vmatmul.f32.gmra.mxu0 %v1516
    %v3193 = vpop.f32.mrf.mxu0
    %v3194 = vadd.f32 %v3161, %v3193
    %3195 = vmatmul.f32.gmra.mxu0 %v1520
    %v3196 = vpop.f32.mrf.mxu0
    %3197 = vmatmul.f32.gmra.mxu0 %v1524
    %v3198 = vpop.f32.mrf.mxu0
    %3199 = vmatmul.f32.gmra.mxu0 %v1619
    %v3200 = vpop.f32.mrf.mxu0
    %v3201 = vadd.f32 %v3168, %v3200
    %3202 = vmatmul.f32.gmra.mxu0 %v1618
    %v3203 = vpop.f32.mrf.mxu0
    %v3204 = vadd.f32 %v3171, %v3203
    %3205 = vdwg.mxu0
    %3206 = vmatpush.msra.mxu0 %v2053
    %3207 = vmatpush.msra.mxu0 %v2051
    %3208 = vmatpush.msra.mxu0 %v2049
    %3209 = vmatpush.msra.mxu0 %v2047
    %3210 = vmatpush.msra.mxu0 %v2045
    %3211 = vmatpush.msra.mxu0 %v2043
    %3212 = vmatpush.msra.mxu0 %v2041
    %3213 = vmatpush.msra.mxu0 %v2039
    %3214 = vmatpush.msra.mxu0 %v2037
    %3215 = vmatpush.msra.mxu0 %v2035
    %3216 = vmatpush.msra.mxu0 %v2033
    %3217 = vmatpush.msra.mxu0 %v2031
    %3218 = vmatpush.msra.mxu0 %v2029
    %3219 = vmatpush.msra.mxu0 %v2027
    %3220 = vmatpush.msra.mxu0 %v2025
    %3221 = vmatpush.msra.mxu0 %v2023
    %3222 = vmatmul.f32.gmra.mxu0 %v1547
    %v3223 = vpop.f32.mrf.mxu0
    %v3224 = vadd.f32 %v3191, %v3223
    %3225 = vmatmul.f32.gmra.mxu0 %v1551
    %v3226 = vpop.f32.mrf.mxu0
    %v3227 = vadd.f32 %v3194, %v3226
    %3228 = vmatmul.f32.gmra.mxu0 %v1555
    %v3229 = vpop.f32.mrf.mxu0
    %3230 = vmatmul.f32.gmra.mxu0 %v1559
    %v3231 = vpop.f32.mrf.mxu0
    %3232 = vmatmul.f32.gmra.mxu0 %v1563
    %v3233 = vpop.f32.mrf.mxu0
    %v3234 = vadd.f32 %v3201, %v3233
    %3235 = vmatmul.f32.gmra.mxu0 %v1627
    %v3236 = vpop.f32.mrf.mxu0
    %v3237 = vadd.f32 %v3204, %v3236
    %3238 = vdwg.mxu0
    %3239 = vmatpush.msra.mxu0 %v2085
    %3240 = vmatpush.msra.mxu0 %v2083
    %3241 = vmatpush.msra.mxu0 %v2081
    %3242 = vmatpush.msra.mxu0 %v2079
    %3243 = vmatpush.msra.mxu0 %v2077
    %3244 = vmatpush.msra.mxu0 %v2075
    %3245 = vmatpush.msra.mxu0 %v2073
    %3246 = vmatpush.msra.mxu0 %v2071
    %3247 = vmatpush.msra.mxu0 %v2069
    %3248 = vmatpush.msra.mxu0 %v2067
    %3249 = vmatpush.msra.mxu0 %v2065
    %3250 = vmatpush.msra.mxu0 %v2063
    %3251 = vmatpush.msra.mxu0 %v2061
    %3252 = vmatpush.msra.mxu0 %v2059
    %3253 = vmatpush.msra.mxu0 %v2057
    %3254 = vmatpush.msra.mxu0 %v2055
    %3255 = vmatmul.f32.gmra.mxu0 %v1549
    %v3256 = vpop.f32.mrf.mxu0
    %v3257 = vadd.f32 %v3224, %v3256
    %3258 = vmatmul.f32.gmra.mxu0 %v1553
    %v3259 = vpop.f32.mrf.mxu0
    %v3260 = vadd.f32 %v3227, %v3259
    %3261 = vmatmul.f32.gmra.mxu0 %v1557
    %v3262 = vpop.f32.mrf.mxu0
    %3263 = vmatmul.f32.gmra.mxu0 %v1561
    %v3264 = vpop.f32.mrf.mxu0
    %3265 = vmatmul.f32.gmra.mxu0 %v1565
    %v3266 = vpop.f32.mrf.mxu0
    %v3267 = vadd.f32 %v3234, %v3266
    %3268 = vmatmul.f32.gmra.mxu0 %v1629
    %v3269 = vpop.f32.mrf.mxu0
    %v3270 = vadd.f32 %v3237, %v3269
    %3271 = vdwg.mxu0
    %3272 = vmatpush.msra.mxu0 %v2117
    %3273 = vmatpush.msra.mxu0 %v2115
    %3274 = vmatpush.msra.mxu0 %v2113
    %3275 = vmatpush.msra.mxu0 %v2111
    %3276 = vmatpush.msra.mxu0 %v2109
    %3277 = vmatpush.msra.mxu0 %v2107
    %3278 = vmatpush.msra.mxu0 %v2105
    %3279 = vmatpush.msra.mxu0 %v2103
    %3280 = vmatpush.msra.mxu0 %v2101
    %3281 = vmatpush.msra.mxu0 %v2099
    %3282 = vmatpush.msra.mxu0 %v2097
    %3283 = vmatpush.msra.mxu0 %v2095
    %3284 = vmatpush.msra.mxu0 %v2093
    %3285 = vmatpush.msra.mxu0 %v2091
    %3286 = vmatpush.msra.mxu0 %v2089
    %3287 = vmatpush.msra.mxu0 %v2087
    %3288 = vmatmul.f32.gmra.mxu0 %v1585
    %v3289 = vpop.f32.mrf.mxu0
    %v3290 = vadd.f32 %v3257, %v3289
    %3291 = vmatmul.f32.gmra.mxu0 %v1589
    %v3292 = vpop.f32.mrf.mxu0
    %v3293 = vadd.f32 %v3260, %v3292
    %3294 = vmatmul.f32.gmra.mxu0 %v1593
    %v3295 = vpop.f32.mrf.mxu0
    %3296 = vmatmul.f32.gmra.mxu0 %v1597
    %v3297 = vpop.f32.mrf.mxu0
    %3298 = vmatmul.f32.gmra.mxu0 %v1601
    %v3299 = vpop.f32.mrf.mxu0
    %v3300 = vadd.f32 %v3267, %v3299
    %3301 = vmatmul.f32.gmra.mxu0 %v1633
    %v3302 = vpop.f32.mrf.mxu0
    %v3303 = vadd.f32 %v3270, %v3302
    %3304 = vdwg.mxu0
    %3305 = vmatpush.msra.mxu0 %v2149
    %3306 = vmatpush.msra.mxu0 %v2147
    %3307 = vmatpush.msra.mxu0 %v2145
    %3308 = vmatpush.msra.mxu0 %v2143
    %3309 = vmatpush.msra.mxu0 %v2141
    %3310 = vmatpush.msra.mxu0 %v2139
    %3311 = vmatpush.msra.mxu0 %v2137
    %3312 = vmatpush.msra.mxu0 %v2135
    %3313 = vmatpush.msra.mxu0 %v2133
    %3314 = vmatpush.msra.mxu0 %v2131
    %3315 = vmatpush.msra.mxu0 %v2129
    %3316 = vmatpush.msra.mxu0 %v2127
    %3317 = vmatpush.msra.mxu0 %v2125
    %3318 = vmatpush.msra.mxu0 %v2123
    %3319 = vmatpush.msra.mxu0 %v2121
    %3320 = vmatpush.msra.mxu0 %v2119
    %3321 = vmatmul.f32.gmra.mxu0 %v1587
    %v3322 = vpop.f32.mrf.mxu0
    %v3323 = vadd.f32 %v3290, %v3322
    %3324 = vmatmul.f32.gmra.mxu0 %v1591
    %v3325 = vpop.f32.mrf.mxu0
    %v3326 = vadd.f32 %v3293, %v3325
    %3327 = vmatmul.f32.gmra.mxu0 %v1595
    %v3328 = vpop.f32.mrf.mxu0
    %3329 = vmatmul.f32.gmra.mxu0 %v1599
    %v3330 = vpop.f32.mrf.mxu0
    %3331 = vmatmul.f32.gmra.mxu0 %v1603
    %v3332 = vpop.f32.mrf.mxu0
    %v3333 = vadd.f32 %v3300, %v3332
    %3334 = vmatmul.f32.gmra.mxu0 %v1635
    %v3335 = vpop.f32.mrf.mxu0
    %v3336 = vadd.f32 %v3303, %v3335
    %3337 = vdwg.mxu0
    %3338 = vmatpush.msra.mxu0 %v2181
    %3339 = vmatpush.msra.mxu0 %v2179
    %3340 = vmatpush.msra.mxu0 %v2177
    %3341 = vmatpush.msra.mxu0 %v2175
    %3342 = vmatpush.msra.mxu0 %v2173
    %3343 = vmatpush.msra.mxu0 %v2171
    %3344 = vmatpush.msra.mxu0 %v2169
    %3345 = vmatpush.msra.mxu0 %v2167
    %3346 = vmatpush.msra.mxu0 %v2165
    %3347 = vmatpush.msra.mxu0 %v2163
    %3348 = vmatpush.msra.mxu0 %v2161
    %3349 = vmatpush.msra.mxu0 %v2159
    %3350 = vmatpush.msra.mxu0 %v2157
    %3351 = vmatpush.msra.mxu0 %v2155
    %3352 = vmatpush.msra.mxu0 %v2153
    %3353 = vmatpush.msra.mxu0 %v2151
    %3354 = vmatmul.f32.gmra.mxu0 %v1479
    %v3355 = vpop.f32.mrf.mxu0
    %v3356 = vadd.f32 %v3323, %v3355
    %3357 = vmatmul.f32.gmra.mxu0 %v1481
    %v3358 = vpop.f32.mrf.mxu0
    %v3359 = vadd.f32 %v3326, %v3358
    %3360 = vmatmul.f32.gmra.mxu0 %v1483
    %v3361 = vpop.f32.mrf.mxu0
    %3362 = vmatmul.f32.gmra.mxu0 %v1485
    %v3363 = vpop.f32.mrf.mxu0
    %3364 = vmatmul.f32.gmra.mxu0 %v1487
    %v3365 = vpop.f32.mrf.mxu0
    %v3366 = vadd.f32 %v3333, %v3365
    %3367 = vmatmul.f32.gmra.mxu0 %v1489
    %v3368 = vpop.f32.mrf.mxu0
    %v3369 = vadd.f32 %v3336, %v3368
    %3370 = vdwg.mxu0
    %3371 = vmatpush.msra.mxu0 %v2213
    %3372 = vmatpush.msra.mxu0 %v2211
    %3373 = vmatpush.msra.mxu0 %v2209
    %3374 = vmatpush.msra.mxu0 %v2207
    %3375 = vmatpush.msra.mxu0 %v2205
    %3376 = vmatpush.msra.mxu0 %v2203
    %3377 = vmatpush.msra.mxu0 %v2201
    %3378 = vmatpush.msra.mxu0 %v2199
    %3379 = vmatpush.msra.mxu0 %v2197
    %3380 = vmatpush.msra.mxu0 %v2195
    %3381 = vmatpush.msra.mxu0 %v2193
    %3382 = vmatpush.msra.mxu0 %v2191
    %3383 = vmatpush.msra.mxu0 %v2189
    %3384 = vmatpush.msra.mxu0 %v2187
    %3385 = vmatpush.msra.mxu0 %v2185
    %3386 = vmatpush.msra.mxu0 %v2183
    %3387 = vmatmul.f32.gmra.mxu0 %v1480
    %v3388 = vpop.f32.mrf.mxu0
    %v3389 = vadd.f32 %v3356, %v3388
    %3390 = vmatmul.f32.gmra.mxu0 %v1482
    %v3391 = vpop.f32.mrf.mxu0
    %v3392 = vadd.f32 %v3359, %v3391
    %3393 = vmatmul.f32.gmra.mxu0 %v1484
    %v3394 = vpop.f32.mrf.mxu0
    %3395 = vmatmul.f32.gmra.mxu0 %v1486
    %v3396 = vpop.f32.mrf.mxu0
    %3397 = vmatmul.f32.gmra.mxu0 %v1488
    %v3398 = vpop.f32.mrf.mxu0
    %v3399 = vadd.f32 %v3366, %v3398
    %3400 = vmatmul.f32.gmra.mxu0 %v1490
    %v3401 = vpop.f32.mrf.mxu0
    %v3402 = vadd.f32 %v3369, %v3401
    %3403 = vdwg.mxu0
    %v3404 = vmax.f32 %v2795, 0.0
    %v3405 = vmax.f32 %v3389, 0.0
    %v3406 = vmax.f32 %v2798, 0.0
    %v3407 = vmax.f32 %v3392, 0.0
    %v3408 = vmax.f32 %v2805, 0.0
    %v3409 = vmax.f32 %v3399, 0.0
    %v3410 = vmax.f32 %v2808, 0.0
    %v3411 = vmax.f32 %v3402, 0.0
    %vm3412 = vcmp.ne.f32.partialorder %v2795, %v2795
    %vm3413 = vcmp.ne.f32.partialorder %v3389, %v3389
    %vm3414 = vcmp.ne.f32.partialorder %v2798, %v2798
    %vm3415 = vcmp.ne.f32.partialorder %v3392, %v3392
    %vm3416 = vcmp.ne.f32.partialorder %v2805, %v2805
    %vm3417 = vcmp.ne.f32.partialorder %v3399, %v3399
    %vm3418 = vcmp.ne.f32.partialorder %v2808, %v2808
    %vm3419 = vcmp.ne.f32.partialorder %v3402, %v3402
    %v3420 = vadd.f32 %v2795, 0.0
    %v3421 = vadd.f32 %v3389, 0.0
    %v3422 = vadd.f32 %v2798, 0.0
    %v3423 = vadd.f32 %v3392, 0.0
    %v3424 = vadd.f32 %v2805, 0.0
    %v3425 = vadd.f32 %v3399, 0.0
    %v3426 = vadd.f32 %v2808, 0.0
    %v3427 = vadd.f32 %v3402, 0.0
    %v3428 = vand.u32 2147483647, %v2795
    %v3429 = vand.u32 2147483647, %v3389
    %v3430 = vand.u32 2147483647, %v2798
    %v3431 = vand.u32 2147483647, %v3392
    %v3432 = vand.u32 2147483647, %v2805
    %v3433 = vand.u32 2147483647, %v3399
    %v3434 = vand.u32 2147483647, %v2808
    %v3435 = vand.u32 2147483647, %v3402
    %v3436 = vsub.f32 0.0, %v3428
    %v3437 = vsub.f32 0.0, %v3429
    %v3438 = vsub.f32 0.0, %v3430
    %v3439 = vsub.f32 0.0, %v3431
    %v3440 = vsub.f32 0.0, %v3432
    %v3441 = vsub.f32 0.0, %v3433
    %v3442 = vsub.f32 0.0, %v3434
    %v3443 = vsub.f32 0.0, %v3435
    %v3444 = vmul.f32 %v3436, 1.442695
    %v3445 = vpow.pop %v3444
    %v3446 = vmul.f32 %v3437, 1.442695
    %v3447 = vpow.pop %v3446
    %v3448 = vmul.f32 %v3438, 1.442695
    %v3449 = vpow.pop %v3448
    %v3450 = vmul.f32 %v3439, 1.442695
    %v3451 = vpow.pop %v3450
    %v3452 = vmul.f32 %v3440, 1.442695
    %v3453 = vpow.pop %v3452
    %v3454 = vmul.f32 %v3441, 1.442695
    %v3455 = vpow.pop %v3454
    %v3456 = vmul.f32 %v3442, 1.442695
    %v3457 = vpow.pop %v3456
    %v3458 = vmul.f32 %v3443, 1.442695
    %v3459 = vpow.pop %v3458
    %v3460 = vadd.f32 %v3445, 1.0
    %v3461 = vlog2.pop %v3460
    %v3462 = vmul.f32 %v3461, 0.6931472
    %v3463 = vmul.f32 -0.5, %v3445
    %v3464 = vadd.f32 %v3463, 1.0
    %v3465 = vmul.f32 %v3464, %v3445
    %v3466 = vand.u32 2147483647, %v3445
    %vm3467 = vcmp.lt.f32.partialorder %v3466, 0.0004427343
    %v3468 = vsel %vm3467, %v3465, %v3462
    %v3469 = vadd.f32 %v3447, 1.0
    %v3470 = vlog2.pop %v3469
    %v3471 = vmul.f32 %v3470, 0.6931472
    %v3472 = vmul.f32 -0.5, %v3447
    %v3473 = vadd.f32 %v3472, 1.0
    %v3474 = vmul.f32 %v3473, %v3447
    %v3475 = vand.u32 2147483647, %v3447
    %vm3476 = vcmp.lt.f32.partialorder %v3475, 0.0004427343
    %v3477 = vsel %vm3476, %v3474, %v3471
    %v3478 = vadd.f32 %v3449, 1.0
    %v3479 = vlog2.pop %v3478
    %v3480 = vmul.f32 %v3479, 0.6931472
    %v3481 = vmul.f32 -0.5, %v3449
    %v3482 = vadd.f32 %v3481, 1.0
    %v3483 = vmul.f32 %v3482, %v3449
    %v3484 = vand.u32 2147483647, %v3449
    %vm3485 = vcmp.lt.f32.partialorder %v3484, 0.0004427343
    %v3486 = vsel %vm3485, %v3483, %v3480
    %v3487 = vadd.f32 %v3451, 1.0
    %v3488 = vlog2.pop %v3487
    %v3489 = vmul.f32 %v3488, 0.6931472
    %v3490 = vmul.f32 -0.5, %v3451
    %v3491 = vadd.f32 %v3490, 1.0
    %v3492 = vmul.f32 %v3491, %v3451
    %v3493 = vand.u32 2147483647, %v3451
    %vm3494 = vcmp.lt.f32.partialorder %v3493, 0.0004427343
    %v3495 = vsel %vm3494, %v3492, %v3489
    %v3496 = vadd.f32 %v3453, 1.0
    %v3497 = vlog2.pop %v3496
    %v3498 = vmul.f32 %v3497, 0.6931472
    %v3499 = vmul.f32 -0.5, %v3453
    %v3500 = vadd.f32 %v3499, 1.0
    %v3501 = vmul.f32 %v3500, %v3453
    %v3502 = vand.u32 2147483647, %v3453
    %vm3503 = vcmp.lt.f32.partialorder %v3502, 0.0004427343
    %v3504 = vsel %vm3503, %v3501, %v3498
    %v3505 = vadd.f32 %v3455, 1.0
    %v3506 = vlog2.pop %v3505
    %v3507 = vmul.f32 %v3506, 0.6931472
    %v3508 = vmul.f32 -0.5, %v3455
    %v3509 = vadd.f32 %v3508, 1.0
    %v3510 = vmul.f32 %v3509, %v3455
    %v3511 = vand.u32 2147483647, %v3455
    %vm3512 = vcmp.lt.f32.partialorder %v3511, 0.0004427343
    %v3513 = vsel %vm3512, %v3510, %v3507
    %v3514 = vadd.f32 %v3457, 1.0
    %v3515 = vlog2.pop %v3514
    %v3516 = vmul.f32 %v3515, 0.6931472
    %v3517 = vmul.f32 -0.5, %v3457
    %v3518 = vadd.f32 %v3517, 1.0
    %v3519 = vmul.f32 %v3518, %v3457
    %v3520 = vand.u32 2147483647, %v3457
    %vm3521 = vcmp.lt.f32.partialorder %v3520, 0.0004427343
    %v3522 = vsel %vm3521, %v3519, %v3516
    %v3523 = vadd.f32 %v3459, 1.0
    %v3524 = vlog2.pop %v3523
    %v3525 = vmul.f32 %v3524, 0.6931472
    %v3526 = vmul.f32 -0.5, %v3459
    %v3527 = vadd.f32 %v3526, 1.0
    %v3528 = vmul.f32 %v3527, %v3459
    %v3529 = vand.u32 2147483647, %v3459
    %vm3530 = vcmp.lt.f32.partialorder %v3529, 0.0004427343
    %v3531 = vsel %vm3530, %v3528, %v3525
    %v3532 = vadd.f32 %v3404, %v3468
    %v3533 = vadd.f32 %v3405, %v3477
    %v3534 = vadd.f32 %v3406, %v3486
    %v3535 = vadd.f32 %v3407, %v3495
    %v3536 = vadd.f32 %v3408, %v3504
    %v3537 = vadd.f32 %v3409, %v3513
    %v3538 = vadd.f32 %v3410, %v3522
    %v3539 = vadd.f32 %v3411, %v3531
    %v3540 = vsel %vm3412, %v3420, %v3532
    %v3541 = vsel %vm3413, %v3421, %v3533
    %v3542 = vsel %vm3414, %v3422, %v3534
    %v3543 = vsel %vm3415, %v3423, %v3535
    %v3544 = vsel %vm3416, %v3424, %v3536
    %v3545 = vsel %vm3417, %v3425, %v3537
    %v3546 = vsel %vm3418, %v3426, %v3538
    %v3547 = vsel %vm3419, %v3427, %v3539
    %v3548 = vperm.slane %v187, 4
    %v3549 = vperm.slane %v188, 4
    %v3550 = vmul.f32 %v3540, %v3548
    %v3551 = vmul.f32 %v3541, %v3549
    %v3552 = vmul.f32 %v3542, %v3548
    %v3553 = vmul.f32 %v3543, %v3549
    %v3554 = vmul.f32 %v3544, %v3548
    %v3555 = vmul.f32 %v3545, %v3549
    %v3556 = vmul.f32 %v3546, %v3548
    %v3557 = vmul.f32 %v3547, %v3549
    %v3558 = vperm.slane %v187, 5
    %v3559 = vperm.slane %v188, 5
    %v3560 = vadd.f32 %v3550, %v3558
    %v3561 = vadd.f32 %v3551, %v3559
    %v3562 = vadd.f32 %v3552, %v3558
    %v3563 = vadd.f32 %v3553, %v3559
    %v3564 = vadd.f32 %v3554, %v3558
    %v3565 = vadd.f32 %v3555, %v3559
    %v3566 = vadd.f32 %v3556, %v3558
    %v3567 = vadd.f32 %v3557, %v3559
    %v3568 = vsel %vm434, %v3562, -inf
    %v3569 = vmax.f32 %v3560, %v3568
    %v3570 = vrot.slane %v3569, 4
    %v3571 = vmax.f32 %v3569, %v3570
    %v3572 = vrot.slane %v3571, 2
    %v3573 = vmax.f32 %v3571, %v3572
    %v3574 = vrot.slane %v3573, 1
    %v3575 = vmax.f32 %v3573, %v3574
    %v3576 = vsel %vm434, %v3563, -inf
    %v3577 = vmax.f32 %v3561, %v3576
    %v3578 = vrot.slane %v3577, 4
    %v3579 = vmax.f32 %v3577, %v3578
    %v3580 = vrot.slane %v3579, 2
    %v3581 = vmax.f32 %v3579, %v3580
    %v3582 = vrot.slane %v3581, 1
    %v3583 = vmax.f32 %v3581, %v3582
    %v3584 = vsel %vm434, %v3566, -inf
    %v3585 = vmax.f32 %v3564, %v3584
    %v3586 = vrot.slane %v3585, 4
    %v3587 = vmax.f32 %v3585, %v3586
    %v3588 = vrot.slane %v3587, 2
    %v3589 = vmax.f32 %v3587, %v3588
    %v3590 = vrot.slane %v3589, 1
    %v3591 = vmax.f32 %v3589, %v3590
    %v3592 = vsel %vm434, %v3567, -inf
    %v3593 = vmax.f32 %v3565, %v3592
    %v3594 = vrot.slane %v3593, 4
    %v3595 = vmax.f32 %v3593, %v3594
    %v3596 = vrot.slane %v3595, 2
    %v3597 = vmax.f32 %v3595, %v3596
    %v3598 = vrot.slane %v3597, 1
    %v3599 = vmax.f32 %v3597, %v3598
    %vm3600 = vcmask 1040384
    %v3601 = vsel %vm3600, %v3575, %v3591
    %v3602 = vsel %vm3600, %v3583, %v3599
    %v3603 = vld [vmem:[#allocation3] sm:$0xff]
    %v3604 = vld [vmem:[#allocation3 + $0x8] sm:$0xff]
    %v3605 = vld [vmem:[#allocation7] sm:$0xff]
    %v3606 = vld [vmem:[#allocation7 + $0x8] sm:$0xff]
    %v3607 = vld [vmem:[#allocation7 + $0x10] sm:$0xff]
    %v3608 = vld [vmem:[#allocation7 + $0x18] sm:$0xff]
    %v3609 = vld [vmem:[#allocation7 + $0x20] sm:$0xff]
    %v3610 = vld [vmem:[#allocation7 + $0x28] sm:$0xff]
    %v3611 = vld [vmem:[#allocation7 + $0x30] sm:$0xff]
    %v3612 = vld [vmem:[#allocation7 + $0x38] sm:$0xff]
    %v3613 = vld [vmem:[#allocation7 + $0x40] sm:$0xff]
    %v3614 = vld [vmem:[#allocation7 + $0x48] sm:$0xff]
    %v3615 = vld [vmem:[#allocation7 + $0x50] sm:$0xff]
    %v3616 = vld [vmem:[#allocation7 + $0x58] sm:$0xff]
    %v3617 = vld [vmem:[#allocation7 + $0x60] sm:$0xff]
    %v3618 = vld [vmem:[#allocation7 + $0x68] sm:$0xff]
    %v3619 = vld [vmem:[#allocation7 + $0x70] sm:$0xff]
    %v3620 = vld [vmem:[#allocation7 + $0x78] sm:$0xff]
    %v3621 = vld [vmem:[#allocation7 + $0x80] sm:$0xff]
    %v3622 = vld [vmem:[#allocation7 + $0x88] sm:$0xff]
    %v3623 = vld [vmem:[#allocation7 + $0x90] sm:$0xff]
    %v3624 = vld [vmem:[#allocation7 + $0x98] sm:$0xff]
    %v3625 = vld [vmem:[#allocation7 + $0xa0] sm:$0xff]
    %v3626 = vld [vmem:[#allocation7 + $0xa8] sm:$0xff]
    %v3627 = vld [vmem:[#allocation7 + $0xb0] sm:$0xff]
    %v3628 = vld [vmem:[#allocation7 + $0xb8] sm:$0xff]
    %v3629 = vld [vmem:[#allocation7 + $0xc0] sm:$0xff]
    %v3630 = vld [vmem:[#allocation7 + $0xc8] sm:$0xff]
    %v3631 = vld [vmem:[#allocation7 + $0xd0] sm:$0xff]
    %v3632 = vld [vmem:[#allocation7 + $0xd8] sm:$0xff]
    %v3633 = vld [vmem:[#allocation7 + $0xe0] sm:$0xff]
    %v3634 = vld [vmem:[#allocation7 + $0xe8] sm:$0xff]
    %v3635 = vld [vmem:[#allocation7 + $0xf0] sm:$0xff]
    %v3636 = vld [vmem:[#allocation7 + $0xf8] sm:$0xff]
    %v3637 = vld [vmem:[#allocation7 + $0x100] sm:$0xff]
    %v3638 = vld [vmem:[#allocation7 + $0x108] sm:$0xff]
    %v3639 = vld [vmem:[#allocation7 + $0x110] sm:$0xff]
    %v3640 = vld [vmem:[#allocation7 + $0x118] sm:$0xff]
    %v3641 = vld [vmem:[#allocation7 + $0x120] sm:$0xff]
    %v3642 = vld [vmem:[#allocation7 + $0x128] sm:$0xff]
    %v3643 = vld [vmem:[#allocation7 + $0x130] sm:$0xff]
    %v3644 = vld [vmem:[#allocation7 + $0x138] sm:$0xff]
    %v3645 = vld [vmem:[#allocation7 + $0x140] sm:$0xff]
    %v3646 = vld [vmem:[#allocation7 + $0x148] sm:$0xff]
    %v3647 = vld [vmem:[#allocation7 + $0x150] sm:$0xff]
    %v3648 = vld [vmem:[#allocation7 + $0x158] sm:$0xff]
    %v3649 = vld [vmem:[#allocation7 + $0x160] sm:$0xff]
    %v3650 = vld [vmem:[#allocation7 + $0x168] sm:$0xff]
    %v3651 = vld [vmem:[#allocation7 + $0x170] sm:$0xff]
    %v3652 = vld [vmem:[#allocation7 + $0x178] sm:$0xff]
    %v3653 = vld [vmem:[#allocation7 + $0x180] sm:$0xff]
    %v3654 = vld [vmem:[#allocation7 + $0x188] sm:$0xff]
    %v3655 = vld [vmem:[#allocation7 + $0x190] sm:$0xff]
    %v3656 = vld [vmem:[#allocation7 + $0x198] sm:$0xff]
    %v3657 = vld [vmem:[#allocation7 + $0x1a0] sm:$0xff]
    %v3658 = vld [vmem:[#allocation7 + $0x1a8] sm:$0xff]
    %v3659 = vld [vmem:[#allocation7 + $0x1b0] sm:$0xff]
    %v3660 = vld [vmem:[#allocation7 + $0x1b8] sm:$0xff]
    %v3661 = vld [vmem:[#allocation7 + $0x1c0] sm:$0xff]
    %v3662 = vld [vmem:[#allocation7 + $0x1c8] sm:$0xff]
    %v3663 = vld [vmem:[#allocation7 + $0x1d0] sm:$0xff]
    %v3664 = vld [vmem:[#allocation7 + $0x1d8] sm:$0xff]
    %v3665 = vld [vmem:[#allocation7 + $0x1e0] sm:$0xff]
    %v3666 = vld [vmem:[#allocation7 + $0x1e8] sm:$0xff]
    %v3667 = vld [vmem:[#allocation7 + $0x1f0] sm:$0xff]
    %v3668 = vld [vmem:[#allocation7 + $0x1f8] sm:$0xff]
    %v3669 = vld [vmem:[#allocation7 + $0x200] sm:$0xff]
    %v3670 = vld [vmem:[#allocation7 + $0x208] sm:$0xff]
    %v3671 = vld [vmem:[#allocation7 + $0x210] sm:$0xff]
    %v3672 = vld [vmem:[#allocation7 + $0x218] sm:$0xff]
    %v3673 = vld [vmem:[#allocation7 + $0x220] sm:$0xff]
    %v3674 = vld [vmem:[#allocation7 + $0x228] sm:$0xff]
    %v3675 = vld [vmem:[#allocation7 + $0x230] sm:$0xff]
    %v3676 = vld [vmem:[#allocation7 + $0x238] sm:$0xff]
    %v3677 = vld [vmem:[#allocation7 + $0x240] sm:$0xff]
    %v3678 = vld [vmem:[#allocation7 + $0x248] sm:$0xff]
    %v3679 = vld [vmem:[#allocation7 + $0x250] sm:$0xff]
    %v3680 = vld [vmem:[#allocation7 + $0x258] sm:$0xff]
    %v3681 = vld [vmem:[#allocation7 + $0x260] sm:$0xff]
    %v3682 = vld [vmem:[#allocation7 + $0x268] sm:$0xff]
    %v3683 = vld [vmem:[#allocation7 + $0x270] sm:$0xff]
    %v3684 = vld [vmem:[#allocation7 + $0x278] sm:$0xff]
    %v3685 = vld [vmem:[#allocation7 + $0x280] sm:$0xff]
    %v3686 = vld [vmem:[#allocation7 + $0x288] sm:$0xff]
    %v3687 = vld [vmem:[#allocation7 + $0x290] sm:$0xff]
    %v3688 = vld [vmem:[#allocation7 + $0x298] sm:$0xff]
    %v3689 = vld [vmem:[#allocation7 + $0x2a0] sm:$0xff]
    %v3690 = vld [vmem:[#allocation7 + $0x2a8] sm:$0xff]
    %v3691 = vld [vmem:[#allocation7 + $0x2b0] sm:$0xff]
    %v3692 = vld [vmem:[#allocation7 + $0x2b8] sm:$0xff]
    %v3693 = vld [vmem:[#allocation7 + $0x2c0] sm:$0xff]
    %v3694 = vld [vmem:[#allocation7 + $0x2c8] sm:$0xff]
    %v3695 = vld [vmem:[#allocation7 + $0x2d0] sm:$0xff]
    %v3696 = vld [vmem:[#allocation7 + $0x2d8] sm:$0xff]
    %v3697 = vld [vmem:[#allocation7 + $0x2e0] sm:$0xff]
    %v3698 = vld [vmem:[#allocation7 + $0x2e8] sm:$0xff]
    %v3699 = vld [vmem:[#allocation7 + $0x2f0] sm:$0xff]
    %v3700 = vld [vmem:[#allocation7 + $0x2f8] sm:$0xff]
    %v3701 = vld [vmem:[#allocation7 + $0x300] sm:$0xff]
    %v3702 = vld [vmem:[#allocation7 + $0x308] sm:$0xff]
    %v3703 = vld [vmem:[#allocation7 + $0x310] sm:$0xff]
    %v3704 = vld [vmem:[#allocation7 + $0x318] sm:$0xff]
    %v3705 = vld [vmem:[#allocation7 + $0x320] sm:$0xff]
    %v3706 = vld [vmem:[#allocation7 + $0x328] sm:$0xff]
    %v3707 = vld [vmem:[#allocation7 + $0x330] sm:$0xff]
    %v3708 = vld [vmem:[#allocation7 + $0x338] sm:$0xff]
    %v3709 = vld [vmem:[#allocation7 + $0x340] sm:$0xff]
    %v3710 = vld [vmem:[#allocation7 + $0x348] sm:$0xff]
    %v3711 = vld [vmem:[#allocation7 + $0x350] sm:$0xff]
    %v3712 = vld [vmem:[#allocation7 + $0x358] sm:$0xff]
    %v3713 = vld [vmem:[#allocation7 + $0x360] sm:$0xff]
    %v3714 = vld [vmem:[#allocation7 + $0x368] sm:$0xff]
    %v3715 = vld [vmem:[#allocation7 + $0x370] sm:$0xff]
    %v3716 = vld [vmem:[#allocation7 + $0x378] sm:$0xff]
    %v3717 = vld [vmem:[#allocation7 + $0x380] sm:$0xff]
    %v3718 = vld [vmem:[#allocation7 + $0x388] sm:$0xff]
    %v3719 = vld [vmem:[#allocation7 + $0x390] sm:$0xff]
    %v3720 = vld [vmem:[#allocation7 + $0x398] sm:$0xff]
    %v3721 = vld [vmem:[#allocation7 + $0x3a0] sm:$0xff]
    %v3722 = vld [vmem:[#allocation7 + $0x3a8] sm:$0xff]
    %v3723 = vld [vmem:[#allocation7 + $0x3b0] sm:$0xff]
    %v3724 = vld [vmem:[#allocation7 + $0x3b8] sm:$0xff]
    %v3725 = vld [vmem:[#allocation7 + $0x3c0] sm:$0xff]
    %v3726 = vld [vmem:[#allocation7 + $0x3c8] sm:$0xff]
    %v3727 = vld [vmem:[#allocation7 + $0x3d0] sm:$0xff]
    %v3728 = vld [vmem:[#allocation7 + $0x3d8] sm:$0xff]
    %v3729 = vld [vmem:[#allocation7 + $0x3e0] sm:$0xff]
    %v3730 = vld [vmem:[#allocation7 + $0x3e8] sm:$0xff]
    %v3731 = vld [vmem:[#allocation7 + $0x3f0] sm:$0xff]
    %v3732 = vld [vmem:[#allocation7 + $0x3f8] sm:$0xff]
    %v3733 = vld [vmem:[#allocation7 + $0x400] sm:$0xff]
    %v3734 = vld [vmem:[#allocation7 + $0x408] sm:$0xff]
    %v3735 = vld [vmem:[#allocation7 + $0x410] sm:$0xff]
    %v3736 = vld [vmem:[#allocation7 + $0x418] sm:$0xff]
    %v3737 = vld [vmem:[#allocation7 + $0x420] sm:$0xff]
    %v3738 = vld [vmem:[#allocation7 + $0x428] sm:$0xff]
    %v3739 = vld [vmem:[#allocation7 + $0x430] sm:$0xff]
    %v3740 = vld [vmem:[#allocation7 + $0x438] sm:$0xff]
    %v3741 = vld [vmem:[#allocation7 + $0x440] sm:$0xff]
    %v3742 = vld [vmem:[#allocation7 + $0x448] sm:$0xff]
    %v3743 = vld [vmem:[#allocation7 + $0x450] sm:$0xff]
    %v3744 = vld [vmem:[#allocation7 + $0x458] sm:$0xff]
    %v3745 = vld [vmem:[#allocation7 + $0x460] sm:$0xff]
    %v3746 = vld [vmem:[#allocation7 + $0x468] sm:$0xff]
    %v3747 = vld [vmem:[#allocation7 + $0x470] sm:$0xff]
    %v3748 = vld [vmem:[#allocation7 + $0x478] sm:$0xff]
    %v3749 = vld [vmem:[#allocation7 + $0x480] sm:$0xff]
    %v3750 = vld [vmem:[#allocation7 + $0x488] sm:$0xff]
    %v3751 = vld [vmem:[#allocation7 + $0x490] sm:$0xff]
    %v3752 = vld [vmem:[#allocation7 + $0x498] sm:$0xff]
    %v3753 = vld [vmem:[#allocation7 + $0x4a0] sm:$0xff]
    %v3754 = vld [vmem:[#allocation7 + $0x4a8] sm:$0xff]
    %v3755 = vld [vmem:[#allocation7 + $0x4b0] sm:$0xff]
    %v3756 = vld [vmem:[#allocation7 + $0x4b8] sm:$0xff]
    %v3757 = vld [vmem:[#allocation7 + $0x4c0] sm:$0xff]
    %v3758 = vld [vmem:[#allocation7 + $0x4c8] sm:$0xff]
    %v3759 = vld [vmem:[#allocation7 + $0x4d0] sm:$0xff]
    %v3760 = vld [vmem:[#allocation7 + $0x4d8] sm:$0xff]
    %v3761 = vld [vmem:[#allocation7 + $0x4e0] sm:$0xff]
    %v3762 = vld [vmem:[#allocation7 + $0x4e8] sm:$0xff]
    %v3763 = vld [vmem:[#allocation7 + $0x4f0] sm:$0xff]
    %v3764 = vld [vmem:[#allocation7 + $0x4f8] sm:$0xff]
    %v3765 = vld [vmem:[#allocation7 + $0x500] sm:$0xff]
    %v3766 = vld [vmem:[#allocation7 + $0x508] sm:$0xff]
    %v3767 = vld [vmem:[#allocation7 + $0x510] sm:$0xff]
    %v3768 = vld [vmem:[#allocation7 + $0x518] sm:$0xff]
    %v3769 = vld [vmem:[#allocation7 + $0x520] sm:$0xff]
    %v3770 = vld [vmem:[#allocation7 + $0x528] sm:$0xff]
    %v3771 = vld [vmem:[#allocation7 + $0x530] sm:$0xff]
    %v3772 = vld [vmem:[#allocation7 + $0x538] sm:$0xff]
    %v3773 = vld [vmem:[#allocation7 + $0x540] sm:$0xff]
    %v3774 = vld [vmem:[#allocation7 + $0x548] sm:$0xff]
    %v3775 = vld [vmem:[#allocation7 + $0x550] sm:$0xff]
    %v3776 = vld [vmem:[#allocation7 + $0x558] sm:$0xff]
    %v3777 = vld [vmem:[#allocation7 + $0x560] sm:$0xff]
    %v3778 = vld [vmem:[#allocation7 + $0x568] sm:$0xff]
    %v3779 = vld [vmem:[#allocation7 + $0x570] sm:$0xff]
    %v3780 = vld [vmem:[#allocation7 + $0x578] sm:$0xff]
    %v3781 = vld [vmem:[#allocation7 + $0x580] sm:$0xff]
    %v3782 = vld [vmem:[#allocation7 + $0x588] sm:$0xff]
    %v3783 = vld [vmem:[#allocation7 + $0x590] sm:$0xff]
    %v3784 = vld [vmem:[#allocation7 + $0x598] sm:$0xff]
    %v3785 = vld [vmem:[#allocation7 + $0x5a0] sm:$0xff]
    %v3786 = vld [vmem:[#allocation7 + $0x5a8] sm:$0xff]
    %v3787 = vld [vmem:[#allocation7 + $0x5b0] sm:$0xff]
    %v3788 = vld [vmem:[#allocation7 + $0x5b8] sm:$0xff]
    %v3789 = vld [vmem:[#allocation7 + $0x5c0] sm:$0xff]
    %v3790 = vld [vmem:[#allocation7 + $0x5c8] sm:$0xff]
    %v3791 = vld [vmem:[#allocation7 + $0x5d0] sm:$0xff]
    %v3792 = vld [vmem:[#allocation7 + $0x5d8] sm:$0xff]
    %v3793 = vld [vmem:[#allocation7 + $0x5e0] sm:$0xff]
    %v3794 = vld [vmem:[#allocation7 + $0x5e8] sm:$0xff]
    %v3795 = vld [vmem:[#allocation7 + $0x5f0] sm:$0xff]
    %v3796 = vld [vmem:[#allocation7 + $0x5f8] sm:$0xff]
    %v3797 = vld [vmem:[#allocation7 + $0x600] sm:$0xff]
    %v3798 = vld [vmem:[#allocation7 + $0x608] sm:$0xff]
    %v3799 = vld [vmem:[#allocation7 + $0x610] sm:$0xff]
    %v3800 = vld [vmem:[#allocation7 + $0x618] sm:$0xff]
    %v3801 = vld [vmem:[#allocation7 + $0x620] sm:$0xff]
    %v3802 = vld [vmem:[#allocation7 + $0x628] sm:$0xff]
    %v3803 = vld [vmem:[#allocation7 + $0x630] sm:$0xff]
    %v3804 = vld [vmem:[#allocation7 + $0x638] sm:$0xff]
    %v3805 = vld [vmem:[#allocation7 + $0x640] sm:$0xff]
    %v3806 = vld [vmem:[#allocation7 + $0x648] sm:$0xff]
    %v3807 = vld [vmem:[#allocation7 + $0x650] sm:$0xff]
    %v3808 = vld [vmem:[#allocation7 + $0x658] sm:$0xff]
    %v3809 = vld [vmem:[#allocation7 + $0x660] sm:$0xff]
    %v3810 = vld [vmem:[#allocation7 + $0x668] sm:$0xff]
    %v3811 = vld [vmem:[#allocation7 + $0x670] sm:$0xff]
    %v3812 = vld [vmem:[#allocation7 + $0x678] sm:$0xff]
    %v3813 = vld [vmem:[#allocation7 + $0x680] sm:$0xff]
    %v3814 = vld [vmem:[#allocation7 + $0x688] sm:$0xff]
    %v3815 = vld [vmem:[#allocation7 + $0x690] sm:$0xff]
    %v3816 = vld [vmem:[#allocation7 + $0x698] sm:$0xff]
    %v3817 = vld [vmem:[#allocation7 + $0x6a0] sm:$0xff]
    %v3818 = vld [vmem:[#allocation7 + $0x6a8] sm:$0xff]
    %v3819 = vld [vmem:[#allocation7 + $0x6b0] sm:$0xff]
    %v3820 = vld [vmem:[#allocation7 + $0x6b8] sm:$0xff]
    %v3821 = vld [vmem:[#allocation7 + $0x6c0] sm:$0xff]
    %v3822 = vld [vmem:[#allocation7 + $0x6c8] sm:$0xff]
    %v3823 = vld [vmem:[#allocation7 + $0x6d0] sm:$0xff]
    %v3824 = vld [vmem:[#allocation7 + $0x6d8] sm:$0xff]
    %v3825 = vld [vmem:[#allocation7 + $0x6e0] sm:$0xff]
    %v3826 = vld [vmem:[#allocation7 + $0x6e8] sm:$0xff]
    %v3827 = vld [vmem:[#allocation7 + $0x6f0] sm:$0xff]
    %v3828 = vld [vmem:[#allocation7 + $0x6f8] sm:$0xff]
    %v3829 = vld [vmem:[#allocation7 + $0x700] sm:$0xff]
    %v3830 = vld [vmem:[#allocation7 + $0x708] sm:$0xff]
    %v3831 = vld [vmem:[#allocation7 + $0x710] sm:$0xff]
    %v3832 = vld [vmem:[#allocation7 + $0x718] sm:$0xff]
    %v3833 = vld [vmem:[#allocation7 + $0x720] sm:$0xff]
    %v3834 = vld [vmem:[#allocation7 + $0x728] sm:$0xff]
    %v3835 = vld [vmem:[#allocation7 + $0x730] sm:$0xff]
    %v3836 = vld [vmem:[#allocation7 + $0x738] sm:$0xff]
    %v3837 = vld [vmem:[#allocation7 + $0x740] sm:$0xff]
    %v3838 = vld [vmem:[#allocation7 + $0x748] sm:$0xff]
    %v3839 = vld [vmem:[#allocation7 + $0x750] sm:$0xff]
    %v3840 = vld [vmem:[#allocation7 + $0x758] sm:$0xff]
    %v3841 = vld [vmem:[#allocation7 + $0x760] sm:$0xff]
    %v3842 = vld [vmem:[#allocation7 + $0x768] sm:$0xff]
    %v3843 = vld [vmem:[#allocation7 + $0x770] sm:$0xff]
    %v3844 = vld [vmem:[#allocation7 + $0x778] sm:$0xff]
    %v3845 = vld [vmem:[#allocation7 + $0x780] sm:$0xff]
    %v3846 = vld [vmem:[#allocation7 + $0x788] sm:$0xff]
    %v3847 = vld [vmem:[#allocation7 + $0x790] sm:$0xff]
    %v3848 = vld [vmem:[#allocation7 + $0x798] sm:$0xff]
    %v3849 = vld [vmem:[#allocation7 + $0x7a0] sm:$0xff]
    %v3850 = vld [vmem:[#allocation7 + $0x7a8] sm:$0xff]
    %v3851 = vld [vmem:[#allocation7 + $0x7b0] sm:$0xff]
    %v3852 = vld [vmem:[#allocation7 + $0x7b8] sm:$0xff]
    %v3853 = vld [vmem:[#allocation7 + $0x7c0] sm:$0xff]
    %v3854 = vld [vmem:[#allocation7 + $0x7c8] sm:$0xff]
    %v3855 = vld [vmem:[#allocation7 + $0x7d0] sm:$0xff]
    %v3856 = vld [vmem:[#allocation7 + $0x7d8] sm:$0xff]
    %v3857 = vld [vmem:[#allocation7 + $0x7e0] sm:$0xff]
    %v3858 = vld [vmem:[#allocation7 + $0x7e8] sm:$0xff]
    %v3859 = vld [vmem:[#allocation7 + $0x7f0] sm:$0xff]
    %v3860 = vld [vmem:[#allocation7 + $0x7f8] sm:$0xff]
    %v3861 = vperm.slane %v187, 6
    %v3862 = vperm.slane %v188, 6
    %3865 = vst [vmem:[#allocation1] ss:$4 sm:$0xff] %v3603
    %s3866 = scalar_lea.vmem [#allocation1], 32
    %3867 = vst [vmem:[%s3866] ss:$4 sm:$0xff] %v3604
    %v3868 = vld.sshfl [vmem:[#allocation1] sm:$0xff pattern:$0x73625140]
    %v3869 = vld.sshfl [vmem:[#allocation1 + $0x8] sm:$0xff pattern:$0x73625140]
    %v3870 = vld.sshfl [vmem:[#allocation1 + $0x10] sm:$0xff pattern:$0x73625140]
    %v3871 = vld.sshfl [vmem:[#allocation1 + $0x18] sm:$0xff pattern:$0x73625140]
    %v3872 = vld.sshfl [vmem:[#allocation1 + $0x20] sm:$0xff pattern:$0x73625140]
    %v3873 = vld.sshfl [vmem:[#allocation1 + $0x28] sm:$0xff pattern:$0x73625140]
    %v3874 = vld.sshfl [vmem:[#allocation1 + $0x30] sm:$0xff pattern:$0x73625140]
    %v3875 = vld.sshfl [vmem:[#allocation1 + $0x38] sm:$0xff pattern:$0x73625140]
    %3884 = vmatpush.msra.mxu0 %v3635
    %3885 = vmatpush.msra.mxu0 %v3633
    %3886 = vmatpush.msra.mxu0 %v3631
    %3887 = vmatpush.msra.mxu0 %v3629
    %3888 = vmatpush.msra.mxu0 %v3627
    %3889 = vmatpush.msra.mxu0 %v3625
    %3890 = vmatpush.msra.mxu0 %v3623
    %3891 = vmatpush.msra.mxu0 %v3621
    %3892 = vmatpush.msra.mxu0 %v3619
    %3893 = vmatpush.msra.mxu0 %v3617
    %3894 = vmatpush.msra.mxu0 %v3615
    %3895 = vmatpush.msra.mxu0 %v3613
    %3896 = vmatpush.msra.mxu0 %v3611
    %3897 = vmatpush.msra.mxu0 %v3609
    %3898 = vmatpush.msra.mxu0 %v3607
    %3899 = vmatpush.msra.mxu0 %v3605
    %3900 = vmatmul.f32.gmra.mxu0 %v3868
    %v3901 = vpop.f32.mrf.mxu0
    %v3902 = vadd.f32 %v3861, %v3901
    %3903 = vdwg.mxu0
    %3904 = vmatpush.msra.mxu0 %v3667
    %3905 = vmatpush.msra.mxu0 %v3665
    %3906 = vmatpush.msra.mxu0 %v3663
    %3907 = vmatpush.msra.mxu0 %v3661
    %3908 = vmatpush.msra.mxu0 %v3659
    %3909 = vmatpush.msra.mxu0 %v3657
    %3910 = vmatpush.msra.mxu0 %v3655
    %3911 = vmatpush.msra.mxu0 %v3653
    %3912 = vmatpush.msra.mxu0 %v3651
    %3913 = vmatpush.msra.mxu0 %v3649
    %3914 = vmatpush.msra.mxu0 %v3647
    %3915 = vmatpush.msra.mxu0 %v3645
    %3916 = vmatpush.msra.mxu0 %v3643
    %3917 = vmatpush.msra.mxu0 %v3641
    %3918 = vmatpush.msra.mxu0 %v3639
    %3919 = vmatpush.msra.mxu0 %v3637
    %3920 = vmatmul.f32.gmra.mxu0 %v3869
    %v3921 = vpop.f32.mrf.mxu0
    %v3922 = vadd.f32 %v3902, %v3921
    %3923 = vdwg.mxu0
    %3924 = vmatpush.msra.mxu0 %v3699
    %3925 = vmatpush.msra.mxu0 %v3697
    %3926 = vmatpush.msra.mxu0 %v3695
    %3927 = vmatpush.msra.mxu0 %v3693
    %3928 = vmatpush.msra.mxu0 %v3691
    %3929 = vmatpush.msra.mxu0 %v3689
    %3930 = vmatpush.msra.mxu0 %v3687
    %3931 = vmatpush.msra.mxu0 %v3685
    %3932 = vmatpush.msra.mxu0 %v3683
    %3933 = vmatpush.msra.mxu0 %v3681
    %3934 = vmatpush.msra.mxu0 %v3679
    %3935 = vmatpush.msra.mxu0 %v3677
    %3936 = vmatpush.msra.mxu0 %v3675
    %3937 = vmatpush.msra.mxu0 %v3673
    %3938 = vmatpush.msra.mxu0 %v3671
    %3939 = vmatpush.msra.mxu0 %v3669
    %3940 = vmatmul.f32.gmra.mxu0 %v3870
    %v3941 = vpop.f32.mrf.mxu0
    %v3942 = vadd.f32 %v3922, %v3941
    %3943 = vdwg.mxu0
    %3944 = vmatpush.msra.mxu0 %v3731
    %3945 = vmatpush.msra.mxu0 %v3729
    %3946 = vmatpush.msra.mxu0 %v3727
    %3947 = vmatpush.msra.mxu0 %v3725
    %3948 = vmatpush.msra.mxu0 %v3723
    %3949 = vmatpush.msra.mxu0 %v3721
    %3950 = vmatpush.msra.mxu0 %v3719
    %3951 = vmatpush.msra.mxu0 %v3717
    %3952 = vmatpush.msra.mxu0 %v3715
    %3953 = vmatpush.msra.mxu0 %v3713
    %3954 = vmatpush.msra.mxu0 %v3711
    %3955 = vmatpush.msra.mxu0 %v3709
    %3956 = vmatpush.msra.mxu0 %v3707
    %3957 = vmatpush.msra.mxu0 %v3705
    %3958 = vmatpush.msra.mxu0 %v3703
    %3959 = vmatpush.msra.mxu0 %v3701
    %3960 = vmatmul.f32.gmra.mxu0 %v3871
    %v3961 = vpop.f32.mrf.mxu0
    %v3962 = vadd.f32 %v3942, %v3961
    %3963 = vdwg.mxu0
    %3964 = vmatpush.msra.mxu0 %v3763
    %3965 = vmatpush.msra.mxu0 %v3761
    %3966 = vmatpush.msra.mxu0 %v3759
    %3967 = vmatpush.msra.mxu0 %v3757
    %3968 = vmatpush.msra.mxu0 %v3755
    %3969 = vmatpush.msra.mxu0 %v3753
    %3970 = vmatpush.msra.mxu0 %v3751
    %3971 = vmatpush.msra.mxu0 %v3749
    %3972 = vmatpush.msra.mxu0 %v3747
    %3973 = vmatpush.msra.mxu0 %v3745
    %3974 = vmatpush.msra.mxu0 %v3743
    %3975 = vmatpush.msra.mxu0 %v3741
    %3976 = vmatpush.msra.mxu0 %v3739
    %3977 = vmatpush.msra.mxu0 %v3737
    %3978 = vmatpush.msra.mxu0 %v3735
    %3979 = vmatpush.msra.mxu0 %v3733
    %3980 = vmatmul.f32.gmra.mxu0 %v3872
    %v3981 = vpop.f32.mrf.mxu0
    %v3982 = vadd.f32 %v3962, %v3981
    %3983 = vdwg.mxu0
    %3984 = vmatpush.msra.mxu0 %v3795
    %3985 = vmatpush.msra.mxu0 %v3793
    %3986 = vmatpush.msra.mxu0 %v3791
    %3987 = vmatpush.msra.mxu0 %v3789
    %3988 = vmatpush.msra.mxu0 %v3787
    %3989 = vmatpush.msra.mxu0 %v3785
    %3990 = vmatpush.msra.mxu0 %v3783
    %3991 = vmatpush.msra.mxu0 %v3781
    %3992 = vmatpush.msra.mxu0 %v3779
    %3993 = vmatpush.msra.mxu0 %v3777
    %3994 = vmatpush.msra.mxu0 %v3775
    %3995 = vmatpush.msra.mxu0 %v3773
    %3996 = vmatpush.msra.mxu0 %v3771
    %3997 = vmatpush.msra.mxu0 %v3769
    %3998 = vmatpush.msra.mxu0 %v3767
    %3999 = vmatpush.msra.mxu0 %v3765
    %4000 = vmatmul.f32.gmra.mxu0 %v3873
    %v4001 = vpop.f32.mrf.mxu0
    %v4002 = vadd.f32 %v3982, %v4001
    %4003 = vdwg.mxu0
    %4004 = vmatpush.msra.mxu0 %v3827
    %4005 = vmatpush.msra.mxu0 %v3825
    %4006 = vmatpush.msra.mxu0 %v3823
    %4007 = vmatpush.msra.mxu0 %v3821
    %4008 = vmatpush.msra.mxu0 %v3819
    %4009 = vmatpush.msra.mxu0 %v3817
    %4010 = vmatpush.msra.mxu0 %v3815
    %4011 = vmatpush.msra.mxu0 %v3813
    %4012 = vmatpush.msra.mxu0 %v3811
    %4013 = vmatpush.msra.mxu0 %v3809
    %4014 = vmatpush.msra.mxu0 %v3807
    %4015 = vmatpush.msra.mxu0 %v3805
    %4016 = vmatpush.msra.mxu0 %v3803
    %4017 = vmatpush.msra.mxu0 %v3801
    %4018 = vmatpush.msra.mxu0 %v3799
    %4019 = vmatpush.msra.mxu0 %v3797
    %4020 = vmatmul.f32.gmra.mxu0 %v3874
    %v4021 = vpop.f32.mrf.mxu0
    %v4022 = vadd.f32 %v4002, %v4021
    %4023 = vdwg.mxu0
    %4024 = vmatpush.msra.mxu0 %v3859
    %4025 = vmatpush.msra.mxu0 %v3857
    %4026 = vmatpush.msra.mxu0 %v3855
    %4027 = vmatpush.msra.mxu0 %v3853
    %4028 = vmatpush.msra.mxu0 %v3851
    %4029 = vmatpush.msra.mxu0 %v3849
    %4030 = vmatpush.msra.mxu0 %v3847
    %4031 = vmatpush.msra.mxu0 %v3845
    %4032 = vmatpush.msra.mxu0 %v3843
    %4033 = vmatpush.msra.mxu0 %v3841
    %4034 = vmatpush.msra.mxu0 %v3839
    %4035 = vmatpush.msra.mxu0 %v3837
    %4036 = vmatpush.msra.mxu0 %v3835
    %4037 = vmatpush.msra.mxu0 %v3833
    %4038 = vmatpush.msra.mxu0 %v3831
    %4039 = vmatpush.msra.mxu0 %v3829
    %4040 = vmatmul.f32.gmra.mxu0 %v3875
    %v4041 = vpop.f32.mrf.mxu0
    %v4042 = vadd.f32 %v4022, %v4041
    %4043 = vdwg.mxu0
    %4044 = vmatpush.msra.mxu0 %v3636
    %4045 = vmatpush.msra.mxu0 %v3634
    %4046 = vmatpush.msra.mxu0 %v3632
    %4047 = vmatpush.msra.mxu0 %v3630
    %4048 = vmatpush.msra.mxu0 %v3628
    %4049 = vmatpush.msra.mxu0 %v3626
    %4050 = vmatpush.msra.mxu0 %v3624
    %4051 = vmatpush.msra.mxu0 %v3622
    %4052 = vmatpush.msra.mxu0 %v3620
    %4053 = vmatpush.msra.mxu0 %v3618
    %4054 = vmatpush.msra.mxu0 %v3616
    %4055 = vmatpush.msra.mxu0 %v3614
    %4056 = vmatpush.msra.mxu0 %v3612
    %4057 = vmatpush.msra.mxu0 %v3610
    %4058 = vmatpush.msra.mxu0 %v3608
    %4059 = vmatpush.msra.mxu0 %v3606
    %4060 = vmatmul.f32.gmra.mxu0 %v3868
    %v4061 = vpop.f32.mrf.mxu0
    %v4062 = vadd.f32 %v3862, %v4061
    %4063 = vdwg.mxu0
    %4064 = vmatpush.msra.mxu0 %v3668
    %4065 = vmatpush.msra.mxu0 %v3666
    %4066 = vmatpush.msra.mxu0 %v3664
    %4067 = vmatpush.msra.mxu0 %v3662
    %4068 = vmatpush.msra.mxu0 %v3660
    %4069 = vmatpush.msra.mxu0 %v3658
    %4070 = vmatpush.msra.mxu0 %v3656
    %4071 = vmatpush.msra.mxu0 %v3654
    %4072 = vmatpush.msra.mxu0 %v3652
    %4073 = vmatpush.msra.mxu0 %v3650
    %4074 = vmatpush.msra.mxu0 %v3648
    %4075 = vmatpush.msra.mxu0 %v3646
    %4076 = vmatpush.msra.mxu0 %v3644
    %4077 = vmatpush.msra.mxu0 %v3642
    %4078 = vmatpush.msra.mxu0 %v3640
    %4079 = vmatpush.msra.mxu0 %v3638
    %4080 = vmatmul.f32.gmra.mxu0 %v3869
    %v4081 = vpop.f32.mrf.mxu0
    %v4082 = vadd.f32 %v4062, %v4081
    %4083 = vdwg.mxu0
    %4084 = vmatpush.msra.mxu0 %v3700
    %4085 = vmatpush.msra.mxu0 %v3698
    %4086 = vmatpush.msra.mxu0 %v3696
    %4087 = vmatpush.msra.mxu0 %v3694
    %4088 = vmatpush.msra.mxu0 %v3692
    %4089 = vmatpush.msra.mxu0 %v3690
    %4090 = vmatpush.msra.mxu0 %v3688
    %4091 = vmatpush.msra.mxu0 %v3686
    %4092 = vmatpush.msra.mxu0 %v3684
    %4093 = vmatpush.msra.mxu0 %v3682
    %4094 = vmatpush.msra.mxu0 %v3680
    %4095 = vmatpush.msra.mxu0 %v3678
    %4096 = vmatpush.msra.mxu0 %v3676
    %4097 = vmatpush.msra.mxu0 %v3674
    %4098 = vmatpush.msra.mxu0 %v3672
    %4099 = vmatpush.msra.mxu0 %v3670
    %4100 = vmatmul.f32.gmra.mxu0 %v3870
    %v4101 = vpop.f32.mrf.mxu0
    %v4102 = vadd.f32 %v4082, %v4101
    %4103 = vdwg.mxu0
    %4104 = vmatpush.msra.mxu0 %v3732
    %4105 = vmatpush.msra.mxu0 %v3730
    %4106 = vmatpush.msra.mxu0 %v3728
    %4107 = vmatpush.msra.mxu0 %v3726
    %4108 = vmatpush.msra.mxu0 %v3724
    %4109 = vmatpush.msra.mxu0 %v3722
    %4110 = vmatpush.msra.mxu0 %v3720
    %4111 = vmatpush.msra.mxu0 %v3718
    %4112 = vmatpush.msra.mxu0 %v3716
    %4113 = vmatpush.msra.mxu0 %v3714
    %4114 = vmatpush.msra.mxu0 %v3712
    %4115 = vmatpush.msra.mxu0 %v3710
    %4116 = vmatpush.msra.mxu0 %v3708
    %4117 = vmatpush.msra.mxu0 %v3706
    %4118 = vmatpush.msra.mxu0 %v3704
    %4119 = vmatpush.msra.mxu0 %v3702
    %4120 = vmatmul.f32.gmra.mxu0 %v3871
    %v4121 = vpop.f32.mrf.mxu0
    %v4122 = vadd.f32 %v4102, %v4121
    %4123 = vdwg.mxu0
    %4124 = vmatpush.msra.mxu0 %v3764
    %4125 = vmatpush.msra.mxu0 %v3762
    %4126 = vmatpush.msra.mxu0 %v3760
    %4127 = vmatpush.msra.mxu0 %v3758
    %4128 = vmatpush.msra.mxu0 %v3756
    %4129 = vmatpush.msra.mxu0 %v3754
    %4130 = vmatpush.msra.mxu0 %v3752
    %4131 = vmatpush.msra.mxu0 %v3750
    %4132 = vmatpush.msra.mxu0 %v3748
    %4133 = vmatpush.msra.mxu0 %v3746
    %4134 = vmatpush.msra.mxu0 %v3744
    %4135 = vmatpush.msra.mxu0 %v3742
    %4136 = vmatpush.msra.mxu0 %v3740
    %4137 = vmatpush.msra.mxu0 %v3738
    %4138 = vmatpush.msra.mxu0 %v3736
    %4139 = vmatpush.msra.mxu0 %v3734
    %4140 = vmatmul.f32.gmra.mxu0 %v3872
    %v4141 = vpop.f32.mrf.mxu0
    %v4142 = vadd.f32 %v4122, %v4141
    %4143 = vdwg.mxu0
    %4144 = vmatpush.msra.mxu0 %v3796
    %4145 = vmatpush.msra.mxu0 %v3794
    %4146 = vmatpush.msra.mxu0 %v3792
    %4147 = vmatpush.msra.mxu0 %v3790
    %4148 = vmatpush.msra.mxu0 %v3788
    %4149 = vmatpush.msra.mxu0 %v3786
    %4150 = vmatpush.msra.mxu0 %v3784
    %4151 = vmatpush.msra.mxu0 %v3782
    %4152 = vmatpush.msra.mxu0 %v3780
    %4153 = vmatpush.msra.mxu0 %v3778
    %4154 = vmatpush.msra.mxu0 %v3776
    %4155 = vmatpush.msra.mxu0 %v3774
    %4156 = vmatpush.msra.mxu0 %v3772
    %4157 = vmatpush.msra.mxu0 %v3770
    %4158 = vmatpush.msra.mxu0 %v3768
    %4159 = vmatpush.msra.mxu0 %v3766
    %4160 = vmatmul.f32.gmra.mxu0 %v3873
    %v4161 = vpop.f32.mrf.mxu0
    %v4162 = vadd.f32 %v4142, %v4161
    %4163 = vdwg.mxu0
    %4164 = vmatpush.msra.mxu0 %v3828
    %4165 = vmatpush.msra.mxu0 %v3826
    %4166 = vmatpush.msra.mxu0 %v3824
    %4167 = vmatpush.msra.mxu0 %v3822
    %4168 = vmatpush.msra.mxu0 %v3820
    %4169 = vmatpush.msra.mxu0 %v3818
    %4170 = vmatpush.msra.mxu0 %v3816
    %4171 = vmatpush.msra.mxu0 %v3814
    %4172 = vmatpush.msra.mxu0 %v3812
    %4173 = vmatpush.msra.mxu0 %v3810
    %4174 = vmatpush.msra.mxu0 %v3808
    %4175 = vmatpush.msra.mxu0 %v3806
    %4176 = vmatpush.msra.mxu0 %v3804
    %4177 = vmatpush.msra.mxu0 %v3802
    %4178 = vmatpush.msra.mxu0 %v3800
    %4179 = vmatpush.msra.mxu0 %v3798
    %4180 = vmatmul.f32.gmra.mxu0 %v3874
    %v4181 = vpop.f32.mrf.mxu0
    %v4182 = vadd.f32 %v4162, %v4181
    %4183 = vdwg.mxu0
    %4184 = vmatpush.msra.mxu0 %v3860
    %4185 = vmatpush.msra.mxu0 %v3858
    %4186 = vmatpush.msra.mxu0 %v3856
    %4187 = vmatpush.msra.mxu0 %v3854
    %4188 = vmatpush.msra.mxu0 %v3852
    %4189 = vmatpush.msra.mxu0 %v3850
    %4190 = vmatpush.msra.mxu0 %v3848
    %4191 = vmatpush.msra.mxu0 %v3846
    %4192 = vmatpush.msra.mxu0 %v3844
    %4193 = vmatpush.msra.mxu0 %v3842
    %4194 = vmatpush.msra.mxu0 %v3840
    %4195 = vmatpush.msra.mxu0 %v3838
    %4196 = vmatpush.msra.mxu0 %v3836
    %4197 = vmatpush.msra.mxu0 %v3834
    %4198 = vmatpush.msra.mxu0 %v3832
    %4199 = vmatpush.msra.mxu0 %v3830
    %4200 = vmatmul.f32.gmra.mxu0 %v3875
    %v4201 = vpop.f32.mrf.mxu0
    %v4202 = vadd.f32 %v4182, %v4201
    %4203 = vdwg.mxu0
    %v4204 = vld [vmem:[#allocation11] sm:$0xff]
    %v4205 = vld [vmem:[#allocation11 + $0x8] sm:$0xff]
    %v4206 = vld [vmem:[#allocation11 + $0x10] sm:$0xff]
    %v4207 = vld [vmem:[#allocation11 + $0x18] sm:$0xff]
    %v4208 = vld [vmem:[#allocation11 + $0x20] sm:$0xff]
    %v4209 = vld [vmem:[#allocation11 + $0x28] sm:$0xff]
    %v4210 = vld [vmem:[#allocation11 + $0x30] sm:$0xff]
    %v4211 = vld [vmem:[#allocation11 + $0x38] sm:$0xff]
    %v4212 = vld [vmem:[#allocation11 + $0x40] sm:$0xff]
    %v4213 = vld [vmem:[#allocation11 + $0x48] sm:$0xff]
    %v4214 = vld [vmem:[#allocation11 + $0x50] sm:$0xff]
    %v4215 = vld [vmem:[#allocation11 + $0x58] sm:$0xff]
    %v4216 = vld [vmem:[#allocation11 + $0x60] sm:$0xff]
    %v4217 = vld [vmem:[#allocation11 + $0x68] sm:$0xff]
    %v4218 = vld [vmem:[#allocation11 + $0x70] sm:$0xff]
    %v4219 = vld [vmem:[#allocation11 + $0x78] sm:$0xff]
    %v4220 = vld [vmem:[#allocation11 + $0x80] sm:$0xff]
    %v4221 = vld [vmem:[#allocation11 + $0x88] sm:$0xff]
    %v4222 = vld [vmem:[#allocation11 + $0x90] sm:$0xff]
    %v4223 = vld [vmem:[#allocation11 + $0x98] sm:$0xff]
    %v4224 = vld [vmem:[#allocation11 + $0xa0] sm:$0xff]
    %v4225 = vld [vmem:[#allocation11 + $0xa8] sm:$0xff]
    %v4226 = vld [vmem:[#allocation11 + $0xb0] sm:$0xff]
    %v4227 = vld [vmem:[#allocation11 + $0xb8] sm:$0xff]
    %v4228 = vld [vmem:[#allocation11 + $0xc0] sm:$0xff]
    %v4229 = vld [vmem:[#allocation11 + $0xc8] sm:$0xff]
    %v4230 = vld [vmem:[#allocation11 + $0xd0] sm:$0xff]
    %v4231 = vld [vmem:[#allocation11 + $0xd8] sm:$0xff]
    %v4232 = vld [vmem:[#allocation11 + $0xe0] sm:$0xff]
    %v4233 = vld [vmem:[#allocation11 + $0xe8] sm:$0xff]
    %v4234 = vld [vmem:[#allocation11 + $0xf0] sm:$0xff]
    %v4235 = vld [vmem:[#allocation11 + $0xf8] sm:$0xff]
    %v4236 = vld [vmem:[#allocation11 + $0x100] sm:$0xff]
    %v4237 = vld [vmem:[#allocation11 + $0x108] sm:$0xff]
    %v4238 = vld [vmem:[#allocation11 + $0x110] sm:$0xff]
    %v4239 = vld [vmem:[#allocation11 + $0x118] sm:$0xff]
    %v4240 = vld [vmem:[#allocation11 + $0x120] sm:$0xff]
    %v4241 = vld [vmem:[#allocation11 + $0x128] sm:$0xff]
    %v4242 = vld [vmem:[#allocation11 + $0x130] sm:$0xff]
    %v4243 = vld [vmem:[#allocation11 + $0x138] sm:$0xff]
    %v4244 = vld [vmem:[#allocation11 + $0x140] sm:$0xff]
    %v4245 = vld [vmem:[#allocation11 + $0x148] sm:$0xff]
    %v4246 = vld [vmem:[#allocation11 + $0x150] sm:$0xff]
    %v4247 = vld [vmem:[#allocation11 + $0x158] sm:$0xff]
    %v4248 = vld [vmem:[#allocation11 + $0x160] sm:$0xff]
    %v4249 = vld [vmem:[#allocation11 + $0x168] sm:$0xff]
    %v4250 = vld [vmem:[#allocation11 + $0x170] sm:$0xff]
    %v4251 = vld [vmem:[#allocation11 + $0x178] sm:$0xff]
    %v4252 = vld [vmem:[#allocation11 + $0x180] sm:$0xff]
    %v4253 = vld [vmem:[#allocation11 + $0x188] sm:$0xff]
    %v4254 = vld [vmem:[#allocation11 + $0x190] sm:$0xff]
    %v4255 = vld [vmem:[#allocation11 + $0x198] sm:$0xff]
    %v4256 = vld [vmem:[#allocation11 + $0x1a0] sm:$0xff]
    %v4257 = vld [vmem:[#allocation11 + $0x1a8] sm:$0xff]
    %v4258 = vld [vmem:[#allocation11 + $0x1b0] sm:$0xff]
    %v4259 = vld [vmem:[#allocation11 + $0x1b8] sm:$0xff]
    %v4260 = vld [vmem:[#allocation11 + $0x1c0] sm:$0xff]
    %v4261 = vld [vmem:[#allocation11 + $0x1c8] sm:$0xff]
    %v4262 = vld [vmem:[#allocation11 + $0x1d0] sm:$0xff]
    %v4263 = vld [vmem:[#allocation11 + $0x1d8] sm:$0xff]
    %v4264 = vld [vmem:[#allocation11 + $0x1e0] sm:$0xff]
    %v4265 = vld [vmem:[#allocation11 + $0x1e8] sm:$0xff]
    %v4266 = vld [vmem:[#allocation11 + $0x1f0] sm:$0xff]
    %v4267 = vld [vmem:[#allocation11 + $0x1f8] sm:$0xff]
    %v4268 = vld [vmem:[#allocation11 + $0x200] sm:$0xff]
    %v4269 = vld [vmem:[#allocation11 + $0x208] sm:$0xff]
    %v4270 = vld [vmem:[#allocation11 + $0x210] sm:$0xff]
    %v4271 = vld [vmem:[#allocation11 + $0x218] sm:$0xff]
    %v4272 = vld [vmem:[#allocation11 + $0x220] sm:$0xff]
    %v4273 = vld [vmem:[#allocation11 + $0x228] sm:$0xff]
    %v4274 = vld [vmem:[#allocation11 + $0x230] sm:$0xff]
    %v4275 = vld [vmem:[#allocation11 + $0x238] sm:$0xff]
    %v4276 = vld [vmem:[#allocation11 + $0x240] sm:$0xff]
    %v4277 = vld [vmem:[#allocation11 + $0x248] sm:$0xff]
    %v4278 = vld [vmem:[#allocation11 + $0x250] sm:$0xff]
    %v4279 = vld [vmem:[#allocation11 + $0x258] sm:$0xff]
    %v4280 = vld [vmem:[#allocation11 + $0x260] sm:$0xff]
    %v4281 = vld [vmem:[#allocation11 + $0x268] sm:$0xff]
    %v4282 = vld [vmem:[#allocation11 + $0x270] sm:$0xff]
    %v4283 = vld [vmem:[#allocation11 + $0x278] sm:$0xff]
    %v4284 = vld [vmem:[#allocation11 + $0x280] sm:$0xff]
    %v4285 = vld [vmem:[#allocation11 + $0x288] sm:$0xff]
    %v4286 = vld [vmem:[#allocation11 + $0x290] sm:$0xff]
    %v4287 = vld [vmem:[#allocation11 + $0x298] sm:$0xff]
    %v4288 = vld [vmem:[#allocation11 + $0x2a0] sm:$0xff]
    %v4289 = vld [vmem:[#allocation11 + $0x2a8] sm:$0xff]
    %v4290 = vld [vmem:[#allocation11 + $0x2b0] sm:$0xff]
    %v4291 = vld [vmem:[#allocation11 + $0x2b8] sm:$0xff]
    %v4292 = vld [vmem:[#allocation11 + $0x2c0] sm:$0xff]
    %v4293 = vld [vmem:[#allocation11 + $0x2c8] sm:$0xff]
    %v4294 = vld [vmem:[#allocation11 + $0x2d0] sm:$0xff]
    %v4295 = vld [vmem:[#allocation11 + $0x2d8] sm:$0xff]
    %v4296 = vld [vmem:[#allocation11 + $0x2e0] sm:$0xff]
    %v4297 = vld [vmem:[#allocation11 + $0x2e8] sm:$0xff]
    %v4298 = vld [vmem:[#allocation11 + $0x2f0] sm:$0xff]
    %v4299 = vld [vmem:[#allocation11 + $0x2f8] sm:$0xff]
    %v4300 = vld [vmem:[#allocation11 + $0x300] sm:$0xff]
    %v4301 = vld [vmem:[#allocation11 + $0x308] sm:$0xff]
    %v4302 = vld [vmem:[#allocation11 + $0x310] sm:$0xff]
    %v4303 = vld [vmem:[#allocation11 + $0x318] sm:$0xff]
    %v4304 = vld [vmem:[#allocation11 + $0x320] sm:$0xff]
    %v4305 = vld [vmem:[#allocation11 + $0x328] sm:$0xff]
    %v4306 = vld [vmem:[#allocation11 + $0x330] sm:$0xff]
    %v4307 = vld [vmem:[#allocation11 + $0x338] sm:$0xff]
    %v4308 = vld [vmem:[#allocation11 + $0x340] sm:$0xff]
    %v4309 = vld [vmem:[#allocation11 + $0x348] sm:$0xff]
    %v4310 = vld [vmem:[#allocation11 + $0x350] sm:$0xff]
    %v4311 = vld [vmem:[#allocation11 + $0x358] sm:$0xff]
    %v4312 = vld [vmem:[#allocation11 + $0x360] sm:$0xff]
    %v4313 = vld [vmem:[#allocation11 + $0x368] sm:$0xff]
    %v4314 = vld [vmem:[#allocation11 + $0x370] sm:$0xff]
    %v4315 = vld [vmem:[#allocation11 + $0x378] sm:$0xff]
    %v4316 = vld [vmem:[#allocation11 + $0x380] sm:$0xff]
    %v4317 = vld [vmem:[#allocation11 + $0x388] sm:$0xff]
    %v4318 = vld [vmem:[#allocation11 + $0x390] sm:$0xff]
    %v4319 = vld [vmem:[#allocation11 + $0x398] sm:$0xff]
    %v4320 = vld [vmem:[#allocation11 + $0x3a0] sm:$0xff]
    %v4321 = vld [vmem:[#allocation11 + $0x3a8] sm:$0xff]
    %v4322 = vld [vmem:[#allocation11 + $0x3b0] sm:$0xff]
    %v4323 = vld [vmem:[#allocation11 + $0x3b8] sm:$0xff]
    %v4324 = vld [vmem:[#allocation11 + $0x3c0] sm:$0xff]
    %v4325 = vld [vmem:[#allocation11 + $0x3c8] sm:$0xff]
    %v4326 = vld [vmem:[#allocation11 + $0x3d0] sm:$0xff]
    %v4327 = vld [vmem:[#allocation11 + $0x3d8] sm:$0xff]
    %v4328 = vld [vmem:[#allocation11 + $0x3e0] sm:$0xff]
    %v4329 = vld [vmem:[#allocation11 + $0x3e8] sm:$0xff]
    %v4330 = vld [vmem:[#allocation11 + $0x3f0] sm:$0xff]
    %v4331 = vld [vmem:[#allocation11 + $0x3f8] sm:$0xff]
    %v4333 = vperm.slane %v189, 0
    %v4334 = vperm.slane %v189, 2
    %v4335 = vperm.slane %v189, 4
    %v4336 = vperm.slane %v189, 6
    %v4341 = vperm.slane %v4333, 0
    %v4342 = vperm.slane %v4334, 0
    %v4343 = vperm.slane %v4335, 0
    %v4344 = vperm.slane %v4336, 0
    %4345 = vmatpush.msra.mxu0 %v4264
    %4346 = vmatpush.msra.mxu0 %v4260
    %4347 = vmatpush.msra.mxu0 %v4256
    %4348 = vmatpush.msra.mxu0 %v4252
    %4349 = vmatpush.msra.mxu0 %v4248
    %4350 = vmatpush.msra.mxu0 %v4244
    %4351 = vmatpush.msra.mxu0 %v4240
    %4352 = vmatpush.msra.mxu0 %v4236
    %4353 = vmatpush.msra.mxu0 %v4232
    %4354 = vmatpush.msra.mxu0 %v4228
    %4355 = vmatpush.msra.mxu0 %v4224
    %4356 = vmatpush.msra.mxu0 %v4220
    %4357 = vmatpush.msra.mxu0 %v4216
    %4358 = vmatpush.msra.mxu0 %v4212
    %4359 = vmatpush.msra.mxu0 %v4208
    %4360 = vmatpush.msra.mxu0 %v4204
    %4361 = vmatmul.f32.gmra.mxu0 %v4042
    %v4362 = vpop.f32.mrf.mxu0
    %v4363 = vadd.f32 %v4341, %v4362
    %4364 = vdwg.mxu0
    %4365 = vmatpush.msra.mxu0 %v4328
    %4366 = vmatpush.msra.mxu0 %v4324
    %4367 = vmatpush.msra.mxu0 %v4320
    %4368 = vmatpush.msra.mxu0 %v4316
    %4369 = vmatpush.msra.mxu0 %v4312
    %4370 = vmatpush.msra.mxu0 %v4308
    %4371 = vmatpush.msra.mxu0 %v4304
    %4372 = vmatpush.msra.mxu0 %v4300
    %4373 = vmatpush.msra.mxu0 %v4296
    %4374 = vmatpush.msra.mxu0 %v4292
    %4375 = vmatpush.msra.mxu0 %v4288
    %4376 = vmatpush.msra.mxu0 %v4284
    %4377 = vmatpush.msra.mxu0 %v4280
    %4378 = vmatpush.msra.mxu0 %v4276
    %4379 = vmatpush.msra.mxu0 %v4272
    %4380 = vmatpush.msra.mxu0 %v4268
    %4381 = vmatmul.f32.gmra.mxu0 %v4202
    %v4382 = vpop.f32.mrf.mxu0
    %v4383 = vadd.f32 %v4363, %v4382
    %4384 = vdwg.mxu0
    %4385 = vmatpush.msra.mxu0 %v4265
    %4386 = vmatpush.msra.mxu0 %v4261
    %4387 = vmatpush.msra.mxu0 %v4257
    %4388 = vmatpush.msra.mxu0 %v4253
    %4389 = vmatpush.msra.mxu0 %v4249
    %4390 = vmatpush.msra.mxu0 %v4245
    %4391 = vmatpush.msra.mxu0 %v4241
    %4392 = vmatpush.msra.mxu0 %v4237
    %4393 = vmatpush.msra.mxu0 %v4233
    %4394 = vmatpush.msra.mxu0 %v4229
    %4395 = vmatpush.msra.mxu0 %v4225
    %4396 = vmatpush.msra.mxu0 %v4221
    %4397 = vmatpush.msra.mxu0 %v4217
    %4398 = vmatpush.msra.mxu0 %v4213
    %4399 = vmatpush.msra.mxu0 %v4209
    %4400 = vmatpush.msra.mxu0 %v4205
    %4401 = vmatmul.f32.gmra.mxu0 %v4042
    %v4402 = vpop.f32.mrf.mxu0
    %v4403 = vadd.f32 %v4342, %v4402
    %4404 = vdwg.mxu0
    %4405 = vmatpush.msra.mxu0 %v4329
    %4406 = vmatpush.msra.mxu0 %v4325
    %4407 = vmatpush.msra.mxu0 %v4321
    %4408 = vmatpush.msra.mxu0 %v4317
    %4409 = vmatpush.msra.mxu0 %v4313
    %4410 = vmatpush.msra.mxu0 %v4309
    %4411 = vmatpush.msra.mxu0 %v4305
    %4412 = vmatpush.msra.mxu0 %v4301
    %4413 = vmatpush.msra.mxu0 %v4297
    %4414 = vmatpush.msra.mxu0 %v4293
    %4415 = vmatpush.msra.mxu0 %v4289
    %4416 = vmatpush.msra.mxu0 %v4285
    %4417 = vmatpush.msra.mxu0 %v4281
    %4418 = vmatpush.msra.mxu0 %v4277
    %4419 = vmatpush.msra.mxu0 %v4273
    %4420 = vmatpush.msra.mxu0 %v4269
    %4421 = vmatmul.f32.gmra.mxu0 %v4202
    %v4422 = vpop.f32.mrf.mxu0
    %v4423 = vadd.f32 %v4403, %v4422
    %4424 = vdwg.mxu0
    %4425 = vmatpush.msra.mxu0 %v4266
    %4426 = vmatpush.msra.mxu0 %v4262
    %4427 = vmatpush.msra.mxu0 %v4258
    %4428 = vmatpush.msra.mxu0 %v4254
    %4429 = vmatpush.msra.mxu0 %v4250
    %4430 = vmatpush.msra.mxu0 %v4246
    %4431 = vmatpush.msra.mxu0 %v4242
    %4432 = vmatpush.msra.mxu0 %v4238
    %4433 = vmatpush.msra.mxu0 %v4234
    %4434 = vmatpush.msra.mxu0 %v4230
    %4435 = vmatpush.msra.mxu0 %v4226
    %4436 = vmatpush.msra.mxu0 %v4222
    %4437 = vmatpush.msra.mxu0 %v4218
    %4438 = vmatpush.msra.mxu0 %v4214
    %4439 = vmatpush.msra.mxu0 %v4210
    %4440 = vmatpush.msra.mxu0 %v4206
    %4441 = vmatmul.f32.gmra.mxu0 %v4042
    %v4442 = vpop.f32.mrf.mxu0
    %v4443 = vadd.f32 %v4343, %v4442
    %4444 = vdwg.mxu0
    %4445 = vmatpush.msra.mxu0 %v4330
    %4446 = vmatpush.msra.mxu0 %v4326
    %4447 = vmatpush.msra.mxu0 %v4322
    %4448 = vmatpush.msra.mxu0 %v4318
    %4449 = vmatpush.msra.mxu0 %v4314
    %4450 = vmatpush.msra.mxu0 %v4310
    %4451 = vmatpush.msra.mxu0 %v4306
    %4452 = vmatpush.msra.mxu0 %v4302
    %4453 = vmatpush.msra.mxu0 %v4298
    %4454 = vmatpush.msra.mxu0 %v4294
    %4455 = vmatpush.msra.mxu0 %v4290
    %4456 = vmatpush.msra.mxu0 %v4286
    %4457 = vmatpush.msra.mxu0 %v4282
    %4458 = vmatpush.msra.mxu0 %v4278
    %4459 = vmatpush.msra.mxu0 %v4274
    %4460 = vmatpush.msra.mxu0 %v4270
    %4461 = vmatmul.f32.gmra.mxu0 %v4202
    %v4462 = vpop.f32.mrf.mxu0
    %v4463 = vadd.f32 %v4443, %v4462
    %4464 = vdwg.mxu0
    %4465 = vmatpush.msra.mxu0 %v4267
    %4466 = vmatpush.msra.mxu0 %v4263
    %4467 = vmatpush.msra.mxu0 %v4259
    %4468 = vmatpush.msra.mxu0 %v4255
    %4469 = vmatpush.msra.mxu0 %v4251
    %4470 = vmatpush.msra.mxu0 %v4247
    %4471 = vmatpush.msra.mxu0 %v4243
    %4472 = vmatpush.msra.mxu0 %v4239
    %4473 = vmatpush.msra.mxu0 %v4235
    %4474 = vmatpush.msra.mxu0 %v4231
    %4475 = vmatpush.msra.mxu0 %v4227
    %4476 = vmatpush.msra.mxu0 %v4223
    %4477 = vmatpush.msra.mxu0 %v4219
    %4478 = vmatpush.msra.mxu0 %v4215
    %4479 = vmatpush.msra.mxu0 %v4211
    %4480 = vmatpush.msra.mxu0 %v4207
    %4481 = vmatmul.f32.gmra.mxu0 %v4042
    %v4482 = vpop.f32.mrf.mxu0
    %v4483 = vadd.f32 %v4344, %v4482
    %4484 = vdwg.mxu0
    %4485 = vmatpush.msra.mxu0 %v4331
    %4486 = vmatpush.msra.mxu0 %v4327
    %4487 = vmatpush.msra.mxu0 %v4323
    %4488 = vmatpush.msra.mxu0 %v4319
    %4489 = vmatpush.msra.mxu0 %v4315
    %4490 = vmatpush.msra.mxu0 %v4311
    %4491 = vmatpush.msra.mxu0 %v4307
    %4492 = vmatpush.msra.mxu0 %v4303
    %4493 = vmatpush.msra.mxu0 %v4299
    %4494 = vmatpush.msra.mxu0 %v4295
    %4495 = vmatpush.msra.mxu0 %v4291
    %4496 = vmatpush.msra.mxu0 %v4287
    %4497 = vmatpush.msra.mxu0 %v4283
    %4498 = vmatpush.msra.mxu0 %v4279
    %4499 = vmatpush.msra.mxu0 %v4275
    %4500 = vmatpush.msra.mxu0 %v4271
    %4501 = vmatmul.f32.gmra.mxu0 %v4202
    %v4502 = vpop.f32.mrf.mxu0
    %v4503 = vadd.f32 %v4483, %v4502
    %4504 = vdwg.mxu0
    %v4505 = vmul.f32 %v4383, %v3601
    %v4506 = vmul.f32 %v4423, %v3602
    %v4507 = vadd.f32 %v4505, %v4463
    %v4508 = vadd.f32 %v4506, %v4503
    %v4509 = vld [vmem:[#allocation13] sm:$0xff]
    %v4510 = vld [vmem:[#allocation13 + $0x8] sm:$0xff]
    %v4511 = vld [vmem:[#allocation13 + $0x10] sm:$0xff]
    %v4512 = vld [vmem:[#allocation13 + $0x18] sm:$0xff]
    %v4513 = vld [vmem:[#allocation13 + $0x20] sm:$0xff]
    %v4514 = vld [vmem:[#allocation13 + $0x28] sm:$0xff]
    %v4515 = vld [vmem:[#allocation13 + $0x30] sm:$0xff]
    %v4516 = vld [vmem:[#allocation13 + $0x38] sm:$0xff]
    %v4517 = vld [vmem:[#allocation13 + $0x40] sm:$0xff]
    %v4518 = vld [vmem:[#allocation13 + $0x48] sm:$0xff]
    %v4519 = vld [vmem:[#allocation13 + $0x50] sm:$0xff]
    %v4520 = vld [vmem:[#allocation13 + $0x58] sm:$0xff]
    %v4521 = vld [vmem:[#allocation13 + $0x60] sm:$0xff]
    %v4522 = vld [vmem:[#allocation13 + $0x68] sm:$0xff]
    %v4523 = vld [vmem:[#allocation13 + $0x70] sm:$0xff]
    %v4524 = vld [vmem:[#allocation13 + $0x78] sm:$0xff]
    %v4525 = vld [vmem:[#allocation13 + $0x80] sm:$0xff]
    %v4526 = vld [vmem:[#allocation13 + $0x88] sm:$0xff]
    %v4527 = vld [vmem:[#allocation13 + $0x90] sm:$0xff]
    %v4528 = vld [vmem:[#allocation13 + $0x98] sm:$0xff]
    %v4529 = vld [vmem:[#allocation13 + $0xa0] sm:$0xff]
    %v4530 = vld [vmem:[#allocation13 + $0xa8] sm:$0xff]
    %v4531 = vld [vmem:[#allocation13 + $0xb0] sm:$0xff]
    %v4532 = vld [vmem:[#allocation13 + $0xb8] sm:$0xff]
    %v4533 = vld [vmem:[#allocation13 + $0xc0] sm:$0xff]
    %v4534 = vld [vmem:[#allocation13 + $0xc8] sm:$0xff]
    %v4535 = vld [vmem:[#allocation13 + $0xd0] sm:$0xff]
    %v4536 = vld [vmem:[#allocation13 + $0xd8] sm:$0xff]
    %v4537 = vld [vmem:[#allocation13 + $0xe0] sm:$0xff]
    %v4538 = vld [vmem:[#allocation13 + $0xe8] sm:$0xff]
    %v4539 = vld [vmem:[#allocation13 + $0xf0] sm:$0xff]
    %v4540 = vld [vmem:[#allocation13 + $0xf8] sm:$0xff]
    %v4541 = vld [vmem:[#allocation13 + $0x100] sm:$0xff]
    %v4542 = vld [vmem:[#allocation13 + $0x108] sm:$0xff]
    %v4543 = vld [vmem:[#allocation13 + $0x110] sm:$0xff]
    %v4544 = vld [vmem:[#allocation13 + $0x118] sm:$0xff]
    %v4545 = vld [vmem:[#allocation13 + $0x120] sm:$0xff]
    %v4546 = vld [vmem:[#allocation13 + $0x128] sm:$0xff]
    %v4547 = vld [vmem:[#allocation13 + $0x130] sm:$0xff]
    %v4548 = vld [vmem:[#allocation13 + $0x138] sm:$0xff]
    %v4549 = vld [vmem:[#allocation13 + $0x140] sm:$0xff]
    %v4550 = vld [vmem:[#allocation13 + $0x148] sm:$0xff]
    %v4551 = vld [vmem:[#allocation13 + $0x150] sm:$0xff]
    %v4552 = vld [vmem:[#allocation13 + $0x158] sm:$0xff]
    %v4553 = vld [vmem:[#allocation13 + $0x160] sm:$0xff]
    %v4554 = vld [vmem:[#allocation13 + $0x168] sm:$0xff]
    %v4555 = vld [vmem:[#allocation13 + $0x170] sm:$0xff]
    %v4556 = vld [vmem:[#allocation13 + $0x178] sm:$0xff]
    %v4557 = vld [vmem:[#allocation13 + $0x180] sm:$0xff]
    %v4558 = vld [vmem:[#allocation13 + $0x188] sm:$0xff]
    %v4559 = vld [vmem:[#allocation13 + $0x190] sm:$0xff]
    %v4560 = vld [vmem:[#allocation13 + $0x198] sm:$0xff]
    %v4561 = vld [vmem:[#allocation13 + $0x1a0] sm:$0xff]
    %v4562 = vld [vmem:[#allocation13 + $0x1a8] sm:$0xff]
    %v4563 = vld [vmem:[#allocation13 + $0x1b0] sm:$0xff]
    %v4564 = vld [vmem:[#allocation13 + $0x1b8] sm:$0xff]
    %v4565 = vld [vmem:[#allocation13 + $0x1c0] sm:$0xff]
    %v4566 = vld [vmem:[#allocation13 + $0x1c8] sm:$0xff]
    %v4567 = vld [vmem:[#allocation13 + $0x1d0] sm:$0xff]
    %v4568 = vld [vmem:[#allocation13 + $0x1d8] sm:$0xff]
    %v4569 = vld [vmem:[#allocation13 + $0x1e0] sm:$0xff]
    %v4570 = vld [vmem:[#allocation13 + $0x1e8] sm:$0xff]
    %v4571 = vld [vmem:[#allocation13 + $0x1f0] sm:$0xff]
    %v4572 = vld [vmem:[#allocation13 + $0x1f8] sm:$0xff]
    %v4573 = vld [vmem:[#allocation13 + $0x200] sm:$0xff]
    %v4574 = vld [vmem:[#allocation13 + $0x208] sm:$0xff]
    %v4575 = vld [vmem:[#allocation13 + $0x210] sm:$0xff]
    %v4576 = vld [vmem:[#allocation13 + $0x218] sm:$0xff]
    %v4577 = vld [vmem:[#allocation13 + $0x220] sm:$0xff]
    %v4578 = vld [vmem:[#allocation13 + $0x228] sm:$0xff]
    %v4579 = vld [vmem:[#allocation13 + $0x230] sm:$0xff]
    %v4580 = vld [vmem:[#allocation13 + $0x238] sm:$0xff]
    %v4581 = vld [vmem:[#allocation13 + $0x240] sm:$0xff]
    %v4582 = vld [vmem:[#allocation13 + $0x248] sm:$0xff]
    %v4583 = vld [vmem:[#allocation13 + $0x250] sm:$0xff]
    %v4584 = vld [vmem:[#allocation13 + $0x258] sm:$0xff]
    %v4585 = vld [vmem:[#allocation13 + $0x260] sm:$0xff]
    %v4586 = vld [vmem:[#allocation13 + $0x268] sm:$0xff]
    %v4587 = vld [vmem:[#allocation13 + $0x270] sm:$0xff]
    %v4588 = vld [vmem:[#allocation13 + $0x278] sm:$0xff]
    %v4589 = vld [vmem:[#allocation13 + $0x280] sm:$0xff]
    %v4590 = vld [vmem:[#allocation13 + $0x288] sm:$0xff]
    %v4591 = vld [vmem:[#allocation13 + $0x290] sm:$0xff]
    %v4592 = vld [vmem:[#allocation13 + $0x298] sm:$0xff]
    %v4593 = vld [vmem:[#allocation13 + $0x2a0] sm:$0xff]
    %v4594 = vld [vmem:[#allocation13 + $0x2a8] sm:$0xff]
    %v4595 = vld [vmem:[#allocation13 + $0x2b0] sm:$0xff]
    %v4596 = vld [vmem:[#allocation13 + $0x2b8] sm:$0xff]
    %v4597 = vld [vmem:[#allocation13 + $0x2c0] sm:$0xff]
    %v4598 = vld [vmem:[#allocation13 + $0x2c8] sm:$0xff]
    %v4599 = vld [vmem:[#allocation13 + $0x2d0] sm:$0xff]
    %v4600 = vld [vmem:[#allocation13 + $0x2d8] sm:$0xff]
    %v4601 = vld [vmem:[#allocation13 + $0x2e0] sm:$0xff]
    %v4602 = vld [vmem:[#allocation13 + $0x2e8] sm:$0xff]
    %v4603 = vld [vmem:[#allocation13 + $0x2f0] sm:$0xff]
    %v4604 = vld [vmem:[#allocation13 + $0x2f8] sm:$0xff]
    %v4605 = vld [vmem:[#allocation13 + $0x300] sm:$0xff]
    %v4606 = vld [vmem:[#allocation13 + $0x308] sm:$0xff]
    %v4607 = vld [vmem:[#allocation13 + $0x310] sm:$0xff]
    %v4608 = vld [vmem:[#allocation13 + $0x318] sm:$0xff]
    %v4609 = vld [vmem:[#allocation13 + $0x320] sm:$0xff]
    %v4610 = vld [vmem:[#allocation13 + $0x328] sm:$0xff]
    %v4611 = vld [vmem:[#allocation13 + $0x330] sm:$0xff]
    %v4612 = vld [vmem:[#allocation13 + $0x338] sm:$0xff]
    %v4613 = vld [vmem:[#allocation13 + $0x340] sm:$0xff]
    %v4614 = vld [vmem:[#allocation13 + $0x348] sm:$0xff]
    %v4615 = vld [vmem:[#allocation13 + $0x350] sm:$0xff]
    %v4616 = vld [vmem:[#allocation13 + $0x358] sm:$0xff]
    %v4617 = vld [vmem:[#allocation13 + $0x360] sm:$0xff]
    %v4618 = vld [vmem:[#allocation13 + $0x368] sm:$0xff]
    %v4619 = vld [vmem:[#allocation13 + $0x370] sm:$0xff]
    %v4620 = vld [vmem:[#allocation13 + $0x378] sm:$0xff]
    %v4621 = vld [vmem:[#allocation13 + $0x380] sm:$0xff]
    %v4622 = vld [vmem:[#allocation13 + $0x388] sm:$0xff]
    %v4623 = vld [vmem:[#allocation13 + $0x390] sm:$0xff]
    %v4624 = vld [vmem:[#allocation13 + $0x398] sm:$0xff]
    %v4625 = vld [vmem:[#allocation13 + $0x3a0] sm:$0xff]
    %v4626 = vld [vmem:[#allocation13 + $0x3a8] sm:$0xff]
    %v4627 = vld [vmem:[#allocation13 + $0x3b0] sm:$0xff]
    %v4628 = vld [vmem:[#allocation13 + $0x3b8] sm:$0xff]
    %v4629 = vld [vmem:[#allocation13 + $0x3c0] sm:$0xff]
    %v4630 = vld [vmem:[#allocation13 + $0x3c8] sm:$0xff]
    %v4631 = vld [vmem:[#allocation13 + $0x3d0] sm:$0xff]
    %v4632 = vld [vmem:[#allocation13 + $0x3d8] sm:$0xff]
    %v4633 = vld [vmem:[#allocation13 + $0x3e0] sm:$0xff]
    %v4634 = vld [vmem:[#allocation13 + $0x3e8] sm:$0xff]
    %v4635 = vld [vmem:[#allocation13 + $0x3f0] sm:$0xff]
    %v4636 = vld [vmem:[#allocation13 + $0x3f8] sm:$0xff]
    %v4637 = vperm.slane %v189, 1
    %v4638 = vperm.slane %v189, 3
    %v4639 = vperm.slane %v189, 5
    %v4640 = vperm.slane %v189, 7
    %v4645 = vperm.slane %v4637, 1
    %v4646 = vperm.slane %v4638, 1
    %v4647 = vperm.slane %v4639, 1
    %v4648 = vperm.slane %v4640, 1
    %4649 = vmatpush.msra.mxu0 %v4569
    %4650 = vmatpush.msra.mxu0 %v4565
    %4651 = vmatpush.msra.mxu0 %v4561
    %4652 = vmatpush.msra.mxu0 %v4557
    %4653 = vmatpush.msra.mxu0 %v4553
    %4654 = vmatpush.msra.mxu0 %v4549
    %4655 = vmatpush.msra.mxu0 %v4545
    %4656 = vmatpush.msra.mxu0 %v4541
    %4657 = vmatpush.msra.mxu0 %v4537
    %4658 = vmatpush.msra.mxu0 %v4533
    %4659 = vmatpush.msra.mxu0 %v4529
    %4660 = vmatpush.msra.mxu0 %v4525
    %4661 = vmatpush.msra.mxu0 %v4521
    %4662 = vmatpush.msra.mxu0 %v4517
    %4663 = vmatpush.msra.mxu0 %v4513
    %4664 = vmatpush.msra.mxu0 %v4509
    %4665 = vmatmul.f32.gmra.mxu0 %v4507
    %v4666 = vpop.f32.mrf.mxu0
    %v4667 = vadd.f32 %v4645, %v4666
    %4668 = vdwg.mxu0
    %4669 = vmatpush.msra.mxu0 %v4633
    %4670 = vmatpush.msra.mxu0 %v4629
    %4671 = vmatpush.msra.mxu0 %v4625
    %4672 = vmatpush.msra.mxu0 %v4621
    %4673 = vmatpush.msra.mxu0 %v4617
    %4674 = vmatpush.msra.mxu0 %v4613
    %4675 = vmatpush.msra.mxu0 %v4609
    %4676 = vmatpush.msra.mxu0 %v4605
    %4677 = vmatpush.msra.mxu0 %v4601
    %4678 = vmatpush.msra.mxu0 %v4597
    %4679 = vmatpush.msra.mxu0 %v4593
    %4680 = vmatpush.msra.mxu0 %v4589
    %4681 = vmatpush.msra.mxu0 %v4585
    %4682 = vmatpush.msra.mxu0 %v4581
    %4683 = vmatpush.msra.mxu0 %v4577
    %4684 = vmatpush.msra.mxu0 %v4573
    %4685 = vmatmul.f32.gmra.mxu0 %v4508
    %v4686 = vpop.f32.mrf.mxu0
    %v4687 = vadd.f32 %v4667, %v4686
    %4688 = vdwg.mxu0
    %4689 = vmatpush.msra.mxu0 %v4570
    %4690 = vmatpush.msra.mxu0 %v4566
    %4691 = vmatpush.msra.mxu0 %v4562
    %4692 = vmatpush.msra.mxu0 %v4558
    %4693 = vmatpush.msra.mxu0 %v4554
    %4694 = vmatpush.msra.mxu0 %v4550
    %4695 = vmatpush.msra.mxu0 %v4546
    %4696 = vmatpush.msra.mxu0 %v4542
    %4697 = vmatpush.msra.mxu0 %v4538
    %4698 = vmatpush.msra.mxu0 %v4534
    %4699 = vmatpush.msra.mxu0 %v4530
    %4700 = vmatpush.msra.mxu0 %v4526
    %4701 = vmatpush.msra.mxu0 %v4522
    %4702 = vmatpush.msra.mxu0 %v4518
    %4703 = vmatpush.msra.mxu0 %v4514
    %4704 = vmatpush.msra.mxu0 %v4510
    %4705 = vmatmul.f32.gmra.mxu0 %v4507
    %v4706 = vpop.f32.mrf.mxu0
    %v4707 = vadd.f32 %v4646, %v4706
    %4708 = vdwg.mxu0
    %4709 = vmatpush.msra.mxu0 %v4634
    %4710 = vmatpush.msra.mxu0 %v4630
    %4711 = vmatpush.msra.mxu0 %v4626
    %4712 = vmatpush.msra.mxu0 %v4622
    %4713 = vmatpush.msra.mxu0 %v4618
    %4714 = vmatpush.msra.mxu0 %v4614
    %4715 = vmatpush.msra.mxu0 %v4610
    %4716 = vmatpush.msra.mxu0 %v4606
    %4717 = vmatpush.msra.mxu0 %v4602
    %4718 = vmatpush.msra.mxu0 %v4598
    %4719 = vmatpush.msra.mxu0 %v4594
    %4720 = vmatpush.msra.mxu0 %v4590
    %4721 = vmatpush.msra.mxu0 %v4586
    %4722 = vmatpush.msra.mxu0 %v4582
    %4723 = vmatpush.msra.mxu0 %v4578
    %4724 = vmatpush.msra.mxu0 %v4574
    %4725 = vmatmul.f32.gmra.mxu0 %v4508
    %v4726 = vpop.f32.mrf.mxu0
    %v4727 = vadd.f32 %v4707, %v4726
    %4728 = vdwg.mxu0
    %4729 = vmatpush.msra.mxu0 %v4571
    %4730 = vmatpush.msra.mxu0 %v4567
    %4731 = vmatpush.msra.mxu0 %v4563
    %4732 = vmatpush.msra.mxu0 %v4559
    %4733 = vmatpush.msra.mxu0 %v4555
    %4734 = vmatpush.msra.mxu0 %v4551
    %4735 = vmatpush.msra.mxu0 %v4547
    %4736 = vmatpush.msra.mxu0 %v4543
    %4737 = vmatpush.msra.mxu0 %v4539
    %4738 = vmatpush.msra.mxu0 %v4535
    %4739 = vmatpush.msra.mxu0 %v4531
    %4740 = vmatpush.msra.mxu0 %v4527
    %4741 = vmatpush.msra.mxu0 %v4523
    %4742 = vmatpush.msra.mxu0 %v4519
    %4743 = vmatpush.msra.mxu0 %v4515
    %4744 = vmatpush.msra.mxu0 %v4511
    %4745 = vmatmul.f32.gmra.mxu0 %v4507
    %v4746 = vpop.f32.mrf.mxu0
    %v4747 = vadd.f32 %v4647, %v4746
    %4748 = vdwg.mxu0
    %4749 = vmatpush.msra.mxu0 %v4635
    %4750 = vmatpush.msra.mxu0 %v4631
    %4751 = vmatpush.msra.mxu0 %v4627
    %4752 = vmatpush.msra.mxu0 %v4623
    %4753 = vmatpush.msra.mxu0 %v4619
    %4754 = vmatpush.msra.mxu0 %v4615
    %4755 = vmatpush.msra.mxu0 %v4611
    %4756 = vmatpush.msra.mxu0 %v4607
    %4757 = vmatpush.msra.mxu0 %v4603
    %4758 = vmatpush.msra.mxu0 %v4599
    %4759 = vmatpush.msra.mxu0 %v4595
    %4760 = vmatpush.msra.mxu0 %v4591
    %4761 = vmatpush.msra.mxu0 %v4587
    %4762 = vmatpush.msra.mxu0 %v4583
    %4763 = vmatpush.msra.mxu0 %v4579
    %4764 = vmatpush.msra.mxu0 %v4575
    %4765 = vmatmul.f32.gmra.mxu0 %v4508
    %v4766 = vpop.f32.mrf.mxu0
    %v4767 = vadd.f32 %v4747, %v4766
    %4768 = vdwg.mxu0
    %4769 = vmatpush.msra.mxu0 %v4572
    %4770 = vmatpush.msra.mxu0 %v4568
    %4771 = vmatpush.msra.mxu0 %v4564
    %4772 = vmatpush.msra.mxu0 %v4560
    %4773 = vmatpush.msra.mxu0 %v4556
    %4774 = vmatpush.msra.mxu0 %v4552
    %4775 = vmatpush.msra.mxu0 %v4548
    %4776 = vmatpush.msra.mxu0 %v4544
    %4777 = vmatpush.msra.mxu0 %v4540
    %4778 = vmatpush.msra.mxu0 %v4536
    %4779 = vmatpush.msra.mxu0 %v4532
    %4780 = vmatpush.msra.mxu0 %v4528
    %4781 = vmatpush.msra.mxu0 %v4524
    %4782 = vmatpush.msra.mxu0 %v4520
    %4783 = vmatpush.msra.mxu0 %v4516
    %4784 = vmatpush.msra.mxu0 %v4512
    %4785 = vmatmul.f32.gmra.mxu0 %v4507
    %v4786 = vpop.f32.mrf.mxu0
    %v4787 = vadd.f32 %v4648, %v4786
    %4788 = vdwg.mxu0
    %4789 = vmatpush.msra.mxu0 %v4636
    %4790 = vmatpush.msra.mxu0 %v4632
    %4791 = vmatpush.msra.mxu0 %v4628
    %4792 = vmatpush.msra.mxu0 %v4624
    %4793 = vmatpush.msra.mxu0 %v4620
    %4794 = vmatpush.msra.mxu0 %v4616
    %4795 = vmatpush.msra.mxu0 %v4612
    %4796 = vmatpush.msra.mxu0 %v4608
    %4797 = vmatpush.msra.mxu0 %v4604
    %4798 = vmatpush.msra.mxu0 %v4600
    %4799 = vmatpush.msra.mxu0 %v4596
    %4800 = vmatpush.msra.mxu0 %v4592
    %4801 = vmatpush.msra.mxu0 %v4588
    %4802 = vmatpush.msra.mxu0 %v4584
    %4803 = vmatpush.msra.mxu0 %v4580
    %4804 = vmatpush.msra.mxu0 %v4576
    %4805 = vmatmul.f32.gmra.mxu0 %v4508
    %v4806 = vpop.f32.mrf.mxu0
    %v4807 = vadd.f32 %v4787, %v4806
    %4808 = vdwg.mxu0
    %v4809 = vmax.f32 %v4687, 0.0
    %v4810 = vmax.f32 %v4727, 0.0
    %v4811 = vmax.f32 %v4767, 0.0
    %v4812 = vmax.f32 %v4807, 0.0
    %vm4813 = vcmp.ne.f32.partialorder %v4687, %v4687
    %vm4814 = vcmp.ne.f32.partialorder %v4727, %v4727
    %vm4815 = vcmp.ne.f32.partialorder %v4767, %v4767
    %vm4816 = vcmp.ne.f32.partialorder %v4807, %v4807
    %v4817 = vadd.f32 %v4687, 0.0
    %v4818 = vadd.f32 %v4727, 0.0
    %v4819 = vadd.f32 %v4767, 0.0
    %v4820 = vadd.f32 %v4807, 0.0
    %v4821 = vand.u32 2147483647, %v4687
    %v4822 = vand.u32 2147483647, %v4727
    %v4823 = vand.u32 2147483647, %v4767
    %v4824 = vand.u32 2147483647, %v4807
    %v4825 = vsub.f32 0.0, %v4821
    %v4826 = vsub.f32 0.0, %v4822
    %v4827 = vsub.f32 0.0, %v4823
    %v4828 = vsub.f32 0.0, %v4824
    %v4829 = vmul.f32 %v4825, 1.442695
    %v4830 = vpow.pop %v4829
    %v4831 = vmul.f32 %v4826, 1.442695
    %v4832 = vpow.pop %v4831
    %v4833 = vmul.f32 %v4827, 1.442695
    %v4834 = vpow.pop %v4833
    %v4835 = vmul.f32 %v4828, 1.442695
    %v4836 = vpow.pop %v4835
    %v4837 = vadd.f32 %v4830, 1.0
    %v4838 = vlog2.pop %v4837
    %v4839 = vmul.f32 %v4838, 0.6931472
    %v4840 = vmul.f32 -0.5, %v4830
    %v4841 = vadd.f32 %v4840, 1.0
    %v4842 = vmul.f32 %v4841, %v4830
    %v4843 = vand.u32 2147483647, %v4830
    %vm4844 = vcmp.lt.f32.partialorder %v4843, 0.0004427343
    %v4845 = vsel %vm4844, %v4842, %v4839
    %v4846 = vadd.f32 %v4832, 1.0
    %v4847 = vlog2.pop %v4846
    %v4848 = vmul.f32 %v4847, 0.6931472
    %v4849 = vmul.f32 -0.5, %v4832
    %v4850 = vadd.f32 %v4849, 1.0
    %v4851 = vmul.f32 %v4850, %v4832
    %v4852 = vand.u32 2147483647, %v4832
    %vm4853 = vcmp.lt.f32.partialorder %v4852, 0.0004427343
    %v4854 = vsel %vm4853, %v4851, %v4848
    %v4855 = vadd.f32 %v4834, 1.0
    %v4856 = vlog2.pop %v4855
    %v4857 = vmul.f32 %v4856, 0.6931472
    %v4858 = vmul.f32 -0.5, %v4834
    %v4859 = vadd.f32 %v4858, 1.0
    %v4860 = vmul.f32 %v4859, %v4834
    %v4861 = vand.u32 2147483647, %v4834
    %vm4862 = vcmp.lt.f32.partialorder %v4861, 0.0004427343
    %v4863 = vsel %vm4862, %v4860, %v4857
    %v4864 = vadd.f32 %v4836, 1.0
    %v4865 = vlog2.pop %v4864
    %v4866 = vmul.f32 %v4865, 0.6931472
    %v4867 = vmul.f32 -0.5, %v4836
    %v4868 = vadd.f32 %v4867, 1.0
    %v4869 = vmul.f32 %v4868, %v4836
    %v4870 = vand.u32 2147483647, %v4836
    %vm4871 = vcmp.lt.f32.partialorder %v4870, 0.0004427343
    %v4872 = vsel %vm4871, %v4869, %v4866
    %v4873 = vadd.f32 %v4809, %v4845
    %v4874 = vadd.f32 %v4810, %v4854
    %v4875 = vadd.f32 %v4811, %v4863
    %v4876 = vadd.f32 %v4812, %v4872
    %v4877 = vsel %vm4813, %v4817, %v4873
    %v4878 = vsel %vm4814, %v4818, %v4874
    %v4879 = vsel %vm4815, %v4819, %v4875
    %v4880 = vsel %vm4816, %v4820, %v4876
    %v4881 = vld [vmem:[#allocation14] sm:$0xff]
    %v4882 = vld [vmem:[#allocation14 + $0x8] sm:$0xff]
    %v4883 = vld [vmem:[#allocation14 + $0x10] sm:$0xff]
    %v4884 = vld [vmem:[#allocation14 + $0x18] sm:$0xff]
    %v4885 = vld [vmem:[#allocation14 + $0x20] sm:$0xff]
    %v4886 = vld [vmem:[#allocation14 + $0x28] sm:$0xff]
    %v4887 = vld [vmem:[#allocation14 + $0x30] sm:$0xff]
    %v4888 = vld [vmem:[#allocation14 + $0x38] sm:$0xff]
    %v4889 = vld [vmem:[#allocation14 + $0x40] sm:$0xff]
    %v4890 = vld [vmem:[#allocation14 + $0x48] sm:$0xff]
    %v4891 = vld [vmem:[#allocation14 + $0x50] sm:$0xff]
    %v4892 = vld [vmem:[#allocation14 + $0x58] sm:$0xff]
    %v4893 = vld [vmem:[#allocation14 + $0x60] sm:$0xff]
    %v4894 = vld [vmem:[#allocation14 + $0x68] sm:$0xff]
    %v4895 = vld [vmem:[#allocation14 + $0x70] sm:$0xff]
    %v4896 = vld [vmem:[#allocation14 + $0x78] sm:$0xff]
    %v4897 = vld [vmem:[#allocation14 + $0x80] sm:$0xff]
    %v4898 = vld [vmem:[#allocation14 + $0x88] sm:$0xff]
    %v4899 = vld [vmem:[#allocation14 + $0x90] sm:$0xff]
    %v4900 = vld [vmem:[#allocation14 + $0x98] sm:$0xff]
    %v4901 = vld [vmem:[#allocation14 + $0xa0] sm:$0xff]
    %v4902 = vld [vmem:[#allocation14 + $0xa8] sm:$0xff]
    %v4903 = vld [vmem:[#allocation14 + $0xb0] sm:$0xff]
    %v4904 = vld [vmem:[#allocation14 + $0xb8] sm:$0xff]
    %v4905 = vld [vmem:[#allocation14 + $0xc0] sm:$0xff]
    %v4906 = vld [vmem:[#allocation14 + $0xc8] sm:$0xff]
    %v4907 = vld [vmem:[#allocation14 + $0xd0] sm:$0xff]
    %v4908 = vld [vmem:[#allocation14 + $0xd8] sm:$0xff]
    %v4909 = vld [vmem:[#allocation14 + $0xe0] sm:$0xff]
    %v4910 = vld [vmem:[#allocation14 + $0xe8] sm:$0xff]
    %v4911 = vld [vmem:[#allocation14 + $0xf0] sm:$0xff]
    %v4912 = vld [vmem:[#allocation14 + $0xf8] sm:$0xff]
    %v4913 = vld [vmem:[#allocation14 + $0x100] sm:$0xff]
    %v4914 = vld [vmem:[#allocation14 + $0x108] sm:$0xff]
    %v4915 = vld [vmem:[#allocation14 + $0x110] sm:$0xff]
    %v4916 = vld [vmem:[#allocation14 + $0x118] sm:$0xff]
    %v4917 = vld [vmem:[#allocation14 + $0x120] sm:$0xff]
    %v4918 = vld [vmem:[#allocation14 + $0x128] sm:$0xff]
    %v4919 = vld [vmem:[#allocation14 + $0x130] sm:$0xff]
    %v4920 = vld [vmem:[#allocation14 + $0x138] sm:$0xff]
    %v4921 = vld [vmem:[#allocation14 + $0x140] sm:$0xff]
    %v4922 = vld [vmem:[#allocation14 + $0x148] sm:$0xff]
    %v4923 = vld [vmem:[#allocation14 + $0x150] sm:$0xff]
    %v4924 = vld [vmem:[#allocation14 + $0x158] sm:$0xff]
    %v4925 = vld [vmem:[#allocation14 + $0x160] sm:$0xff]
    %v4926 = vld [vmem:[#allocation14 + $0x168] sm:$0xff]
    %v4927 = vld [vmem:[#allocation14 + $0x170] sm:$0xff]
    %v4928 = vld [vmem:[#allocation14 + $0x178] sm:$0xff]
    %v4929 = vld [vmem:[#allocation14 + $0x180] sm:$0xff]
    %v4930 = vld [vmem:[#allocation14 + $0x188] sm:$0xff]
    %v4931 = vld [vmem:[#allocation14 + $0x190] sm:$0xff]
    %v4932 = vld [vmem:[#allocation14 + $0x198] sm:$0xff]
    %v4933 = vld [vmem:[#allocation14 + $0x1a0] sm:$0xff]
    %v4934 = vld [vmem:[#allocation14 + $0x1a8] sm:$0xff]
    %v4935 = vld [vmem:[#allocation14 + $0x1b0] sm:$0xff]
    %v4936 = vld [vmem:[#allocation14 + $0x1b8] sm:$0xff]
    %v4937 = vld [vmem:[#allocation14 + $0x1c0] sm:$0xff]
    %v4938 = vld [vmem:[#allocation14 + $0x1c8] sm:$0xff]
    %v4939 = vld [vmem:[#allocation14 + $0x1d0] sm:$0xff]
    %v4940 = vld [vmem:[#allocation14 + $0x1d8] sm:$0xff]
    %v4941 = vld [vmem:[#allocation14 + $0x1e0] sm:$0xff]
    %v4942 = vld [vmem:[#allocation14 + $0x1e8] sm:$0xff]
    %v4943 = vld [vmem:[#allocation14 + $0x1f0] sm:$0xff]
    %v4944 = vld [vmem:[#allocation14 + $0x1f8] sm:$0xff]
    %v4945 = vld [vmem:[#allocation14 + $0x200] sm:$0xff]
    %v4946 = vld [vmem:[#allocation14 + $0x208] sm:$0xff]
    %v4947 = vld [vmem:[#allocation14 + $0x210] sm:$0xff]
    %v4948 = vld [vmem:[#allocation14 + $0x218] sm:$0xff]
    %v4949 = vld [vmem:[#allocation14 + $0x220] sm:$0xff]
    %v4950 = vld [vmem:[#allocation14 + $0x228] sm:$0xff]
    %v4951 = vld [vmem:[#allocation14 + $0x230] sm:$0xff]
    %v4952 = vld [vmem:[#allocation14 + $0x238] sm:$0xff]
    %v4953 = vld [vmem:[#allocation14 + $0x240] sm:$0xff]
    %v4954 = vld [vmem:[#allocation14 + $0x248] sm:$0xff]
    %v4955 = vld [vmem:[#allocation14 + $0x250] sm:$0xff]
    %v4956 = vld [vmem:[#allocation14 + $0x258] sm:$0xff]
    %v4957 = vld [vmem:[#allocation14 + $0x260] sm:$0xff]
    %v4958 = vld [vmem:[#allocation14 + $0x268] sm:$0xff]
    %v4959 = vld [vmem:[#allocation14 + $0x270] sm:$0xff]
    %v4960 = vld [vmem:[#allocation14 + $0x278] sm:$0xff]
    %v4961 = vld [vmem:[#allocation14 + $0x280] sm:$0xff]
    %v4962 = vld [vmem:[#allocation14 + $0x288] sm:$0xff]
    %v4963 = vld [vmem:[#allocation14 + $0x290] sm:$0xff]
    %v4964 = vld [vmem:[#allocation14 + $0x298] sm:$0xff]
    %v4965 = vld [vmem:[#allocation14 + $0x2a0] sm:$0xff]
    %v4966 = vld [vmem:[#allocation14 + $0x2a8] sm:$0xff]
    %v4967 = vld [vmem:[#allocation14 + $0x2b0] sm:$0xff]
    %v4968 = vld [vmem:[#allocation14 + $0x2b8] sm:$0xff]
    %v4969 = vld [vmem:[#allocation14 + $0x2c0] sm:$0xff]
    %v4970 = vld [vmem:[#allocation14 + $0x2c8] sm:$0xff]
    %v4971 = vld [vmem:[#allocation14 + $0x2d0] sm:$0xff]
    %v4972 = vld [vmem:[#allocation14 + $0x2d8] sm:$0xff]
    %v4973 = vld [vmem:[#allocation14 + $0x2e0] sm:$0xff]
    %v4974 = vld [vmem:[#allocation14 + $0x2e8] sm:$0xff]
    %v4975 = vld [vmem:[#allocation14 + $0x2f0] sm:$0xff]
    %v4976 = vld [vmem:[#allocation14 + $0x2f8] sm:$0xff]
    %v4977 = vld [vmem:[#allocation14 + $0x300] sm:$0xff]
    %v4978 = vld [vmem:[#allocation14 + $0x308] sm:$0xff]
    %v4979 = vld [vmem:[#allocation14 + $0x310] sm:$0xff]
    %v4980 = vld [vmem:[#allocation14 + $0x318] sm:$0xff]
    %v4981 = vld [vmem:[#allocation14 + $0x320] sm:$0xff]
    %v4982 = vld [vmem:[#allocation14 + $0x328] sm:$0xff]
    %v4983 = vld [vmem:[#allocation14 + $0x330] sm:$0xff]
    %v4984 = vld [vmem:[#allocation14 + $0x338] sm:$0xff]
    %v4985 = vld [vmem:[#allocation14 + $0x340] sm:$0xff]
    %v4986 = vld [vmem:[#allocation14 + $0x348] sm:$0xff]
    %v4987 = vld [vmem:[#allocation14 + $0x350] sm:$0xff]
    %v4988 = vld [vmem:[#allocation14 + $0x358] sm:$0xff]
    %v4989 = vld [vmem:[#allocation14 + $0x360] sm:$0xff]
    %v4990 = vld [vmem:[#allocation14 + $0x368] sm:$0xff]
    %v4991 = vld [vmem:[#allocation14 + $0x370] sm:$0xff]
    %v4992 = vld [vmem:[#allocation14 + $0x378] sm:$0xff]
    %v4993 = vld [vmem:[#allocation14 + $0x380] sm:$0xff]
    %v4994 = vld [vmem:[#allocation14 + $0x388] sm:$0xff]
    %v4995 = vld [vmem:[#allocation14 + $0x390] sm:$0xff]
    %v4996 = vld [vmem:[#allocation14 + $0x398] sm:$0xff]
    %v4997 = vld [vmem:[#allocation14 + $0x3a0] sm:$0xff]
    %v4998 = vld [vmem:[#allocation14 + $0x3a8] sm:$0xff]
    %v4999 = vld [vmem:[#allocation14 + $0x3b0] sm:$0xff]
    %v5000 = vld [vmem:[#allocation14 + $0x3b8] sm:$0xff]
    %v5001 = vld [vmem:[#allocation14 + $0x3c0] sm:$0xff]
    %v5002 = vld [vmem:[#allocation14 + $0x3c8] sm:$0xff]
    %v5003 = vld [vmem:[#allocation14 + $0x3d0] sm:$0xff]
    %v5004 = vld [vmem:[#allocation14 + $0x3d8] sm:$0xff]
    %v5005 = vld [vmem:[#allocation14 + $0x3e0] sm:$0xff]
    %v5006 = vld [vmem:[#allocation14 + $0x3e8] sm:$0xff]
    %v5007 = vld [vmem:[#allocation14 + $0x3f0] sm:$0xff]
    %v5008 = vld [vmem:[#allocation14 + $0x3f8] sm:$0xff]
    %v5009 = vperm.slane %v187, 7
    %v5010 = vperm.slane %v188, 7
    %5011 = vmatpush.msra.mxu0 %v4911
    %5012 = vmatpush.msra.mxu0 %v4909
    %5013 = vmatpush.msra.mxu0 %v4907
    %5014 = vmatpush.msra.mxu0 %v4905
    %5015 = vmatpush.msra.mxu0 %v4903
    %5016 = vmatpush.msra.mxu0 %v4901
    %5017 = vmatpush.msra.mxu0 %v4899
    %5018 = vmatpush.msra.mxu0 %v4897
    %5019 = vmatpush.msra.mxu0 %v4895
    %5020 = vmatpush.msra.mxu0 %v4893
    %5021 = vmatpush.msra.mxu0 %v4891
    %5022 = vmatpush.msra.mxu0 %v4889
    %5023 = vmatpush.msra.mxu0 %v4887
    %5024 = vmatpush.msra.mxu0 %v4885
    %5025 = vmatpush.msra.mxu0 %v4883
    %5026 = vmatpush.msra.mxu0 %v4881
    %5027 = vmatmul.f32.gmra.mxu0 %v4877
    %v5028 = vpop.f32.mrf.mxu0
    %v5029 = vadd.f32 %v5009, %v5028
    %5030 = vdwg.mxu0
    %5031 = vmatpush.msra.mxu0 %v4943
    %5032 = vmatpush.msra.mxu0 %v4941
    %5033 = vmatpush.msra.mxu0 %v4939
    %5034 = vmatpush.msra.mxu0 %v4937
    %5035 = vmatpush.msra.mxu0 %v4935
    %5036 = vmatpush.msra.mxu0 %v4933
    %5037 = vmatpush.msra.mxu0 %v4931
    %5038 = vmatpush.msra.mxu0 %v4929
    %5039 = vmatpush.msra.mxu0 %v4927
    %5040 = vmatpush.msra.mxu0 %v4925
    %5041 = vmatpush.msra.mxu0 %v4923
    %5042 = vmatpush.msra.mxu0 %v4921
    %5043 = vmatpush.msra.mxu0 %v4919
    %5044 = vmatpush.msra.mxu0 %v4917
    %5045 = vmatpush.msra.mxu0 %v4915
    %5046 = vmatpush.msra.mxu0 %v4913
    %5047 = vmatmul.f32.gmra.mxu0 %v4878
    %v5048 = vpop.f32.mrf.mxu0
    %v5049 = vadd.f32 %v5029, %v5048
    %5050 = vdwg.mxu0
    %5051 = vmatpush.msra.mxu0 %v4975
    %5052 = vmatpush.msra.mxu0 %v4973
    %5053 = vmatpush.msra.mxu0 %v4971
    %5054 = vmatpush.msra.mxu0 %v4969
    %5055 = vmatpush.msra.mxu0 %v4967
    %5056 = vmatpush.msra.mxu0 %v4965
    %5057 = vmatpush.msra.mxu0 %v4963
    %5058 = vmatpush.msra.mxu0 %v4961
    %5059 = vmatpush.msra.mxu0 %v4959
    %5060 = vmatpush.msra.mxu0 %v4957
    %5061 = vmatpush.msra.mxu0 %v4955
    %5062 = vmatpush.msra.mxu0 %v4953
    %5063 = vmatpush.msra.mxu0 %v4951
    %5064 = vmatpush.msra.mxu0 %v4949
    %5065 = vmatpush.msra.mxu0 %v4947
    %5066 = vmatpush.msra.mxu0 %v4945
    %5067 = vmatmul.f32.gmra.mxu0 %v4879
    %v5068 = vpop.f32.mrf.mxu0
    %v5069 = vadd.f32 %v5049, %v5068
    %5070 = vdwg.mxu0
    %5071 = vmatpush.msra.mxu0 %v5007
    %5072 = vmatpush.msra.mxu0 %v5005
    %5073 = vmatpush.msra.mxu0 %v5003
    %5074 = vmatpush.msra.mxu0 %v5001
    %5075 = vmatpush.msra.mxu0 %v4999
    %5076 = vmatpush.msra.mxu0 %v4997
    %5077 = vmatpush.msra.mxu0 %v4995
    %5078 = vmatpush.msra.mxu0 %v4993
    %5079 = vmatpush.msra.mxu0 %v4991
    %5080 = vmatpush.msra.mxu0 %v4989
    %5081 = vmatpush.msra.mxu0 %v4987
    %5082 = vmatpush.msra.mxu0 %v4985
    %5083 = vmatpush.msra.mxu0 %v4983
    %5084 = vmatpush.msra.mxu0 %v4981
    %5085 = vmatpush.msra.mxu0 %v4979
    %5086 = vmatpush.msra.mxu0 %v4977
    %5087 = vmatmul.f32.gmra.mxu0 %v4880
    %v5088 = vpop.f32.mrf.mxu0
    %v5089 = vadd.f32 %v5069, %v5088
    %5090 = vdwg.mxu0
    %5091 = vmatpush.msra.mxu0 %v4912
    %5092 = vmatpush.msra.mxu0 %v4910
    %5093 = vmatpush.msra.mxu0 %v4908
    %5094 = vmatpush.msra.mxu0 %v4906
    %5095 = vmatpush.msra.mxu0 %v4904
    %5096 = vmatpush.msra.mxu0 %v4902
    %5097 = vmatpush.msra.mxu0 %v4900
    %5098 = vmatpush.msra.mxu0 %v4898
    %5099 = vmatpush.msra.mxu0 %v4896
    %5100 = vmatpush.msra.mxu0 %v4894
    %5101 = vmatpush.msra.mxu0 %v4892
    %5102 = vmatpush.msra.mxu0 %v4890
    %5103 = vmatpush.msra.mxu0 %v4888
    %5104 = vmatpush.msra.mxu0 %v4886
    %5105 = vmatpush.msra.mxu0 %v4884
    %5106 = vmatpush.msra.mxu0 %v4882
    %5107 = vmatmul.f32.gmra.mxu0 %v4877
    %v5108 = vpop.f32.mrf.mxu0
    %v5109 = vadd.f32 %v5010, %v5108
    %5110 = vdwg.mxu0
    %5111 = vmatpush.msra.mxu0 %v4944
    %5112 = vmatpush.msra.mxu0 %v4942
    %5113 = vmatpush.msra.mxu0 %v4940
    %5114 = vmatpush.msra.mxu0 %v4938
    %5115 = vmatpush.msra.mxu0 %v4936
    %5116 = vmatpush.msra.mxu0 %v4934
    %5117 = vmatpush.msra.mxu0 %v4932
    %5118 = vmatpush.msra.mxu0 %v4930
    %5119 = vmatpush.msra.mxu0 %v4928
    %5120 = vmatpush.msra.mxu0 %v4926
    %5121 = vmatpush.msra.mxu0 %v4924
    %5122 = vmatpush.msra.mxu0 %v4922
    %5123 = vmatpush.msra.mxu0 %v4920
    %5124 = vmatpush.msra.mxu0 %v4918
    %5125 = vmatpush.msra.mxu0 %v4916
    %5126 = vmatpush.msra.mxu0 %v4914
    %5127 = vmatmul.f32.gmra.mxu0 %v4878
    %v5128 = vpop.f32.mrf.mxu0
    %v5129 = vadd.f32 %v5109, %v5128
    %5130 = vdwg.mxu0
    %5131 = vmatpush.msra.mxu0 %v4976
    %5132 = vmatpush.msra.mxu0 %v4974
    %5133 = vmatpush.msra.mxu0 %v4972
    %5134 = vmatpush.msra.mxu0 %v4970
    %5135 = vmatpush.msra.mxu0 %v4968
    %5136 = vmatpush.msra.mxu0 %v4966
    %5137 = vmatpush.msra.mxu0 %v4964
    %5138 = vmatpush.msra.mxu0 %v4962
    %5139 = vmatpush.msra.mxu0 %v4960
    %5140 = vmatpush.msra.mxu0 %v4958
    %5141 = vmatpush.msra.mxu0 %v4956
    %5142 = vmatpush.msra.mxu0 %v4954
    %5143 = vmatpush.msra.mxu0 %v4952
    %5144 = vmatpush.msra.mxu0 %v4950
    %5145 = vmatpush.msra.mxu0 %v4948
    %5146 = vmatpush.msra.mxu0 %v4946
    %5147 = vmatmul.f32.gmra.mxu0 %v4879
    %v5148 = vpop.f32.mrf.mxu0
    %v5149 = vadd.f32 %v5129, %v5148
    %5150 = vdwg.mxu0
    %5151 = vmatpush.msra.mxu0 %v5008
    %5152 = vmatpush.msra.mxu0 %v5006
    %5153 = vmatpush.msra.mxu0 %v5004
    %5154 = vmatpush.msra.mxu0 %v5002
    %5155 = vmatpush.msra.mxu0 %v5000
    %5156 = vmatpush.msra.mxu0 %v4998
    %5157 = vmatpush.msra.mxu0 %v4996
    %5158 = vmatpush.msra.mxu0 %v4994
    %5159 = vmatpush.msra.mxu0 %v4992
    %5160 = vmatpush.msra.mxu0 %v4990
    %5161 = vmatpush.msra.mxu0 %v4988
    %5162 = vmatpush.msra.mxu0 %v4986
    %5163 = vmatpush.msra.mxu0 %v4984
    %5164 = vmatpush.msra.mxu0 %v4982
    %5165 = vmatpush.msra.mxu0 %v4980
    %5166 = vmatpush.msra.mxu0 %v4978
    %5167 = vmatmul.f32.gmra.mxu0 %v4880
    %v5168 = vpop.f32.mrf.mxu0
    %v5169 = vadd.f32 %v5149, %v5168
    %5170 = vdwg.mxu0
    %v5171 = vmax.f32 %v5089, 0.0
    %v5172 = vmax.f32 %v5169, 0.0
    %vm5173 = vcmp.ne.f32.partialorder %v5089, %v5089
    %vm5174 = vcmp.ne.f32.partialorder %v5169, %v5169
    %v5175 = vadd.f32 %v5089, 0.0
    %v5176 = vadd.f32 %v5169, 0.0
    %v5177 = vand.u32 2147483647, %v5089
    %v5178 = vand.u32 2147483647, %v5169
    %v5179 = vsub.f32 0.0, %v5177
    %v5180 = vsub.f32 0.0, %v5178
    %v5181 = vmul.f32 %v5179, 1.442695
    %v5182 = vpow.pop %v5181
    %v5183 = vmul.f32 %v5180, 1.442695
    %v5184 = vpow.pop %v5183
    %v5185 = vadd.f32 %v5182, 1.0
    %v5186 = vlog2.pop %v5185
    %v5187 = vmul.f32 %v5186, 0.6931472
    %v5188 = vmul.f32 -0.5, %v5182
    %v5189 = vadd.f32 %v5188, 1.0
    %v5190 = vmul.f32 %v5189, %v5182
    %v5191 = vand.u32 2147483647, %v5182
    %vm5192 = vcmp.lt.f32.partialorder %v5191, 0.0004427343
    %v5193 = vsel %vm5192, %v5190, %v5187
    %v5194 = vadd.f32 %v5184, 1.0
    %v5195 = vlog2.pop %v5194
    %v5196 = vmul.f32 %v5195, 0.6931472
    %v5197 = vmul.f32 -0.5, %v5184
    %v5198 = vadd.f32 %v5197, 1.0
    %v5199 = vmul.f32 %v5198, %v5184
    %v5200 = vand.u32 2147483647, %v5184
    %vm5201 = vcmp.lt.f32.partialorder %v5200, 0.0004427343
    %v5202 = vsel %vm5201, %v5199, %v5196
    %v5203 = vadd.f32 %v5171, %v5193
    %v5204 = vadd.f32 %v5172, %v5202
    %v5205 = vsel %vm5173, %v5175, %v5203
    %v5206 = vsel %vm5174, %v5176, %v5204
    %v5207 = vld [vmem:[#allocation16] sm:$0xff]
    %v5208 = vld [vmem:[#allocation16 + $0x8] sm:$0xff]
    %v5209 = vld [vmem:[#allocation16 + $0x10] sm:$0xff]
    %v5210 = vld [vmem:[#allocation16 + $0x18] sm:$0xff]
    %v5211 = vld [vmem:[#allocation16 + $0x20] sm:$0xff]
    %v5212 = vld [vmem:[#allocation16 + $0x28] sm:$0xff]
    %v5213 = vld [vmem:[#allocation16 + $0x30] sm:$0xff]
    %v5214 = vld [vmem:[#allocation16 + $0x38] sm:$0xff]
    %v5215 = vld [vmem:[#allocation16 + $0x40] sm:$0xff]
    %v5216 = vld [vmem:[#allocation16 + $0x48] sm:$0xff]
    %v5217 = vld [vmem:[#allocation16 + $0x50] sm:$0xff]
    %v5218 = vld [vmem:[#allocation16 + $0x58] sm:$0xff]
    %v5219 = vld [vmem:[#allocation16 + $0x60] sm:$0xff]
    %v5220 = vld [vmem:[#allocation16 + $0x68] sm:$0xff]
    %v5221 = vld [vmem:[#allocation16 + $0x70] sm:$0xff]
    %v5222 = vld [vmem:[#allocation16 + $0x78] sm:$0xff]
    %v5223 = vld [vmem:[#allocation16 + $0x80] sm:$0xff]
    %v5224 = vld [vmem:[#allocation16 + $0x88] sm:$0xff]
    %v5225 = vld [vmem:[#allocation16 + $0x90] sm:$0xff]
    %v5226 = vld [vmem:[#allocation16 + $0x98] sm:$0xff]
    %v5227 = vld [vmem:[#allocation16 + $0xa0] sm:$0xff]
    %v5228 = vld [vmem:[#allocation16 + $0xa8] sm:$0xff]
    %v5229 = vld [vmem:[#allocation16 + $0xb0] sm:$0xff]
    %v5230 = vld [vmem:[#allocation16 + $0xb8] sm:$0xff]
    %v5231 = vld [vmem:[#allocation16 + $0xc0] sm:$0xff]
    %v5232 = vld [vmem:[#allocation16 + $0xc8] sm:$0xff]
    %v5233 = vld [vmem:[#allocation16 + $0xd0] sm:$0xff]
    %v5234 = vld [vmem:[#allocation16 + $0xd8] sm:$0xff]
    %v5235 = vld [vmem:[#allocation16 + $0xe0] sm:$0xff]
    %v5236 = vld [vmem:[#allocation16 + $0xe8] sm:$0xff]
    %v5237 = vld [vmem:[#allocation16 + $0xf0] sm:$0xff]
    %v5238 = vld [vmem:[#allocation16 + $0xf8] sm:$0xff]
    %v5239 = vperm.slane %v190, 0
    %5240 = vmatpush.msra.mxu0 %v5222
    %5241 = vmatpush.msra.mxu0 %v5221
    %5242 = vmatpush.msra.mxu0 %v5220
    %5243 = vmatpush.msra.mxu0 %v5219
    %5244 = vmatpush.msra.mxu0 %v5218
    %5245 = vmatpush.msra.mxu0 %v5217
    %5246 = vmatpush.msra.mxu0 %v5216
    %5247 = vmatpush.msra.mxu0 %v5215
    %5248 = vmatpush.msra.mxu0 %v5214
    %5249 = vmatpush.msra.mxu0 %v5213
    %5250 = vmatpush.msra.mxu0 %v5212
    %5251 = vmatpush.msra.mxu0 %v5211
    %5252 = vmatpush.msra.mxu0 %v5210
    %5253 = vmatpush.msra.mxu0 %v5209
    %5254 = vmatpush.msra.mxu0 %v5208
    %5255 = vmatpush.msra.mxu0 %v5207
    %5256 = vmatmul.f32.gmra.mxu0 %v5205
    %v5257 = vpop.f32.mrf.mxu0
    %v5258 = vadd.f32 %v5239, %v5257
    %5259 = vdwg.mxu0
    %5260 = vmatpush.msra.mxu0 %v5238
    %5261 = vmatpush.msra.mxu0 %v5237
    %5262 = vmatpush.msra.mxu0 %v5236
    %5263 = vmatpush.msra.mxu0 %v5235
    %5264 = vmatpush.msra.mxu0 %v5234
    %5265 = vmatpush.msra.mxu0 %v5233
    %5266 = vmatpush.msra.mxu0 %v5232
    %5267 = vmatpush.msra.mxu0 %v5231
    %5268 = vmatpush.msra.mxu0 %v5230
    %5269 = vmatpush.msra.mxu0 %v5229
    %5270 = vmatpush.msra.mxu0 %v5228
    %5271 = vmatpush.msra.mxu0 %v5227
    %5272 = vmatpush.msra.mxu0 %v5226
    %5273 = vmatpush.msra.mxu0 %v5225
    %5274 = vmatpush.msra.mxu0 %v5224
    %5275 = vmatpush.msra.mxu0 %v5223
    %5276 = vmatmul.f32.gmra.mxu0 %v5206
    %v5277 = vpop.f32.mrf.mxu0
    %v5278 = vadd.f32 %v5258, %v5277
    %5279 = vdwg.mxu0
    %v5280 = vmax.f32 %v5278, 0.0
    %vm5281 = vcmp.ne.f32.partialorder %v5278, %v5278
    %v5282 = vadd.f32 %v5278, 0.0
    %v5283 = vand.u32 2147483647, %v5278
    %v5284 = vsub.f32 0.0, %v5283
    %v5285 = vmul.f32 %v5284, 1.442695
    %v5286 = vpow.pop %v5285
    %v5287 = vadd.f32 %v5286, 1.0
    %v5288 = vlog2.pop %v5287
    %v5289 = vmul.f32 %v5288, 0.6931472
    %v5290 = vmul.f32 -0.5, %v5286
    %v5291 = vadd.f32 %v5290, 1.0
    %v5292 = vmul.f32 %v5291, %v5286
    %v5293 = vand.u32 2147483647, %v5286
    %vm5294 = vcmp.lt.f32.partialorder %v5293, 0.0004427343
    %v5295 = vsel %vm5294, %v5292, %v5289
    %v5296 = vadd.f32 %v5280, %v5295
    %v5297 = vsel %vm5281, %v5282, %v5296
    %v5298 = vperm.slane %v190, 1
    %v5299 = vmul.f32 %v5297, %v5298
    %v5300 = vsel %vm282, %v5299, 0.0
    %5301 = vadd.xlane.f32.xlu0 %v5300
    %v5302 = vpop.xlane.xlu0 %5301
    %v5303 = vld [vmem:[#allocation2] sm:$0x1]
    %v5305 = vperm.slane %v5303, 0
    %v5307 = vadd.f32 %v5302, %v5305
    %5309 = vset.pattern.permute.xlu0 0
    %5310 = vperm.xlu0 %5309, %v5307
    %v5311 = vpop.permute.xlu0 %5310
    %5313 = vst [vmem:[%s14] sm:$0x3] %v5311
    // Predicated region
    $region94: #{filmcpi_forward.1} parent=1 // pred_check
      _
    $region95: #{filmcpi_forward.1} parent=1 // pred_check_branch
      %5315 = sbr.rel (0) target = $region97
    $region96: #{filmcpi_forward.1} parent=1 // pred_region
      _
    $region97: #{filmcpi_forward.1} parent=1 // pred_fallthru
      _
    // Predicated region
    $region98: #{filmcpi_forward.1} parent=1 // pred_check
      _
    $region99: #{filmcpi_forward.1} parent=1 // pred_check_branch
      %5317 = sbr.rel (0) target = $region101
    $region100: #{filmcpi_forward.1} parent=1 // pred_region
      _
    $region101: #{filmcpi_forward.1} parent=1 // pred_fallthru
      _
    %5318 = vsyncpa [#allocation4], 1
    %5319 = vsyncpa [#allocation6], 1
    %5320 = vsyncpa [#allocation9], 1
    %5321 = vsyncpa [#allocation12], 1
    %5322 = vsyncpa [#allocation15], 1

</llo_original>
